<compile_context>
chip_gen: v5e
topology: v5e:2x2
jax: 0.10.0
libtpu: 0.0.40
codegen_flags: <defaults>
</compile_context>

<pallas_src>
import jax
import jax.numpy as jnp
import numpy as np
from jax.experimental import pallas as pl
from jax.experimental.pallas import tpu as pltpu

B = 2
C_IN = 3
IMG = 16
PATCH = 4
STRIDE = PATCH
NP_SIDE = 1 + (IMG - PATCH) // STRIDE          # 4
NUM_PATCHES = NP_SIDE * NP_SIDE                # 16
SEQ = NUM_PATCHES + 1                          # 17 (CLS + patches)
BSEQ = B * SEQ                                 # 34 (fused batch slab)
DIM = 256                                      # embed_dim
HEADS = 2
HEAD_DIM = DIM // HEADS                        # 128 (lane aligned)
MLP_DIM = 4 * DIM
PK = C_IN * PATCH * PATCH                      # 48
LN_EPS = 1e-6
SCALE = HEAD_DIM ** -0.5


def _layer_norm(x, g, b):
    mu = jnp.mean(x, axis=-1, keepdims=True)
    var = jnp.mean(jnp.square(x - mu), axis=-1, keepdims=True)
    return (x - mu) * jax.lax.rsqrt(var + LN_EPS) * g + b


# Exact-GELU via Abramowitz & Stegun 7.1.26 erf (max abs err 1.5e-7 ~ f32 eps);
# avoids relying on lax.erf lowering inside the kernel while matching timm's
# nn.GELU() (erf) semantics.
_ERF_P = 0.3275911
_ERF_A1, _ERF_A2, _ERF_A3, _ERF_A4, _ERF_A5 = (
    0.254829592, -0.284496736, 1.421413741, -1.453152027, 1.061405429)


def _erf_approx(x):
    ax = jnp.abs(x)
    t = 1.0 / (1.0 + _ERF_P * ax)
    poly = ((((_ERF_A5 * t + _ERF_A4) * t + _ERF_A3) * t + _ERF_A2) * t
            + _ERF_A1) * t
    y = 1.0 - poly * jnp.exp(-ax * ax)
    return jnp.where(x >= 0, y, -y)


def _gelu_exact(x):
    return x * 0.5 * (1.0 + _erf_approx(x * 0.7071067811865476))


def vit_key_kernel(
    xp_ref,                    # (BSEQ, PK) f32, CLS rows are zero
    wproj_ref,                 # (PK, DIM)  f32
    addend_ref,                # (BSEQ, DIM) f32 = pos + proj_bias (CLS row = pos0+cls)
    mask_ref,                  # (BSEQ, BSEQ) f32 block-diagonal additive mask
    ln1g_ref, ln1b_ref,        # (1, DIM)
    qkvw_ref, qkvb_ref,        # (DIM, 3*DIM) bf16, (1, 3*DIM) f32
    apw_ref, apb_ref,          # (DIM, DIM) bf16, (1, DIM) f32
    ln2g_ref, ln2b_ref,        # (1, DIM)
    fc1w_ref, fc1b_ref,        # (DIM, MLP_DIM) bf16, (1, MLP_DIM) f32
    fc2w_ref, fc2b_ref,        # (MLP_DIM, DIM) bf16, (1, DIM) f32
    pblng_ref, pblnb_ref,      # (1, DIM)   partial-block norm1
    pbkw_ref, pbkb_ref,        # (DIM, DIM) bf16 key-only slice, (1, DIM) f32
    out_ref,                   # (B, NUM_PATCHES, DIM) f32
):
    f32 = jnp.float32
    bf16 = jnp.bfloat16

    # ---- patch embedding (Conv2d with stride == kernel  <=>  matmul) ----
    x = jnp.dot(xp_ref[...], wproj_ref[...],
                preferred_element_type=f32) + addend_ref[...]

    # ---- full transformer block (timm Block, eval mode) ----
    y = _layer_norm(x, ln1g_ref[...], ln1b_ref[...])
    qkv = jnp.dot(y.astype(bf16), qkvw_ref[...],
                  preferred_element_type=f32) + qkvb_ref[...]

    # Per-image attention over the fused (B*SEQ) slab via block-diagonal mask.
    # Head outputs are folded directly into the attn-proj GEMM (no concat).
    attn_out = apb_ref[...]
    for h in range(HEADS):                       # static unroll over heads
        qh = qkv[:, h * HEAD_DIM:(h + 1) * HEAD_DIM]
        kh = qkv[:, DIM + h * HEAD_DIM:DIM + (h + 1) * HEAD_DIM]
        vh = qkv[:, 2 * DIM + h * HEAD_DIM:2 * DIM + (h + 1) * HEAD_DIM]
        s = jax.lax.dot_general(qh, kh, (((1,), (1,)), ((), ())),
                                preferred_element_type=f32) * SCALE
        s = s + mask_ref[...]
        s = s - jnp.max(s, axis=-1, keepdims=True)
        p = jnp.exp(s)
        p = p * pl.reciprocal(jnp.sum(p, axis=-1, keepdims=True), approx=True)
        oh = jnp.dot(p, vh, preferred_element_type=f32)
        attn_out = attn_out + jnp.dot(
            oh.astype(bf16), apw_ref[h * HEAD_DIM:(h + 1) * HEAD_DIM, :],
            preferred_element_type=f32)
    x = x + attn_out

    y = _layer_norm(x, ln2g_ref[...], ln2b_ref[...])
    h1 = jnp.dot(y.astype(bf16), fc1w_ref[...],
                 preferred_element_type=f32) + fc1b_ref[...]
    h1 = _gelu_exact(h1)
    h2 = jnp.dot(h1.astype(bf16), fc2w_ref[...],
                 preferred_element_type=f32) + fc2b_ref[...]
    x = x + h2

    # ---- PartialBlock for facet='key': norm1 -> key projection only ----
    y = _layer_norm(x, pblng_ref[...], pblnb_ref[...])
    key = jnp.dot(y.astype(bf16), pbkw_ref[...],
                  preferred_element_type=f32) + pbkb_ref[...]

    # write only the patch tokens (drop each image's CLS row)
    for b in range(B):                           # static unroll, B=2
        out_ref[b] = key[b * SEQ + 1:(b + 1) * SEQ]


def _full_spec(shape):
    n = len(shape)
    return pl.BlockSpec(shape, lambda i, _n=n: (0,) * _n)


def _patchify(x_nchw):
    xp = x_nchw.reshape(B, C_IN, NP_SIDE, PATCH, NP_SIDE, PATCH)
    xp = xp.transpose(0, 2, 4, 1, 3, 5).reshape(B, NUM_PATCHES, PK)
    # zero row for the CLS slot (it contributes nothing to the patch matmul)
    return jnp.concatenate([jnp.zeros((B, 1, PK), xp.dtype), xp], axis=1)


def vit_extractor_forward(x_nchw, p):
    # ---- host-side glue: patchify, fold cls/pos/bias, build attention mask ----
    xp = _patchify(x_nchw).reshape(BSEQ, PK)
    addend = p['pos'] + p['b_proj']
    addend = addend.at[0, :].set(p['pos'][0] + p['cls'][0])
    addend = jnp.tile(addend, (B, 1))                        # (BSEQ, DIM)

    img_ids = jnp.repeat(jnp.arange(B), SEQ)
    attn_mask = jnp.where(img_ids[:, None] == img_ids[None, :],
                          0.0, -1e30).astype(jnp.float32)    # (BSEQ, BSEQ)

    # large weights in bf16 (halves weight HBM traffic); accumulation stays f32
    bf = lambda a: a.astype(jnp.bfloat16)
    pb_key_w = bf(p['pb_qkv_w'][:, DIM:2 * DIM])             # key-only slice
    pb_key_b = p['pb_qkv_b'][:, DIM:2 * DIM]

    args = (xp, p['w_proj'], addend, attn_mask,
            p['ln1_g'], p['ln1_b'], bf(p['qkv_w']), p['qkv_b'],
            bf(p['ap_w']), p['ap_b'], p['ln2_g'], p['ln2_b'],
            bf(p['fc1_w']), p['fc1_b'], bf(p['fc2_w']), p['fc2_b'],
            p['pb_ln_g'], p['pb_ln_b'], pb_key_w, pb_key_b)

    key_tokens = pl.pallas_call(
        vit_key_kernel,
        out_shape=jax.ShapeDtypeStruct((B, NUM_PATCHES, DIM), jnp.float32),
        grid_spec=pltpu.PrefetchScalarGridSpec(
            num_scalar_prefetch=0,
            grid=(1,),                                   # batch fused: one step
            in_specs=[_full_spec(a.shape) for a in args],
            out_specs=pl.BlockSpec((B, NUM_PATCHES, DIM), lambda i: (0, 0, 0))),
        compiler_params=pltpu.CompilerParams(
            dimension_semantics=("arbitrary",),
            vmem_limit_bytes=16 << 20),
    )(*args)

    # format_tqkv (include_cls=False, bin=False) + forward() reshape (glue):
    key = key_tokens.reshape(B, NUM_PATCHES, HEADS, HEAD_DIM)      # (h, d)
    desc = key.transpose(0, 1, 3, 2).reshape(B, NUM_PATCHES, DIM)  # (d, h) interleave
    feat = desc.transpose(0, 2, 1).reshape(B, DIM, NP_SIDE, NP_SIDE)
    return feat


# ----------------------------- reference (plain JAX, f32) --------------------
def reference_forward(x_nchw, p):
    hp = jax.lax.Precision.HIGHEST
    xp = x_nchw.reshape(B, C_IN, NP_SIDE, PATCH, NP_SIDE, PATCH)
    xp = xp.transpose(0, 2, 4, 1, 3, 5).reshape(B, NUM_PATCHES, PK)
    tok = jnp.matmul(xp, p['w_proj'], precision=hp) + p['b_proj']
    cls = jnp.broadcast_to(p['cls'][None], (B, 1, DIM))
    tok = jnp.concatenate([cls, tok], axis=1) + p['pos'][None]

    def ln(v, g, b):
        mu = v.mean(-1, keepdims=True)
        var = ((v - mu) ** 2).mean(-1, keepdims=True)
        return (v - mu) / jnp.sqrt(var + LN_EPS) * g + b

    y = ln(tok, p['ln1_g'], p['ln1_b'])
    qkv = jnp.matmul(y, p['qkv_w'], precision=hp) + p['qkv_b']
    qkv = qkv.reshape(B, SEQ, 3, HEADS, HEAD_DIM).transpose(2, 0, 3, 1, 4)
    q, k, v = qkv[0], qkv[1], qkv[2]
    s = jnp.einsum('bhnd,bhmd->bhnm', q, k, precision=hp) * SCALE
    a = jax.nn.softmax(s, axis=-1)
    o = jnp.einsum('bhnm,bhmd->bhnd', a, v, precision=hp)
    o = o.transpose(0, 2, 1, 3).reshape(B, SEQ, DIM)
    tok = tok + jnp.matmul(o, p['ap_w'], precision=hp) + p['ap_b']
    y = ln(tok, p['ln2_g'], p['ln2_b'])
    h = jax.nn.gelu(jnp.matmul(y, p['fc1_w'], precision=hp) + p['fc1_b'],
                    approximate=False)                       # exact erf GELU (timm)
    tok = tok + jnp.matmul(h, p['fc2_w'], precision=hp) + p['fc2_b']

    y = ln(tok, p['pb_ln_g'], p['pb_ln_b'])
    qkv2 = jnp.matmul(y, p['pb_qkv_w'], precision=hp) + p['pb_qkv_b']
    qkv2 = qkv2.reshape(B, SEQ, 3, HEADS, HEAD_DIM).transpose(2, 0, 3, 1, 4)
    key = qkv2[1][:, :, 1:, :]                                      # (B,H,Np,hd)
    desc = key.transpose(0, 2, 3, 1).reshape(B, NUM_PATCHES, DIM)
    return desc.transpose(0, 2, 1).reshape(B, DIM, NP_SIDE, NP_SIDE)


# ----------------------------- deterministic params --------------------------
def init_params(key):
    ks = jax.random.split(key, 10)

    def nrm(k, shape, s=0.02):
        return jax.random.normal(k, shape, jnp.float32) * s

    ones = lambda s: jnp.ones(s, jnp.float32)
    zeros = lambda s: jnp.zeros(s, jnp.float32)
    return dict(
        w_proj=nrm(ks[0], (PK, DIM)),      b_proj=zeros((1, DIM)),
        cls=nrm(ks[1], (1, DIM)),          pos=nrm(ks[2], (SEQ, DIM)),
        ln1_g=ones((1, DIM)),              ln1_b=zeros((1, DIM)),
        qkv_w=nrm(ks[3], (DIM, 3 * DIM)),  qkv_b=nrm(ks[4], (1, 3 * DIM)),
        ap_w=nrm(ks[5], (DIM, DIM)),       ap_b=zeros((1, DIM)),
        ln2_g=ones((1, DIM)),              ln2_b=zeros((1, DIM)),
        fc1_w=nrm(ks[6], (DIM, MLP_DIM)),  fc1_b=zeros((1, MLP_DIM)),
        fc2_w=nrm(ks[7], (MLP_DIM, DIM)),  fc2_b=zeros((1, DIM)),
        pb_ln_g=ones((1, DIM)),            pb_ln_b=zeros((1, DIM)),
        pb_qkv_w=nrm(ks[8], (DIM, 3 * DIM)),
        pb_qkv_b=nrm(ks[9], (1, 3 * DIM)),
    )


if __name__ == "__main__":
    root = jax.random.PRNGKey(0)
    kx, kp = jax.random.split(root)
    x = jax.random.normal(kx, (B, C_IN, IMG, IMG), jnp.float32)
    params = init_params(kp)

    out = jax.jit(vit_extractor_forward)(x, params)
    out = jax.block_until_ready(out)

    ref = reference_forward(x, params)
    assert out.shape == (B, DIM, NP_SIDE, NP_SIDE), out.shape
    # tolerances account for bf16 weight storage / bf16 MXU inputs (f32 accumulate)
    np.testing.assert_allclose(np.asarray(out), np.asarray(ref),
                               rtol=5e-2, atol=1.5e-2)
    print("KERNEL_OK")
</pallas_src>

<mosaic_0001>
module attributes {stable_mosaic.version = 11 : i64} {
  func.func @vit_key_kernel(%arg0: i32, %arg1: memref<34x48xf32, #tpu.memory_space<vmem>>, %arg2: memref<48x256xf32, #tpu.memory_space<vmem>>, %arg3: memref<34x256xf32, #tpu.memory_space<vmem>>, %arg4: memref<34x34xf32, #tpu.memory_space<vmem>>, %arg5: memref<1x256xf32, #tpu.memory_space<vmem>>, %arg6: memref<1x256xf32, #tpu.memory_space<vmem>>, %arg7: memref<256x768xbf16, #tpu.memory_space<vmem>>, %arg8: memref<1x768xf32, #tpu.memory_space<vmem>>, %arg9: memref<256x256xbf16, #tpu.memory_space<vmem>>, %arg10: memref<1x256xf32, #tpu.memory_space<vmem>>, %arg11: memref<1x256xf32, #tpu.memory_space<vmem>>, %arg12: memref<1x256xf32, #tpu.memory_space<vmem>>, %arg13: memref<256x1024xbf16, #tpu.memory_space<vmem>>, %arg14: memref<1x1024xf32, #tpu.memory_space<vmem>>, %arg15: memref<1024x256xbf16, #tpu.memory_space<vmem>>, %arg16: memref<1x256xf32, #tpu.memory_space<vmem>>, %arg17: memref<1x256xf32, #tpu.memory_space<vmem>>, %arg18: memref<1x256xf32, #tpu.memory_space<vmem>>, %arg19: memref<256x256xbf16, #tpu.memory_space<vmem>>, %arg20: memref<1x256xf32, #tpu.memory_space<vmem>>, %arg21: memref<2x16x256xf32, #tpu.memory_space<vmem>>) attributes {dimension_semantics = [#tpu.dimension_semantics<arbitrary>], iteration_bounds = array<i64: 1>, scalar_prefetch = 0 : i64, scratch_operands = 0 : i64, tpu.core_type = #tpu.core_type<tc>, window_params = [{pipeline_mode = #tpu.pipeline_mode<synchronous>, transform_indices = @transform_0, window_bounds = array<i64: 34, 48>}, {pipeline_mode = #tpu.pipeline_mode<synchronous>, transform_indices = @transform_1, window_bounds = array<i64: 48, 256>}, {pipeline_mode = #tpu.pipeline_mode<synchronous>, transform_indices = @transform_2, window_bounds = array<i64: 34, 256>}, {pipeline_mode = #tpu.pipeline_mode<synchronous>, transform_indices = @transform_3, window_bounds = array<i64: 34, 34>}, {pipeline_mode = #tpu.pipeline_mode<synchronous>, transform_indices = @transform_4, window_bounds = array<i64: 1, 256>}, {pipeline_mode = #tpu.pipeline_mode<synchronous>, transform_indices = @transform_5, window_bounds = array<i64: 1, 256>}, {pipeline_mode = #tpu.pipeline_mode<synchronous>, transform_indices = @transform_6, window_bounds = array<i64: 256, 768>}, {pipeline_mode = #tpu.pipeline_mode<synchronous>, transform_indices = @transform_7, window_bounds = array<i64: 1, 768>}, {pipeline_mode = #tpu.pipeline_mode<synchronous>, transform_indices = @transform_8, window_bounds = array<i64: 256, 256>}, {pipeline_mode = #tpu.pipeline_mode<synchronous>, transform_indices = @transform_9, window_bounds = array<i64: 1, 256>}, {pipeline_mode = #tpu.pipeline_mode<synchronous>, transform_indices = @transform_10, window_bounds = array<i64: 1, 256>}, {pipeline_mode = #tpu.pipeline_mode<synchronous>, transform_indices = @transform_11, window_bounds = array<i64: 1, 256>}, {pipeline_mode = #tpu.pipeline_mode<synchronous>, transform_indices = @transform_12, window_bounds = array<i64: 256, 1024>}, {pipeline_mode = #tpu.pipeline_mode<synchronous>, transform_indices = @transform_13, window_bounds = array<i64: 1, 1024>}, {pipeline_mode = #tpu.pipeline_mode<synchronous>, transform_indices = @transform_14, window_bounds = array<i64: 1024, 256>}, {pipeline_mode = #tpu.pipeline_mode<synchronous>, transform_indices = @transform_15, window_bounds = array<i64: 1, 256>}, {pipeline_mode = #tpu.pipeline_mode<synchronous>, transform_indices = @transform_16, window_bounds = array<i64: 1, 256>}, {pipeline_mode = #tpu.pipeline_mode<synchronous>, transform_indices = @transform_17, window_bounds = array<i64: 1, 256>}, {pipeline_mode = #tpu.pipeline_mode<synchronous>, transform_indices = @transform_18, window_bounds = array<i64: 256, 256>}, {pipeline_mode = #tpu.pipeline_mode<synchronous>, transform_indices = @transform_19, window_bounds = array<i64: 1, 256>}, {pipeline_mode = #tpu.pipeline_mode<synchronous>, transform_indices = @transform_20, window_bounds = array<i64: 2, 16, 256>}]} {
    %c0 = arith.constant 0 : index
    %c0_0 = arith.constant 0 : index
    %0 = vector.load %arg1[%c0, %c0_0] : memref<34x48xf32, #tpu.memory_space<vmem>>, vector<34x48xf32>
    %c0_1 = arith.constant 0 : index
    %c0_2 = arith.constant 0 : index
    %1 = vector.load %arg2[%c0_1, %c0_2] : memref<48x256xf32, #tpu.memory_space<vmem>>, vector<48x256xf32>
    %cst = arith.constant dense<0.000000e+00> : vector<34x256xf32>
    %2 = tpu.matmul %0, %1, %cst {dimension_numbers = #tpu.dot_dimension_numbers<[1], [0], [0], [1], [0, 0, 1, 1], [], []>} : vector<34x48xf32>, vector<48x256xf32>, vector<34x256xf32> -> vector<34x256xf32>
    %c0_3 = arith.constant 0 : index
    %c0_4 = arith.constant 0 : index
    %3 = vector.load %arg3[%c0_3, %c0_4] : memref<34x256xf32, #tpu.memory_space<vmem>>, vector<34x256xf32>
    %4 = arith.addf %2, %3 : vector<34x256xf32>
    %c0_5 = arith.constant 0 : index
    %c0_6 = arith.constant 0 : index
    %5 = vector.load %arg5[%c0_5, %c0_6] : memref<1x256xf32, #tpu.memory_space<vmem>>, vector<1x256xf32>
    %c0_7 = arith.constant 0 : index
    %c0_8 = arith.constant 0 : index
    %6 = vector.load %arg6[%c0_7, %c0_8] : memref<1x256xf32, #tpu.memory_space<vmem>>, vector<1x256xf32>
    %cst_9 = arith.constant dense<0.000000e+00> : vector<34xf32>
    %7 = vector.multi_reduction <add>, %4, %cst_9 [1] : vector<34x256xf32> to vector<34xf32>
    %8 = vector.shape_cast %7 : vector<34xf32> to vector<34x1xf32>
    %cst_10 = arith.constant 2.560000e+02 : f32
    %9 = vector.broadcast %cst_10 : f32 to vector<34x1xf32>
    %10 = arith.divf %8, %9 : vector<34x1xf32>
    %11 = vector.broadcast %10 : vector<34x1xf32> to vector<34x256xf32>
    %12 = arith.subf %4, %11 : vector<34x256xf32>
    %13 = arith.mulf %12, %12 : vector<34x256xf32>
    %cst_11 = arith.constant dense<0.000000e+00> : vector<34xf32>
    %14 = vector.multi_reduction <add>, %13, %cst_11 [1] : vector<34x256xf32> to vector<34xf32>
    %15 = vector.shape_cast %14 : vector<34xf32> to vector<34x1xf32>
    %cst_12 = arith.constant 2.560000e+02 : f32
    %16 = vector.broadcast %cst_12 : f32 to vector<34x1xf32>
    %17 = arith.divf %15, %16 : vector<34x1xf32>
    %18 = vector.broadcast %10 : vector<34x1xf32> to vector<34x256xf32>
    %19 = arith.subf %4, %18 : vector<34x256xf32>
    %cst_13 = arith.constant 9.99999997E-7 : f32
    %20 = vector.broadcast %cst_13 : f32 to vector<34x1xf32>
    %21 = arith.addf %17, %20 : vector<34x1xf32>
    %22 = math.rsqrt %21 : vector<34x1xf32>
    %23 = vector.broadcast %22 : vector<34x1xf32> to vector<34x256xf32>
    %24 = arith.mulf %19, %23 : vector<34x256xf32>
    %25 = vector.broadcast %5 : vector<1x256xf32> to vector<34x256xf32>
    %26 = arith.mulf %24, %25 : vector<34x256xf32>
    %27 = vector.broadcast %6 : vector<1x256xf32> to vector<34x256xf32>
    %28 = arith.addf %26, %27 : vector<34x256xf32>
    %29 = arith.truncf %28 : vector<34x256xf32> to vector<34x256xbf16>
    %c0_14 = arith.constant 0 : index
    %c0_15 = arith.constant 0 : index
    %30 = vector.load %arg7[%c0_14, %c0_15] : memref<256x768xbf16, #tpu.memory_space<vmem>>, vector<256x768xbf16>
    %cst_16 = arith.constant dense<0.000000e+00> : vector<34x768xf32>
    %31 = tpu.matmul %29, %30, %cst_16 {dimension_numbers = #tpu.dot_dimension_numbers<[1], [0], [0], [1], [0, 0, 1, 1], [], []>} : vector<34x256xbf16>, vector<256x768xbf16>, vector<34x768xf32> -> vector<34x768xf32>
    %c0_17 = arith.constant 0 : index
    %c0_18 = arith.constant 0 : index
    %32 = vector.load %arg8[%c0_17, %c0_18] : memref<1x768xf32, #tpu.memory_space<vmem>>, vector<1x768xf32>
    %33 = vector.broadcast %32 : vector<1x768xf32> to vector<34x768xf32>
    %34 = arith.addf %31, %33 : vector<34x768xf32>
    %c0_19 = arith.constant 0 : index
    %c0_20 = arith.constant 0 : index
    %35 = vector.load %arg10[%c0_19, %c0_20] : memref<1x256xf32, #tpu.memory_space<vmem>>, vector<1x256xf32>
    %36 = vector.extract_strided_slice %34 {offsets = [0, 0], sizes = [34, 128], strides = [1, 1]} : vector<34x768xf32> to vector<34x128xf32>
    %37 = vector.extract_strided_slice %34 {offsets = [0, 256], sizes = [34, 128], strides = [1, 1]} : vector<34x768xf32> to vector<34x128xf32>
    %38 = vector.extract_strided_slice %34 {offsets = [0, 512], sizes = [34, 128], strides = [1, 1]} : vector<34x768xf32> to vector<34x128xf32>
    %cst_21 = arith.constant dense<0.000000e+00> : vector<34x34xf32>
    %39 = tpu.matmul %36, %37, %cst_21 {dimension_numbers = #tpu.dot_dimension_numbers<[1], [1], [0], [0], [0, 0, 1, 0], [], []>} : vector<34x128xf32>, vector<34x128xf32>, vector<34x34xf32> -> vector<34x34xf32>
    %cst_22 = arith.constant 0.0883883461 : f32
    %40 = vector.broadcast %cst_22 : f32 to vector<34x34xf32>
    %41 = arith.mulf %39, %40 : vector<34x34xf32>
    %c0_23 = arith.constant 0 : index
    %c0_24 = arith.constant 0 : index
    %42 = vector.load %arg4[%c0_23, %c0_24] : memref<34x34xf32, #tpu.memory_space<vmem>>, vector<34x34xf32>
    %43 = arith.addf %41, %42 : vector<34x34xf32>
    %cst_25 = arith.constant dense<0xFF800000> : vector<34xf32>
    %44 = vector.multi_reduction <maximumf>, %43, %cst_25 [1] : vector<34x34xf32> to vector<34xf32>
    %45 = vector.shape_cast %44 : vector<34xf32> to vector<34x1xf32>
    %46 = vector.broadcast %45 : vector<34x1xf32> to vector<34x34xf32>
    %47 = arith.subf %43, %46 : vector<34x34xf32>
    %48 = math.exp %47 : vector<34x34xf32>
    %cst_26 = arith.constant dense<0.000000e+00> : vector<34xf32>
    %49 = vector.multi_reduction <add>, %48, %cst_26 [1] : vector<34x34xf32> to vector<34xf32>
    %50 = vector.shape_cast %49 : vector<34xf32> to vector<34x1xf32>
    %51 = tpu.reciprocal %50 {approx = true} : vector<34x1xf32> -> vector<34x1xf32>
    %52 = vector.broadcast %51 : vector<34x1xf32> to vector<34x34xf32>
    %53 = arith.mulf %48, %52 : vector<34x34xf32>
    %cst_27 = arith.constant dense<0.000000e+00> : vector<34x128xf32>
    %54 = tpu.matmul %53, %38, %cst_27 {dimension_numbers = #tpu.dot_dimension_numbers<[1], [0], [0], [1], [0, 0, 1, 1], [], []>} : vector<34x34xf32>, vector<34x128xf32>, vector<34x128xf32> -> vector<34x128xf32>
    %55 = arith.truncf %54 : vector<34x128xf32> to vector<34x128xbf16>
    %c0_28 = arith.constant 0 : index
    %c0_29 = arith.constant 0 : index
    %56 = vector.load %arg9[%c0_28, %c0_29] : memref<256x256xbf16, #tpu.memory_space<vmem>>, vector<128x256xbf16>
    %cst_30 = arith.constant dense<0.000000e+00> : vector<34x256xf32>
    %57 = tpu.matmul %55, %56, %cst_30 {dimension_numbers = #tpu.dot_dimension_numbers<[1], [0], [0], [1], [0, 0, 1, 1], [], []>} : vector<34x128xbf16>, vector<128x256xbf16>, vector<34x256xf32> -> vector<34x256xf32>
    %58 = vector.broadcast %35 : vector<1x256xf32> to vector<34x256xf32>
    %59 = arith.addf %58, %57 : vector<34x256xf32>
    %60 = vector.extract_strided_slice %34 {offsets = [0, 128], sizes = [34, 128], strides = [1, 1]} : vector<34x768xf32> to vector<34x128xf32>
    %61 = vector.extract_strided_slice %34 {offsets = [0, 384], sizes = [34, 128], strides = [1, 1]} : vector<34x768xf32> to vector<34x128xf32>
    %62 = vector.extract_strided_slice %34 {offsets = [0, 640], sizes = [34, 128], strides = [1, 1]} : vector<34x768xf32> to vector<34x128xf32>
    %cst_31 = arith.constant dense<0.000000e+00> : vector<34x34xf32>
    %63 = tpu.matmul %60, %61, %cst_31 {dimension_numbers = #tpu.dot_dimension_numbers<[1], [1], [0], [0], [0, 0, 1, 0], [], []>} : vector<34x128xf32>, vector<34x128xf32>, vector<34x34xf32> -> vector<34x34xf32>
    %cst_32 = arith.constant 0.0883883461 : f32
    %64 = vector.broadcast %cst_32 : f32 to vector<34x34xf32>
    %65 = arith.mulf %63, %64 : vector<34x34xf32>
    %c0_33 = arith.constant 0 : index
    %c0_34 = arith.constant 0 : index
    %66 = vector.load %arg4[%c0_33, %c0_34] : memref<34x34xf32, #tpu.memory_space<vmem>>, vector<34x34xf32>
    %67 = arith.addf %65, %66 : vector<34x34xf32>
    %cst_35 = arith.constant dense<0xFF800000> : vector<34xf32>
    %68 = vector.multi_reduction <maximumf>, %67, %cst_35 [1] : vector<34x34xf32> to vector<34xf32>
    %69 = vector.shape_cast %68 : vector<34xf32> to vector<34x1xf32>
    %70 = vector.broadcast %69 : vector<34x1xf32> to vector<34x34xf32>
    %71 = arith.subf %67, %70 : vector<34x34xf32>
    %72 = math.exp %71 : vector<34x34xf32>
    %cst_36 = arith.constant dense<0.000000e+00> : vector<34xf32>
    %73 = vector.multi_reduction <add>, %72, %cst_36 [1] : vector<34x34xf32> to vector<34xf32>
    %74 = vector.shape_cast %73 : vector<34xf32> to vector<34x1xf32>
    %75 = tpu.reciprocal %74 {approx = true} : vector<34x1xf32> -> vector<34x1xf32>
    %76 = vector.broadcast %75 : vector<34x1xf32> to vector<34x34xf32>
    %77 = arith.mulf %72, %76 : vector<34x34xf32>
    %cst_37 = arith.constant dense<0.000000e+00> : vector<34x128xf32>
    %78 = tpu.matmul %77, %62, %cst_37 {dimension_numbers = #tpu.dot_dimension_numbers<[1], [0], [0], [1], [0, 0, 1, 1], [], []>} : vector<34x34xf32>, vector<34x128xf32>, vector<34x128xf32> -> vector<34x128xf32>
    %79 = arith.truncf %78 : vector<34x128xf32> to vector<34x128xbf16>
    %c128 = arith.constant 128 : index
    %c0_38 = arith.constant 0 : index
    %80 = vector.load %arg9[%c128, %c0_38] : memref<256x256xbf16, #tpu.memory_space<vmem>>, vector<128x256xbf16>
    %cst_39 = arith.constant dense<0.000000e+00> : vector<34x256xf32>
    %81 = tpu.matmul %79, %80, %cst_39 {dimension_numbers = #tpu.dot_dimension_numbers<[1], [0], [0], [1], [0, 0, 1, 1], [], []>} : vector<34x128xbf16>, vector<128x256xbf16>, vector<34x256xf32> -> vector<34x256xf32>
    %82 = arith.addf %59, %81 : vector<34x256xf32>
    %83 = arith.addf %4, %82 : vector<34x256xf32>
    %c0_40 = arith.constant 0 : index
    %c0_41 = arith.constant 0 : index
    %84 = vector.load %arg11[%c0_40, %c0_41] : memref<1x256xf32, #tpu.memory_space<vmem>>, vector<1x256xf32>
    %c0_42 = arith.constant 0 : index
    %c0_43 = arith.constant 0 : index
    %85 = vector.load %arg12[%c0_42, %c0_43] : memref<1x256xf32, #tpu.memory_space<vmem>>, vector<1x256xf32>
    %cst_44 = arith.constant dense<0.000000e+00> : vector<34xf32>
    %86 = vector.multi_reduction <add>, %83, %cst_44 [1] : vector<34x256xf32> to vector<34xf32>
    %87 = vector.shape_cast %86 : vector<34xf32> to vector<34x1xf32>
    %cst_45 = arith.constant 2.560000e+02 : f32
    %88 = vector.broadcast %cst_45 : f32 to vector<34x1xf32>
    %89 = arith.divf %87, %88 : vector<34x1xf32>
    %90 = vector.broadcast %89 : vector<34x1xf32> to vector<34x256xf32>
    %91 = arith.subf %83, %90 : vector<34x256xf32>
    %92 = arith.mulf %91, %91 : vector<34x256xf32>
    %cst_46 = arith.constant dense<0.000000e+00> : vector<34xf32>
    %93 = vector.multi_reduction <add>, %92, %cst_46 [1] : vector<34x256xf32> to vector<34xf32>
    %94 = vector.shape_cast %93 : vector<34xf32> to vector<34x1xf32>
    %cst_47 = arith.constant 2.560000e+02 : f32
    %95 = vector.broadcast %cst_47 : f32 to vector<34x1xf32>
    %96 = arith.divf %94, %95 : vector<34x1xf32>
    %97 = vector.broadcast %89 : vector<34x1xf32> to vector<34x256xf32>
    %98 = arith.subf %83, %97 : vector<34x256xf32>
    %cst_48 = arith.constant 9.99999997E-7 : f32
    %99 = vector.broadcast %cst_48 : f32 to vector<34x1xf32>
    %100 = arith.addf %96, %99 : vector<34x1xf32>
    %101 = math.rsqrt %100 : vector<34x1xf32>
    %102 = vector.broadcast %101 : vector<34x1xf32> to vector<34x256xf32>
    %103 = arith.mulf %98, %102 : vector<34x256xf32>
    %104 = vector.broadcast %84 : vector<1x256xf32> to vector<34x256xf32>
    %105 = arith.mulf %103, %104 : vector<34x256xf32>
    %106 = vector.broadcast %85 : vector<1x256xf32> to vector<34x256xf32>
    %107 = arith.addf %105, %106 : vector<34x256xf32>
    %108 = arith.truncf %107 : vector<34x256xf32> to vector<34x256xbf16>
    %c0_49 = arith.constant 0 : index
    %c0_50 = arith.constant 0 : index
    %109 = vector.load %arg13[%c0_49, %c0_50] : memref<256x1024xbf16, #tpu.memory_space<vmem>>, vector<256x1024xbf16>
    %cst_51 = arith.constant dense<0.000000e+00> : vector<34x1024xf32>
    %110 = tpu.matmul %108, %109, %cst_51 {dimension_numbers = #tpu.dot_dimension_numbers<[1], [0], [0], [1], [0, 0, 1, 1], [], []>} : vector<34x256xbf16>, vector<256x1024xbf16>, vector<34x1024xf32> -> vector<34x1024xf32>
    %c0_52 = arith.constant 0 : index
    %c0_53 = arith.constant 0 : index
    %111 = vector.load %arg14[%c0_52, %c0_53] : memref<1x1024xf32, #tpu.memory_space<vmem>>, vector<1x1024xf32>
    %112 = vector.broadcast %111 : vector<1x1024xf32> to vector<34x1024xf32>
    %113 = arith.addf %110, %112 : vector<34x1024xf32>
    %cst_54 = arith.constant 5.000000e-01 : f32
    %114 = vector.broadcast %cst_54 : f32 to vector<34x1024xf32>
    %115 = arith.mulf %113, %114 : vector<34x1024xf32>
    %cst_55 = arith.constant 0.707106769 : f32
    %116 = vector.broadcast %cst_55 : f32 to vector<34x1024xf32>
    %117 = arith.mulf %113, %116 : vector<34x1024xf32>
    %118 = math.absf %117 : vector<34x1024xf32>
    %cst_56 = arith.constant 0.327591091 : f32
    %119 = vector.broadcast %cst_56 : f32 to vector<34x1024xf32>
    %120 = arith.mulf %119, %118 : vector<34x1024xf32>
    %cst_57 = arith.constant 1.000000e+00 : f32
    %121 = vector.broadcast %cst_57 : f32 to vector<34x1024xf32>
    %122 = arith.addf %121, %120 : vector<34x1024xf32>
    %cst_58 = arith.constant 1.000000e+00 : f32
    %123 = vector.broadcast %cst_58 : f32 to vector<34x1024xf32>
    %124 = arith.divf %123, %122 : vector<34x1024xf32>
    %cst_59 = arith.constant 1.06140542 : f32
    %125 = vector.broadcast %cst_59 : f32 to vector<34x1024xf32>
    %126 = arith.mulf %125, %124 : vector<34x1024xf32>
    %cst_60 = arith.constant -1.45315206 : f32
    %127 = vector.broadcast %cst_60 : f32 to vector<34x1024xf32>
    %128 = arith.addf %126, %127 : vector<34x1024xf32>
    %129 = arith.mulf %128, %124 : vector<34x1024xf32>
    %cst_61 = arith.constant 1.42141378 : f32
    %130 = vector.broadcast %cst_61 : f32 to vector<34x1024xf32>
    %131 = arith.addf %129, %130 : vector<34x1024xf32>
    %132 = arith.mulf %131, %124 : vector<34x1024xf32>
    %cst_62 = arith.constant -0.284496725 : f32
    %133 = vector.broadcast %cst_62 : f32 to vector<34x1024xf32>
    %134 = arith.addf %132, %133 : vector<34x1024xf32>
    %135 = arith.mulf %134, %124 : vector<34x1024xf32>
    %cst_63 = arith.constant 0.254829586 : f32
    %136 = vector.broadcast %cst_63 : f32 to vector<34x1024xf32>
    %137 = arith.addf %135, %136 : vector<34x1024xf32>
    %138 = arith.mulf %137, %124 : vector<34x1024xf32>
    %cst_64 = arith.constant 0.000000e+00 : f32
    %139 = vector.broadcast %cst_64 : f32 to vector<34x1024xf32>
    %140 = arith.subf %139, %118 : vector<34x1024xf32>
    %141 = arith.mulf %140, %118 : vector<34x1024xf32>
    %142 = math.exp %141 : vector<34x1024xf32>
    %143 = arith.mulf %138, %142 : vector<34x1024xf32>
    %cst_65 = arith.constant 1.000000e+00 : f32
    %144 = vector.broadcast %cst_65 : f32 to vector<34x1024xf32>
    %145 = arith.subf %144, %143 : vector<34x1024xf32>
    %cst_66 = arith.constant 0.000000e+00 : f32
    %146 = vector.broadcast %cst_66 : f32 to vector<34x1024xf32>
    %147 = arith.cmpf oge, %117, %146 : vector<34x1024xf32>
    %cst_67 = arith.constant 0.000000e+00 : f32
    %148 = vector.broadcast %cst_67 : f32 to vector<34x1024xf32>
    %149 = arith.subf %148, %145 : vector<34x1024xf32>
    %150 = arith.select %147, %145, %149 : vector<34x1024xi1>, vector<34x1024xf32>
    %cst_68 = arith.constant 1.000000e+00 : f32
    %151 = vector.broadcast %cst_68 : f32 to vector<34x1024xf32>
    %152 = arith.addf %151, %150 : vector<34x1024xf32>
    %153 = arith.mulf %115, %152 : vector<34x1024xf32>
    %154 = arith.truncf %153 : vector<34x1024xf32> to vector<34x1024xbf16>
    %c0_69 = arith.constant 0 : index
    %c0_70 = arith.constant 0 : index
    %155 = vector.load %arg15[%c0_69, %c0_70] : memref<1024x256xbf16, #tpu.memory_space<vmem>>, vector<1024x256xbf16>
    %cst_71 = arith.constant dense<0.000000e+00> : vector<34x256xf32>
    %156 = tpu.matmul %154, %155, %cst_71 {dimension_numbers = #tpu.dot_dimension_numbers<[1], [0], [0], [1], [0, 0, 1, 1], [], []>} : vector<34x1024xbf16>, vector<1024x256xbf16>, vector<34x256xf32> -> vector<34x256xf32>
    %c0_72 = arith.constant 0 : index
    %c0_73 = arith.constant 0 : index
    %157 = vector.load %arg16[%c0_72, %c0_73] : memref<1x256xf32, #tpu.memory_space<vmem>>, vector<1x256xf32>
    %158 = vector.broadcast %157 : vector<1x256xf32> to vector<34x256xf32>
    %159 = arith.addf %156, %158 : vector<34x256xf32>
    %160 = arith.addf %83, %159 : vector<34x256xf32>
    %c0_74 = arith.constant 0 : index
    %c0_75 = arith.constant 0 : index
    %161 = vector.load %arg17[%c0_74, %c0_75] : memref<1x256xf32, #tpu.memory_space<vmem>>, vector<1x256xf32>
    %c0_76 = arith.constant 0 : index
    %c0_77 = arith.constant 0 : index
    %162 = vector.load %arg18[%c0_76, %c0_77] : memref<1x256xf32, #tpu.memory_space<vmem>>, vector<1x256xf32>
    %cst_78 = arith.constant dense<0.000000e+00> : vector<34xf32>
    %163 = vector.multi_reduction <add>, %160, %cst_78 [1] : vector<34x256xf32> to vector<34xf32>
    %164 = vector.shape_cast %163 : vector<34xf32> to vector<34x1xf32>
    %cst_79 = arith.constant 2.560000e+02 : f32
    %165 = vector.broadcast %cst_79 : f32 to vector<34x1xf32>
    %166 = arith.divf %164, %165 : vector<34x1xf32>
    %167 = vector.broadcast %166 : vector<34x1xf32> to vector<34x256xf32>
    %168 = arith.subf %160, %167 : vector<34x256xf32>
    %169 = arith.mulf %168, %168 : vector<34x256xf32>
    %cst_80 = arith.constant dense<0.000000e+00> : vector<34xf32>
    %170 = vector.multi_reduction <add>, %169, %cst_80 [1] : vector<34x256xf32> to vector<34xf32>
    %171 = vector.shape_cast %170 : vector<34xf32> to vector<34x1xf32>
    %cst_81 = arith.constant 2.560000e+02 : f32
    %172 = vector.broadcast %cst_81 : f32 to vector<34x1xf32>
    %173 = arith.divf %171, %172 : vector<34x1xf32>
    %174 = vector.broadcast %166 : vector<34x1xf32> to vector<34x256xf32>
    %175 = arith.subf %160, %174 : vector<34x256xf32>
    %cst_82 = arith.constant 9.99999997E-7 : f32
    %176 = vector.broadcast %cst_82 : f32 to vector<34x1xf32>
    %177 = arith.addf %173, %176 : vector<34x1xf32>
    %178 = math.rsqrt %177 : vector<34x1xf32>
    %179 = vector.broadcast %178 : vector<34x1xf32> to vector<34x256xf32>
    %180 = arith.mulf %175, %179 : vector<34x256xf32>
    %181 = vector.broadcast %161 : vector<1x256xf32> to vector<34x256xf32>
    %182 = arith.mulf %180, %181 : vector<34x256xf32>
    %183 = vector.broadcast %162 : vector<1x256xf32> to vector<34x256xf32>
    %184 = arith.addf %182, %183 : vector<34x256xf32>
    %185 = arith.truncf %184 : vector<34x256xf32> to vector<34x256xbf16>
    %c0_83 = arith.constant 0 : index
    %c0_84 = arith.constant 0 : index
    %186 = vector.load %arg19[%c0_83, %c0_84] : memref<256x256xbf16, #tpu.memory_space<vmem>>, vector<256x256xbf16>
    %cst_85 = arith.constant dense<0.000000e+00> : vector<34x256xf32>
    %187 = tpu.matmul %185, %186, %cst_85 {dimension_numbers = #tpu.dot_dimension_numbers<[1], [0], [0], [1], [0, 0, 1, 1], [], []>} : vector<34x256xbf16>, vector<256x256xbf16>, vector<34x256xf32> -> vector<34x256xf32>
    %c0_86 = arith.constant 0 : index
    %c0_87 = arith.constant 0 : index
    %188 = vector.load %arg20[%c0_86, %c0_87] : memref<1x256xf32, #tpu.memory_space<vmem>>, vector<1x256xf32>
    %189 = vector.broadcast %188 : vector<1x256xf32> to vector<34x256xf32>
    %190 = arith.addf %187, %189 : vector<34x256xf32>
    %191 = vector.extract_strided_slice %190 {offsets = [1, 0], sizes = [16, 256], strides = [1, 1]} : vector<34x256xf32> to vector<16x256xf32>
    %c0_88 = arith.constant 0 : index
    %c0_89 = arith.constant 0 : index
    %c0_90 = arith.constant 0 : index
    %192 = vector.load %arg21[%c0_88, %c0_89, %c0_90] : memref<2x16x256xf32, #tpu.memory_space<vmem>>, vector<1x16x256xf32>
    %193 = vector.shape_cast %192 : vector<1x16x256xf32> to vector<16x256xf32>
    %194 = vector.shape_cast %191 : vector<16x256xf32> to vector<1x16x256xf32>
    tpu.vector_store %arg21[%c0_88, %c0_89, %c0_90], %194 {strides = array<i32>} : memref<2x16x256xf32, #tpu.memory_space<vmem>>, vector<1x16x256xf32>,
    %195 = vector.extract_strided_slice %190 {offsets = [18, 0], sizes = [16, 256], strides = [1, 1]} : vector<34x256xf32> to vector<16x256xf32>
    %c1 = arith.constant 1 : index
    %c0_91 = arith.constant 0 : index
    %c0_92 = arith.constant 0 : index
    %196 = vector.load %arg21[%c1, %c0_91, %c0_92] : memref<2x16x256xf32, #tpu.memory_space<vmem>>, vector<1x16x256xf32>
    %197 = vector.shape_cast %196 : vector<1x16x256xf32> to vector<16x256xf32>
    %198 = vector.shape_cast %195 : vector<16x256xf32> to vector<1x16x256xf32>
    tpu.vector_store %arg21[%c1, %c0_91, %c0_92], %198 {strides = array<i32>} : memref<2x16x256xf32, #tpu.memory_space<vmem>>, vector<1x16x256xf32>,
    return
  }
  func.func @transform_0(%arg0: i32) -> (i32, i32) {
    %c0_i32 = arith.constant 0 : i32
    %c0_i32_0 = arith.constant 0 : i32
    %c0_i32_1 = arith.constant 0 : i32
    return %c0_i32, %c0_i32_0 : i32, i32
  }
  func.func @transform_1(%arg0: i32) -> (i32, i32) {
    %c0_i32 = arith.constant 0 : i32
    %c0_i32_0 = arith.constant 0 : i32
    %c0_i32_1 = arith.constant 0 : i32
    return %c0_i32, %c0_i32_0 : i32, i32
  }
  func.func @transform_2(%arg0: i32) -> (i32, i32) {
    %c0_i32 = arith.constant 0 : i32
    %c0_i32_0 = arith.constant 0 : i32
    %c0_i32_1 = arith.constant 0 : i32
    return %c0_i32, %c0_i32_0 : i32, i32
  }
  func.func @transform_3(%arg0: i32) -> (i32, i32) {
    %c0_i32 = arith.constant 0 : i32
    %c0_i32_0 = arith.constant 0 : i32
    %c0_i32_1 = arith.constant 0 : i32
    return %c0_i32, %c0_i32_0 : i32, i32
  }
  func.func @transform_4(%arg0: i32) -> (i32, i32) {
    %c0_i32 = arith.constant 0 : i32
    %c0_i32_0 = arith.constant 0 : i32
    %c0_i32_1 = arith.constant 0 : i32
    return %c0_i32, %c0_i32_0 : i32, i32
  }
  func.func @transform_5(%arg0: i32) -> (i32, i32) {
    %c0_i32 = arith.constant 0 : i32
    %c0_i32_0 = arith.constant 0 : i32
    %c0_i32_1 = arith.constant 0 : i32
    return %c0_i32, %c0_i32_0 : i32, i32
  }
  func.func @transform_6(%arg0: i32) -> (i32, i32) {
    %c0_i32 = arith.constant 0 : i32
    %c0_i32_0 = arith.constant 0 : i32
    %c0_i32_1 = arith.constant 0 : i32
    return %c0_i32, %c0_i32_0 : i32, i32
  }
  func.func @transform_7(%arg0: i32) -> (i32, i32) {
    %c0_i32 = arith.constant 0 : i32
    %c0_i32_0 = arith.constant 0 : i32
    %c0_i32_1 = arith.constant 0 : i32
    return %c0_i32, %c0_i32_0 : i32, i32
  }
  func.func @transform_8(%arg0: i32) -> (i32, i32) {
    %c0_i32 = arith.constant 0 : i32
    %c0_i32_0 = arith.constant 0 : i32
    %c0_i32_1 = arith.constant 0 : i32
    return %c0_i32, %c0_i32_0 : i32, i32
  }
  func.func @transform_9(%arg0: i32) -> (i32, i32) {
    %c0_i32 = arith.constant 0 : i32
    %c0_i32_0 = arith.constant 0 : i32
    %c0_i32_1 = arith.constant 0 : i32
    return %c0_i32, %c0_i32_0 : i32, i32
  }
  func.func @transform_10(%arg0: i32) -> (i32, i32) {
    %c0_i32 = arith.constant 0 : i32
    %c0_i32_0 = arith.constant 0 : i32
    %c0_i32_1 = arith.constant 0 : i32
    return %c0_i32, %c0_i32_0 : i32, i32
  }
  func.func @transform_11(%arg0: i32) -> (i32, i32) {
    %c0_i32 = arith.constant 0 : i32
    %c0_i32_0 = arith.constant 0 : i32
    %c0_i32_1 = arith.constant 0 : i32
    return %c0_i32, %c0_i32_0 : i32, i32
  }
  func.func @transform_12(%arg0: i32) -> (i32, i32) {
    %c0_i32 = arith.constant 0 : i32
    %c0_i32_0 = arith.constant 0 : i32
    %c0_i32_1 = arith.constant 0 : i32
    return %c0_i32, %c0_i32_0 : i32, i32
  }
  func.func @transform_13(%arg0: i32) -> (i32, i32) {
    %c0_i32 = arith.constant 0 : i32
    %c0_i32_0 = arith.constant 0 : i32
    %c0_i32_1 = arith.constant 0 : i32
    return %c0_i32, %c0_i32_0 : i32, i32
  }
  func.func @transform_14(%arg0: i32) -> (i32, i32) {
    %c0_i32 = arith.constant 0 : i32
    %c0_i32_0 = arith.constant 0 : i32
    %c0_i32_1 = arith.constant 0 : i32
    return %c0_i32, %c0_i32_0 : i32, i32
  }
  func.func @transform_15(%arg0: i32) -> (i32, i32) {
    %c0_i32 = arith.constant 0 : i32
    %c0_i32_0 = arith.constant 0 : i32
    %c0_i32_1 = arith.constant 0 : i32
    return %c0_i32, %c0_i32_0 : i32, i32
  }
  func.func @transform_16(%arg0: i32) -> (i32, i32) {
    %c0_i32 = arith.constant 0 : i32
    %c0_i32_0 = arith.constant 0 : i32
    %c0_i32_1 = arith.constant 0 : i32
    return %c0_i32, %c0_i32_0 : i32, i32
  }
  func.func @transform_17(%arg0: i32) -> (i32, i32) {
    %c0_i32 = arith.constant 0 : i32
    %c0_i32_0 = arith.constant 0 : i32
    %c0_i32_1 = arith.constant 0 : i32
    return %c0_i32, %c0_i32_0 : i32, i32
  }
  func.func @transform_18(%arg0: i32) -> (i32, i32) {
    %c0_i32 = arith.constant 0 : i32
    %c0_i32_0 = arith.constant 0 : i32
    %c0_i32_1 = arith.constant 0 : i32
    return %c0_i32, %c0_i32_0 : i32, i32
  }
  func.func @transform_19(%arg0: i32) -> (i32, i32) {
    %c0_i32 = arith.constant 0 : i32
    %c0_i32_0 = arith.constant 0 : i32
    %c0_i32_1 = arith.constant 0 : i32
    return %c0_i32, %c0_i32_0 : i32, i32
  }
  func.func @transform_20(%arg0: i32) -> (i32, i32, i32) {
    %c0_i32 = arith.constant 0 : i32
    %c0_i32_0 = arith.constant 0 : i32
    %c0_i32_1 = arith.constant 0 : i32
    %c0_i32_2 = arith.constant 0 : i32
    return %c0_i32, %c0_i32_0, %c0_i32_1 : i32, i32, i32
  }
}

</mosaic_0001>

<llo_original>
// kernel: eq.8
$region0: #{eq.8}
  %s0 = inlined_call_operand.vmem [shape: s32[2,17], index: 0, kind: input, shape index: {}]
  %s1 = inlined_call_operand.vmem [shape: s32[34], index: 1, kind: output, shape index: {}]
  $region1: #{eq.8} parent=0
    #allocation0 [shape = 'u8[4096]{0}', space=vmem, size = 0x1000, scoped, tag = 'scoped mem for output reshape']
    #allocation1 [shape = 'u8[4096]{0}', space=vmem, size = 0x1000, scoped, tag = 'scoped mem for input reshape']
    %s3 = ssub.s32 4, 1
    %v4 = vld [vmem:[%s0] sm:%s3]
    %5 = vst [vmem:[#allocation1] sm:%s3] %v4
    %v6 = vld [vmem:[#allocation1] sm:$0x1]
    %vm7 = vcmask 138240
    %8 = vst.msk [vmem:[#allocation0] sm:$0x1] %vm7, %v6
    %s9 = scalar_lea.vmem [#allocation1], 1
    %v10 = vld [vmem:[%s9] sm:$0x1]
    %11 = vrot.lane.b32.xlu0 %v10, 17
    %v12 = vpop.permute.xlu0 %11
    %vm13 = vcmask 277640
    %14 = vst.msk [vmem:[#allocation0] sm:$0x1] %vm13, %v12
    %s16 = ssub.s32 2, 1
    %v17 = vld [vmem:[#allocation0] sm:%s16]
    %s19 = ssub.s32 2, 1
    %20 = vst [vmem:[%s1] sm:%s19] %v17

// kernel: tile.9
$region0: #{tile.9}
  %s0 = inlined_call_operand.vmem [shape: f32[2,17,256], index: 0, kind: input, shape index: {}]
  %s1 = inlined_call_operand.vmem [shape: f32[34,256], index: 1, kind: output, shape index: {}]
  %v2 = vld [vmem:[%s0] sm:$0xff]
  %3 = vst [vmem:[%s1] sm:$0xff] %v2
  %s4 = scalar_lea.vmem %s0, 8
  %v5 = vld [vmem:[%s4] sm:$0xff]
  %s6 = scalar_lea.vmem %s1, 8
  %7 = vst [vmem:[%s6] sm:$0xff] %v5
  %s8 = scalar_lea.vmem %s0, 16
  %v9 = vld [vmem:[%s8] sm:$0xff]
  %s10 = scalar_lea.vmem %s1, 16
  %11 = vst [vmem:[%s10] sm:$0xff] %v9
  %s12 = scalar_lea.vmem %s0, 24
  %v13 = vld [vmem:[%s12] sm:$0xff]
  %s14 = scalar_lea.vmem %s1, 24
  %15 = vst [vmem:[%s14] sm:$0xff] %v13
  %s16 = scalar_lea.vmem %s0, 32
  %v17 = vld [vmem:[%s16] ss:$8 sm:$0x7]
  %s18 = scalar_lea.vmem %s1, 32
  %19 = vst [vmem:[%s18] ss:$8 sm:$0x3] %v17
  %s20 = scalar_lea.vmem %s1, 31
  %21 = vst [vmem:[%s20] sm:$0x4] %v17
  %s22 = scalar_lea.vmem %s0, 49
  %v23 = vld [vmem:[%s22] sm:$0xff]
  %s24 = scalar_lea.vmem %s1, 34
  %25 = vst [vmem:[%s24] sm:$0x3f] %v23
  %s26 = scalar_lea.vmem %s1, 90
  %27 = vst [vmem:[%s26] ss:$-7 sm:$0xc0] %v23
  %s28 = scalar_lea.vmem %s0, 57
  %v29 = vld [vmem:[%s28] sm:$0xff]
  %s30 = scalar_lea.vmem %s1, 42
  %31 = vst [vmem:[%s30] sm:$0x3f] %v29
  %s32 = scalar_lea.vmem %s1, 98
  %33 = vst [vmem:[%s32] ss:$-7 sm:$0xc0] %v29
  %s34 = scalar_lea.vmem %s0, 65
  %v35 = vld [vmem:[%s34] sm:$0xff]
  %s36 = scalar_lea.vmem %s1, 50
  %37 = vst [vmem:[%s36] sm:$0x3f] %v35
  %s38 = scalar_lea.vmem %s1, 106
  %39 = vst [vmem:[%s38] ss:$-7 sm:$0xc0] %v35
  %s40 = scalar_lea.vmem %s0, 73
  %v41 = vld [vmem:[%s40] sm:$0xff]
  %s42 = scalar_lea.vmem %s1, 58
  %43 = vst [vmem:[%s42] sm:$0x3f] %v41
  %s44 = scalar_lea.vmem %s1, 114
  %45 = vst [vmem:[%s44] ss:$-7 sm:$0xc0] %v41
  %s46 = scalar_lea.vmem %s0, 88
  %v47 = vld [vmem:[%s46] sm:$0x1]
  %s48 = scalar_lea.vmem %s1, 73
  %49 = vst [vmem:[%s48] sm:$0x1] %v47

// kernel: vit_extractor_forward.1
$region0: #{vit_extractor_forward.1}
  #allocation0 [shape = 'u32[]', space=smem, size = 0x4, offset = 0x4, fixed_abs, tag = 'smem constant byte address 0x4 - core index']
  #allocation1 [shape = 'u32[72,128]{1,0:T(1,128)}', space=vmem, size = 0x9000, scoped, tag = 'internal scratch']
  %s0 = inlined_call_operand.vmem [shape: f32[34,48], index: 0, kind: input, shape index: {}]
  %s1 = inlined_call_operand.vmem [shape: f32[48,256], index: 1, kind: input, shape index: {}]
  %s2 = inlined_call_operand.vmem [shape: f32[34,256], index: 2, kind: input, shape index: {}]
  %s3 = inlined_call_operand.vmem [shape: f32[34,34], index: 3, kind: input, shape index: {}]
  %s4 = inlined_call_operand.vmem [shape: f32[1,256], index: 4, kind: input, shape index: {}]
  %s5 = inlined_call_operand.vmem [shape: f32[1,256], index: 5, kind: input, shape index: {}]
  %s6 = inlined_call_operand.vmem [shape: bf16[256,768], index: 6, kind: input, shape index: {}]
  %s7 = inlined_call_operand.vmem [shape: f32[1,768], index: 7, kind: input, shape index: {}]
  %s8 = inlined_call_operand.vmem [shape: bf16[256,256], index: 8, kind: input, shape index: {}]
  %s9 = inlined_call_operand.vmem [shape: f32[1,256], index: 9, kind: input, shape index: {}]
  %s10 = inlined_call_operand.vmem [shape: f32[1,256], index: 10, kind: input, shape index: {}]
  %s11 = inlined_call_operand.vmem [shape: f32[1,256], index: 11, kind: input, shape index: {}]
  %s12 = inlined_call_operand.vmem [shape: bf16[256,1024], index: 12, kind: input, shape index: {}]
  %s13 = inlined_call_operand.vmem [shape: f32[1,1024], index: 13, kind: input, shape index: {}]
  %s14 = inlined_call_operand.vmem [shape: bf16[1024,256], index: 14, kind: input, shape index: {}]
  %s15 = inlined_call_operand.vmem [shape: f32[1,256], index: 15, kind: input, shape index: {}]
  %s16 = inlined_call_operand.vmem [shape: f32[1,256], index: 16, kind: input, shape index: {}]
  %s17 = inlined_call_operand.vmem [shape: f32[1,256], index: 17, kind: input, shape index: {}]
  %s18 = inlined_call_operand.vmem [shape: bf16[256,256], index: 18, kind: input, shape index: {}]
  %s19 = inlined_call_operand.vmem [shape: f32[1,256], index: 19, kind: input, shape index: {}]
  %s20 = inlined_call_operand.vmem [shape: f32[2,16,256], index: 20, kind: output, shape index: {}]
  %s21 = sld [smem:[#allocation0]]
  $region90: #{vit_extractor_forward.1} parent=0
    _
  %s23 = ssub.s32 1, %s21
  %s24 = scalar_select 0, %s23, %s21
  // Predicated region
  $region2: #{vit_extractor_forward.1} parent=0 // pred_check
    _
  $region3: #{vit_extractor_forward.1} parent=0 // pred_check_branch
    %26 = sbr.rel (0) target = $region5
  $region4: #{vit_extractor_forward.1} parent=0 // pred_region
    _
  $region5: #{vit_extractor_forward.1} parent=0 // pred_fallthru
    _
  // Predicated region
  $region6: #{vit_extractor_forward.1} parent=0 // pred_check
    _
  $region7: #{vit_extractor_forward.1} parent=0 // pred_check_branch
    %28 = sbr.rel (0) target = $region9
  $region8: #{vit_extractor_forward.1} parent=0 // pred_region
    _
  $region9: #{vit_extractor_forward.1} parent=0 // pred_fallthru
    _
  // Predicated region
  $region10: #{vit_extractor_forward.1} parent=0 // pred_check
    _
  $region11: #{vit_extractor_forward.1} parent=0 // pred_check_branch
    %30 = sbr.rel (0) target = $region13
  $region12: #{vit_extractor_forward.1} parent=0 // pred_region
    _
  $region13: #{vit_extractor_forward.1} parent=0 // pred_fallthru
    _
  // Predicated region
  $region14: #{vit_extractor_forward.1} parent=0 // pred_check
    _
  $region15: #{vit_extractor_forward.1} parent=0 // pred_check_branch
    %32 = sbr.rel (0) target = $region17
  $region16: #{vit_extractor_forward.1} parent=0 // pred_region
    _
  $region17: #{vit_extractor_forward.1} parent=0 // pred_fallthru
    _
  // Predicated region
  $region18: #{vit_extractor_forward.1} parent=0 // pred_check
    _
  $region19: #{vit_extractor_forward.1} parent=0 // pred_check_branch
    %34 = sbr.rel (0) target = $region21
  $region20: #{vit_extractor_forward.1} parent=0 // pred_region
    _
  $region21: #{vit_extractor_forward.1} parent=0 // pred_fallthru
    _
  // Predicated region
  $region22: #{vit_extractor_forward.1} parent=0 // pred_check
    _
  $region23: #{vit_extractor_forward.1} parent=0 // pred_check_branch
    %36 = sbr.rel (0) target = $region25
  $region24: #{vit_extractor_forward.1} parent=0 // pred_region
    _
  $region25: #{vit_extractor_forward.1} parent=0 // pred_fallthru
    _
  // Predicated region
  $region26: #{vit_extractor_forward.1} parent=0 // pred_check
    _
  $region27: #{vit_extractor_forward.1} parent=0 // pred_check_branch
    %38 = sbr.rel (0) target = $region29
  $region28: #{vit_extractor_forward.1} parent=0 // pred_region
    _
  $region29: #{vit_extractor_forward.1} parent=0 // pred_fallthru
    _
  // Predicated region
  $region30: #{vit_extractor_forward.1} parent=0 // pred_check
    _
  $region31: #{vit_extractor_forward.1} parent=0 // pred_check_branch
    %40 = sbr.rel (0) target = $region33
  $region32: #{vit_extractor_forward.1} parent=0 // pred_region
    _
  $region33: #{vit_extractor_forward.1} parent=0 // pred_fallthru
    _
  // Predicated region
  $region34: #{vit_extractor_forward.1} parent=0 // pred_check
    _
  $region35: #{vit_extractor_forward.1} parent=0 // pred_check_branch
    %42 = sbr.rel (0) target = $region37
  $region36: #{vit_extractor_forward.1} parent=0 // pred_region
    _
  $region37: #{vit_extractor_forward.1} parent=0 // pred_fallthru
    _
  // Predicated region
  $region38: #{vit_extractor_forward.1} parent=0 // pred_check
    _
  $region39: #{vit_extractor_forward.1} parent=0 // pred_check_branch
    %44 = sbr.rel (0) target = $region41
  $region40: #{vit_extractor_forward.1} parent=0 // pred_region
    _
  $region41: #{vit_extractor_forward.1} parent=0 // pred_fallthru
    _
  // Predicated region
  $region42: #{vit_extractor_forward.1} parent=0 // pred_check
    _
  $region43: #{vit_extractor_forward.1} parent=0 // pred_check_branch
    %46 = sbr.rel (0) target = $region45
  $region44: #{vit_extractor_forward.1} parent=0 // pred_region
    _
  $region45: #{vit_extractor_forward.1} parent=0 // pred_fallthru
    _
  // Predicated region
  $region46: #{vit_extractor_forward.1} parent=0 // pred_check
    _
  $region47: #{vit_extractor_forward.1} parent=0 // pred_check_branch
    %48 = sbr.rel (0) target = $region49
  $region48: #{vit_extractor_forward.1} parent=0 // pred_region
    _
  $region49: #{vit_extractor_forward.1} parent=0 // pred_fallthru
    _
  // Predicated region
  $region50: #{vit_extractor_forward.1} parent=0 // pred_check
    _
  $region51: #{vit_extractor_forward.1} parent=0 // pred_check_branch
    %50 = sbr.rel (0) target = $region53
  $region52: #{vit_extractor_forward.1} parent=0 // pred_region
    _
  $region53: #{vit_extractor_forward.1} parent=0 // pred_fallthru
    _
  // Predicated region
  $region54: #{vit_extractor_forward.1} parent=0 // pred_check
    _
  $region55: #{vit_extractor_forward.1} parent=0 // pred_check_branch
    %52 = sbr.rel (0) target = $region57
  $region56: #{vit_extractor_forward.1} parent=0 // pred_region
    _
  $region57: #{vit_extractor_forward.1} parent=0 // pred_fallthru
    _
  // Predicated region
  $region58: #{vit_extractor_forward.1} parent=0 // pred_check
    _
  $region59: #{vit_extractor_forward.1} parent=0 // pred_check_branch
    %54 = sbr.rel (0) target = $region61
  $region60: #{vit_extractor_forward.1} parent=0 // pred_region
    _
  $region61: #{vit_extractor_forward.1} parent=0 // pred_fallthru
    _
  // Predicated region
  $region62: #{vit_extractor_forward.1} parent=0 // pred_check
    _
  $region63: #{vit_extractor_forward.1} parent=0 // pred_check_branch
    %56 = sbr.rel (0) target = $region65
  $region64: #{vit_extractor_forward.1} parent=0 // pred_region
    _
  $region65: #{vit_extractor_forward.1} parent=0 // pred_fallthru
    _
  // Predicated region
  $region66: #{vit_extractor_forward.1} parent=0 // pred_check
    _
  $region67: #{vit_extractor_forward.1} parent=0 // pred_check_branch
    %58 = sbr.rel (0) target = $region69
  $region68: #{vit_extractor_forward.1} parent=0 // pred_region
    _
  $region69: #{vit_extractor_forward.1} parent=0 // pred_fallthru
    _
  // Predicated region
  $region70: #{vit_extractor_forward.1} parent=0 // pred_check
    _
  $region71: #{vit_extractor_forward.1} parent=0 // pred_check_branch
    %60 = sbr.rel (0) target = $region73
  $region72: #{vit_extractor_forward.1} parent=0 // pred_region
    _
  $region73: #{vit_extractor_forward.1} parent=0 // pred_fallthru
    _
  // Predicated region
  $region74: #{vit_extractor_forward.1} parent=0 // pred_check
    _
  $region75: #{vit_extractor_forward.1} parent=0 // pred_check_branch
    %62 = sbr.rel (0) target = $region77
  $region76: #{vit_extractor_forward.1} parent=0 // pred_region
    _
  $region77: #{vit_extractor_forward.1} parent=0 // pred_fallthru
    _
  // Predicated region
  $region78: #{vit_extractor_forward.1} parent=0 // pred_check
    _
  $region79: #{vit_extractor_forward.1} parent=0 // pred_check_branch
    %64 = sbr.rel (0) target = $region81
  $region80: #{vit_extractor_forward.1} parent=0 // pred_region
    _
  $region81: #{vit_extractor_forward.1} parent=0 // pred_fallthru
    _
  %v65 = vld [vmem:[%s0] sm:$0xff]
  %v66 = vld [vmem:[%s0 + $0x8] sm:$0xff]
  %v67 = vld [vmem:[%s0 + $0x10] sm:$0xff]
  %v68 = vld [vmem:[%s0 + $0x18] sm:$0xff]
  %v69 = vld [vmem:[%s0 + $0x20] sm:$0x3]
  %v70 = vld [vmem:[%s1] sm:$0xff]
  %v71 = vld [vmem:[%s1 + $0x8] sm:$0xff]
  %v72 = vld [vmem:[%s1 + $0x10] sm:$0xff]
  %v73 = vld [vmem:[%s1 + $0x18] sm:$0xff]
  %v74 = vld [vmem:[%s1 + $0x20] sm:$0xff]
  %v75 = vld [vmem:[%s1 + $0x28] sm:$0xff]
  %v76 = vld [vmem:[%s1 + $0x30] sm:$0xff]
  %v77 = vld [vmem:[%s1 + $0x38] sm:$0xff]
  %v78 = vld [vmem:[%s1 + $0x40] sm:$0xff]
  %v79 = vld [vmem:[%s1 + $0x48] sm:$0xff]
  %v80 = vld [vmem:[%s1 + $0x50] sm:$0xff]
  %v81 = vld [vmem:[%s1 + $0x58] sm:$0xff]
  %v82 = vld [vmem:[%s2] sm:$0xff]
  %v83 = vld [vmem:[%s2 + $0x8] sm:$0xff]
  %v84 = vld [vmem:[%s2 + $0x10] sm:$0xff]
  %v85 = vld [vmem:[%s2 + $0x18] sm:$0xff]
  %v86 = vld [vmem:[%s2 + $0x20] sm:$0xff]
  %v87 = vld [vmem:[%s2 + $0x28] sm:$0xff]
  %v88 = vld [vmem:[%s2 + $0x30] sm:$0xff]
  %v89 = vld [vmem:[%s2 + $0x38] sm:$0xff]
  %v90 = vld [vmem:[%s2 + $0x40] sm:$0x3]
  %v91 = vld [vmem:[%s2 + $0x48] sm:$0x3]
  %vm92 = vcmask 392192
  %v94 = vsel %vm92, %v65, 0
  %v97 = vsel %vm92, %v66, 0
  %v100 = vsel %vm92, %v67, 0
  %v103 = vsel %vm92, %v68, 0
  %v106 = vsel %vm92, %v69, 0
  %108 = vmatpush.msra.mxu0 0.0
  %109 = vmatpush.msra.mxu0 0.0
  %110 = vmatpush.msra.mxu0 0.0
  %111 = vmatpush.msra.mxu0 0.0
  %112 = vmatpush.msra.mxu0 0.0
  %113 = vmatpush.msra.mxu0 0.0
  %114 = vmatpush.msra.mxu0 0.0
  %115 = vmatpush.msra.mxu0 0.0
  %116 = vmatpush.msra.mxu0 0.0
  %117 = vmatpush.msra.mxu0 0.0
  %118 = vmatpush.msra.mxu0 %v80
  %119 = vmatpush.msra.mxu0 %v78
  %120 = vmatpush.msra.mxu0 %v76
  %121 = vmatpush.msra.mxu0 %v74
  %122 = vmatpush.msra.mxu0 %v72
  %123 = vmatpush.msra.mxu0 %v70
  %124 = vmatmul.f32.gmra.mxu0 %v94
  %v125 = vpop.f32.mrf.mxu0
  %v126 = vadd.f32 %v82, %v125
  %127 = vmatmul.f32.gmra.mxu0 %v97
  %v128 = vpop.f32.mrf.mxu0
  %v129 = vadd.f32 %v84, %v128
  %130 = vmatmul.f32.gmra.mxu0 %v100
  %v131 = vpop.f32.mrf.mxu0
  %v132 = vadd.f32 %v86, %v131
  %133 = vmatmul.f32.gmra.mxu0 %v103
  %v134 = vpop.f32.mrf.mxu0
  %v135 = vadd.f32 %v88, %v134
  %136 = vmatmul.f32.gmra.mxu0 %v106
  %v137 = vpop.f32.mrf.mxu0
  %v138 = vadd.f32 %v90, %v137
  %139 = vdwg.mxu0
  %140 = vmatpush.msra.mxu0 0.0
  %141 = vmatpush.msra.mxu0 0.0
  %142 = vmatpush.msra.mxu0 0.0
  %143 = vmatpush.msra.mxu0 0.0
  %144 = vmatpush.msra.mxu0 0.0
  %145 = vmatpush.msra.mxu0 0.0
  %146 = vmatpush.msra.mxu0 0.0
  %147 = vmatpush.msra.mxu0 0.0
  %148 = vmatpush.msra.mxu0 0.0
  %149 = vmatpush.msra.mxu0 0.0
  %150 = vmatpush.msra.mxu0 %v81
  %151 = vmatpush.msra.mxu0 %v79
  %152 = vmatpush.msra.mxu0 %v77
  %153 = vmatpush.msra.mxu0 %v75
  %154 = vmatpush.msra.mxu0 %v73
  %155 = vmatpush.msra.mxu0 %v71
  %156 = vmatmul.f32.gmra.mxu0 %v94
  %v157 = vpop.f32.mrf.mxu0
  %v158 = vadd.f32 %v83, %v157
  %159 = vmatmul.f32.gmra.mxu0 %v97
  %v160 = vpop.f32.mrf.mxu0
  %v161 = vadd.f32 %v85, %v160
  %162 = vmatmul.f32.gmra.mxu0 %v100
  %v163 = vpop.f32.mrf.mxu0
  %v164 = vadd.f32 %v87, %v163
  %165 = vmatmul.f32.gmra.mxu0 %v103
  %v166 = vpop.f32.mrf.mxu0
  %v167 = vadd.f32 %v89, %v166
  %168 = vmatmul.f32.gmra.mxu0 %v106
  %v169 = vpop.f32.mrf.mxu0
  %v170 = vadd.f32 %v91, %v169
  %171 = vdwg.mxu0
  %v172 = vld [vmem:[%s4] sm:$0x3]
  %v173 = vld [vmem:[%s5] sm:$0x3]
  %v174 = vadd.f32 %v126, %v158
  %175 = vadd.xlane.f32.xlu0 %v174
  %v176 = vpop.xlane.xlu0 %175
  %v177 = vadd.f32 %v129, %v161
  %178 = vadd.xlane.f32.xlu0 %v177
  %v179 = vpop.xlane.xlu0 %178
  %v180 = vadd.f32 %v132, %v164
  %181 = vadd.xlane.f32.xlu0 %v180
  %v182 = vpop.xlane.xlu0 %181
  %v183 = vadd.f32 %v135, %v167
  %184 = vadd.xlane.f32.xlu0 %v183
  %v185 = vpop.xlane.xlu0 %184
  %vm186 = vcmask 1041408
  %v187 = vsel %vm186, %v138, 0.0
  %v188 = vsel %vm186, %v170, 0.0
  %v189 = vadd.f32 %v187, %v188
  %190 = vadd.xlane.f32.xlu0 %v189
  %v191 = vpop.xlane.xlu0 %190
  %v192 = vrcp.pop 256.0
  %v193 = vmul.f32 256.0, %v192
  %v194 = vsub.f32 1.0, %v193
  %v195 = vmul.f32 %v192, %v194
  %v196 = vadd.f32 %v192, %v195
  %vm197 = vweird.f32 %v192
  %v198 = vsel %vm197, %v192, %v196
  %v199 = vmul.f32 %v176, %v198
  %v200 = vmul.f32 %v179, %v198
  %v201 = vmul.f32 %v182, %v198
  %v202 = vmul.f32 %v185, %v198
  %v203 = vmul.f32 %v191, %v198
  %v204 = vsub.f32 %v126, %v199
  %v205 = vsub.f32 %v158, %v199
  %v206 = vsub.f32 %v129, %v200
  %v207 = vsub.f32 %v161, %v200
  %v208 = vsub.f32 %v132, %v201
  %v209 = vsub.f32 %v164, %v201
  %v210 = vsub.f32 %v135, %v202
  %v211 = vsub.f32 %v167, %v202
  %v212 = vsub.f32 %v138, %v203
  %v213 = vsub.f32 %v170, %v203
  %v214 = vmul.f32 %v204, %v204
  %v215 = vmul.f32 %v205, %v205
  %v216 = vmul.f32 %v206, %v206
  %v217 = vmul.f32 %v207, %v207
  %v218 = vmul.f32 %v208, %v208
  %v219 = vmul.f32 %v209, %v209
  %v220 = vmul.f32 %v210, %v210
  %v221 = vmul.f32 %v211, %v211
  %v222 = vmul.f32 %v212, %v212
  %v223 = vmul.f32 %v213, %v213
  %v224 = vadd.f32 %v214, %v215
  %225 = vadd.xlane.f32.xlu0 %v224
  %v226 = vpop.xlane.xlu0 %225
  %v227 = vadd.f32 %v216, %v217
  %228 = vadd.xlane.f32.xlu0 %v227
  %v229 = vpop.xlane.xlu0 %228
  %v230 = vadd.f32 %v218, %v219
  %231 = vadd.xlane.f32.xlu0 %v230
  %v232 = vpop.xlane.xlu0 %231
  %v233 = vadd.f32 %v220, %v221
  %234 = vadd.xlane.f32.xlu0 %v233
  %v235 = vpop.xlane.xlu0 %234
  %v236 = vsel %vm186, %v222, 0.0
  %v237 = vsel %vm186, %v223, 0.0
  %v238 = vadd.f32 %v236, %v237
  %239 = vadd.xlane.f32.xlu0 %v238
  %v240 = vpop.xlane.xlu0 %239
  %v241 = vmul.f32 %v226, %v198
  %v242 = vmul.f32 %v229, %v198
  %v243 = vmul.f32 %v232, %v198
  %v244 = vmul.f32 %v235, %v198
  %v245 = vmul.f32 %v240, %v198
  %v246 = vadd.f32 %v241, 1e-06
  %v247 = vadd.f32 %v242, 1e-06
  %v248 = vadd.f32 %v243, 1e-06
  %v249 = vadd.f32 %v244, 1e-06
  %v250 = vadd.f32 %v245, 1e-06
  %v251 = vrsqrt.pop %v246
  %v252 = vmul.f32 %v251, %v246
  %v253 = vmul.f32 %v252, %v251
  %v254 = vmul.f32 0.5, %v253
  %v255 = vsub.f32 1.5, %v254
  %v256 = vmul.f32 %v251, %v255
  %vm257 = vweird.f32 %v246
  %vm258 = vweird.f32 %v251
  %vm259 = vmor %vm257, %vm258
  %v260 = vsel %vm259, %v251, %v256
  %v261 = vrsqrt.pop %v247
  %v262 = vmul.f32 %v261, %v247
  %v263 = vmul.f32 %v262, %v261
  %v264 = vmul.f32 0.5, %v263
  %v265 = vsub.f32 1.5, %v264
  %v266 = vmul.f32 %v261, %v265
  %vm267 = vweird.f32 %v247
  %vm268 = vweird.f32 %v261
  %vm269 = vmor %vm267, %vm268
  %v270 = vsel %vm269, %v261, %v266
  %v271 = vrsqrt.pop %v248
  %v272 = vmul.f32 %v271, %v248
  %v273 = vmul.f32 %v272, %v271
  %v274 = vmul.f32 0.5, %v273
  %v275 = vsub.f32 1.5, %v274
  %v276 = vmul.f32 %v271, %v275
  %vm277 = vweird.f32 %v248
  %vm278 = vweird.f32 %v271
  %vm279 = vmor %vm277, %vm278
  %v280 = vsel %vm279, %v271, %v276
  %v281 = vrsqrt.pop %v249
  %v282 = vmul.f32 %v281, %v249
  %v283 = vmul.f32 %v282, %v281
  %v284 = vmul.f32 0.5, %v283
  %v285 = vsub.f32 1.5, %v284
  %v286 = vmul.f32 %v281, %v285
  %vm287 = vweird.f32 %v249
  %vm288 = vweird.f32 %v281
  %vm289 = vmor %vm287, %vm288
  %v290 = vsel %vm289, %v281, %v286
  %v291 = vrsqrt.pop %v250
  %v292 = vmul.f32 %v291, %v250
  %v293 = vmul.f32 %v292, %v291
  %v294 = vmul.f32 0.5, %v293
  %v295 = vsub.f32 1.5, %v294
  %v296 = vmul.f32 %v291, %v295
  %vm297 = vweird.f32 %v250
  %vm298 = vweird.f32 %v291
  %vm299 = vmor %vm297, %vm298
  %v300 = vsel %vm299, %v291, %v296
  %v301 = vmul.f32 %v204, %v260
  %v302 = vmul.f32 %v205, %v260
  %v303 = vmul.f32 %v206, %v270
  %v304 = vmul.f32 %v207, %v270
  %v305 = vmul.f32 %v208, %v280
  %v306 = vmul.f32 %v209, %v280
  %v307 = vmul.f32 %v210, %v290
  %v308 = vmul.f32 %v211, %v290
  %v309 = vmul.f32 %v212, %v300
  %v310 = vmul.f32 %v213, %v300
  %v312 = vperm.slane %v172, 0
  %v313 = vperm.slane %v172, 1
  %v316 = vmul.f32 %v301, %v312
  %v317 = vmul.f32 %v302, %v313
  %v318 = vmul.f32 %v303, %v312
  %v319 = vmul.f32 %v304, %v313
  %v320 = vmul.f32 %v305, %v312
  %v321 = vmul.f32 %v306, %v313
  %v322 = vmul.f32 %v307, %v312
  %v323 = vmul.f32 %v308, %v313
  %v324 = vmul.f32 %v309, %v312
  %v325 = vmul.f32 %v310, %v313
  %v327 = vperm.slane %v173, 0
  %v328 = vperm.slane %v173, 1
  %v331 = vadd.f32 %v316, %v327
  %v332 = vadd.f32 %v317, %v328
  %v333 = vadd.f32 %v318, %v327
  %v334 = vadd.f32 %v319, %v328
  %v335 = vadd.f32 %v320, %v327
  %v336 = vadd.f32 %v321, %v328
  %v337 = vadd.f32 %v322, %v327
  %v338 = vadd.f32 %v323, %v328
  %v339 = vadd.f32 %v324, %v327
  %v340 = vadd.f32 %v325, %v328
  %v341 = vpack.c.bf16 %v333, %v331
  %v342 = vpack.c.bf16 %v334, %v332
  %v343 = vpack.c.bf16 %v337, %v335
  %v344 = vpack.c.bf16 %v338, %v336
  %v345 = vpack.c.bf16 %v339, %v339
  %v346 = vpack.c.bf16 %v340, %v340
  %v347 = vld [vmem:[%s6] sm:$0xff]
  %v348 = vld [vmem:[%s6 + $0x8] sm:$0xff]
  %v349 = vld [vmem:[%s6 + $0x10] sm:$0xff]
  %v350 = vld [vmem:[%s6 + $0x18] sm:$0xff]
  %v351 = vld [vmem:[%s6 + $0x20] sm:$0xff]
  %v352 = vld [vmem:[%s6 + $0x28] sm:$0xff]
  %v353 = vld [vmem:[%s6 + $0x30] sm:$0xff]
  %v354 = vld [vmem:[%s6 + $0x38] sm:$0xff]
  %v355 = vld [vmem:[%s6 + $0x40] sm:$0xff]
  %v356 = vld [vmem:[%s6 + $0x48] sm:$0xff]
  %v357 = vld [vmem:[%s6 + $0x50] sm:$0xff]
  %v358 = vld [vmem:[%s6 + $0x58] sm:$0xff]
  %v359 = vld [vmem:[%s6 + $0x60] sm:$0xff]
  %v360 = vld [vmem:[%s6 + $0x68] sm:$0xff]
  %v361 = vld [vmem:[%s6 + $0x70] sm:$0xff]
  %v362 = vld [vmem:[%s6 + $0x78] sm:$0xff]
  %v363 = vld [vmem:[%s6 + $0x80] sm:$0xff]
  %v364 = vld [vmem:[%s6 + $0x88] sm:$0xff]
  %v365 = vld [vmem:[%s6 + $0x90] sm:$0xff]
  %v366 = vld [vmem:[%s6 + $0x98] sm:$0xff]
  %v367 = vld [vmem:[%s6 + $0xa0] sm:$0xff]
  %v368 = vld [vmem:[%s6 + $0xa8] sm:$0xff]
  %v369 = vld [vmem:[%s6 + $0xb0] sm:$0xff]
  %v370 = vld [vmem:[%s6 + $0xb8] sm:$0xff]
  %v371 = vld [vmem:[%s6 + $0xc0] sm:$0xff]
  %v372 = vld [vmem:[%s6 + $0xc8] sm:$0xff]
  %v373 = vld [vmem:[%s6 + $0xd0] sm:$0xff]
  %v374 = vld [vmem:[%s6 + $0xd8] sm:$0xff]
  %v375 = vld [vmem:[%s6 + $0xe0] sm:$0xff]
  %v376 = vld [vmem:[%s6 + $0xe8] sm:$0xff]
  %v377 = vld [vmem:[%s6 + $0xf0] sm:$0xff]
  %v378 = vld [vmem:[%s6 + $0xf8] sm:$0xff]
  %v379 = vld [vmem:[%s6 + $0x100] sm:$0xff]
  %v380 = vld [vmem:[%s6 + $0x108] sm:$0xff]
  %v381 = vld [vmem:[%s6 + $0x110] sm:$0xff]
  %v382 = vld [vmem:[%s6 + $0x118] sm:$0xff]
  %v383 = vld [vmem:[%s6 + $0x120] sm:$0xff]
  %v384 = vld [vmem:[%s6 + $0x128] sm:$0xff]
  %v385 = vld [vmem:[%s6 + $0x130] sm:$0xff]
  %v386 = vld [vmem:[%s6 + $0x138] sm:$0xff]
  %v387 = vld [vmem:[%s6 + $0x140] sm:$0xff]
  %v388 = vld [vmem:[%s6 + $0x148] sm:$0xff]
  %v389 = vld [vmem:[%s6 + $0x150] sm:$0xff]
  %v390 = vld [vmem:[%s6 + $0x158] sm:$0xff]
  %v391 = vld [vmem:[%s6 + $0x160] sm:$0xff]
  %v392 = vld [vmem:[%s6 + $0x168] sm:$0xff]
  %v393 = vld [vmem:[%s6 + $0x170] sm:$0xff]
  %v394 = vld [vmem:[%s6 + $0x178] sm:$0xff]
  %v395 = vld [vmem:[%s6 + $0x180] sm:$0xff]
  %v396 = vld [vmem:[%s6 + $0x188] sm:$0xff]
  %v397 = vld [vmem:[%s6 + $0x190] sm:$0xff]
  %v398 = vld [vmem:[%s6 + $0x198] sm:$0xff]
  %v399 = vld [vmem:[%s6 + $0x1a0] sm:$0xff]
  %v400 = vld [vmem:[%s6 + $0x1a8] sm:$0xff]
  %v401 = vld [vmem:[%s6 + $0x1b0] sm:$0xff]
  %v402 = vld [vmem:[%s6 + $0x1b8] sm:$0xff]
  %v403 = vld [vmem:[%s6 + $0x1c0] sm:$0xff]
  %v404 = vld [vmem:[%s6 + $0x1c8] sm:$0xff]
  %v405 = vld [vmem:[%s6 + $0x1d0] sm:$0xff]
  %v406 = vld [vmem:[%s6 + $0x1d8] sm:$0xff]
  %v407 = vld [vmem:[%s6 + $0x1e0] sm:$0xff]
  %v408 = vld [vmem:[%s6 + $0x1e8] sm:$0xff]
  %v409 = vld [vmem:[%s6 + $0x1f0] sm:$0xff]
  %v410 = vld [vmem:[%s6 + $0x1f8] sm:$0xff]
  %v411 = vld [vmem:[%s6 + $0x200] sm:$0xff]
  %v412 = vld [vmem:[%s6 + $0x208] sm:$0xff]
  %v413 = vld [vmem:[%s6 + $0x210] sm:$0xff]
  %v414 = vld [vmem:[%s6 + $0x218] sm:$0xff]
  %v415 = vld [vmem:[%s6 + $0x220] sm:$0xff]
  %v416 = vld [vmem:[%s6 + $0x228] sm:$0xff]
  %v417 = vld [vmem:[%s6 + $0x230] sm:$0xff]
  %v418 = vld [vmem:[%s6 + $0x238] sm:$0xff]
  %v419 = vld [vmem:[%s6 + $0x240] sm:$0xff]
  %v420 = vld [vmem:[%s6 + $0x248] sm:$0xff]
  %v421 = vld [vmem:[%s6 + $0x250] sm:$0xff]
  %v422 = vld [vmem:[%s6 + $0x258] sm:$0xff]
  %v423 = vld [vmem:[%s6 + $0x260] sm:$0xff]
  %v424 = vld [vmem:[%s6 + $0x268] sm:$0xff]
  %v425 = vld [vmem:[%s6 + $0x270] sm:$0xff]
  %v426 = vld [vmem:[%s6 + $0x278] sm:$0xff]
  %v427 = vld [vmem:[%s6 + $0x280] sm:$0xff]
  %v428 = vld [vmem:[%s6 + $0x288] sm:$0xff]
  %v429 = vld [vmem:[%s6 + $0x290] sm:$0xff]
  %v430 = vld [vmem:[%s6 + $0x298] sm:$0xff]
  %v431 = vld [vmem:[%s6 + $0x2a0] sm:$0xff]
  %v432 = vld [vmem:[%s6 + $0x2a8] sm:$0xff]
  %v433 = vld [vmem:[%s6 + $0x2b0] sm:$0xff]
  %v434 = vld [vmem:[%s6 + $0x2b8] sm:$0xff]
  %v435 = vld [vmem:[%s6 + $0x2c0] sm:$0xff]
  %v436 = vld [vmem:[%s6 + $0x2c8] sm:$0xff]
  %v437 = vld [vmem:[%s6 + $0x2d0] sm:$0xff]
  %v438 = vld [vmem:[%s6 + $0x2d8] sm:$0xff]
  %v439 = vld [vmem:[%s6 + $0x2e0] sm:$0xff]
  %v440 = vld [vmem:[%s6 + $0x2e8] sm:$0xff]
  %v441 = vld [vmem:[%s6 + $0x2f0] sm:$0xff]
  %v442 = vld [vmem:[%s6 + $0x2f8] sm:$0xff]
  %v443 = vld [vmem:[%s7] sm:$0x3f]
  %v445 = vperm.slane %v443, 0
  %v446 = vperm.slane %v443, 1
  %v447 = vperm.slane %v443, 2
  %v448 = vperm.slane %v443, 3
  %v449 = vperm.slane %v443, 4
  %v450 = vperm.slane %v443, 5
  %v553 = vunpack.c.l.b16 %v347
  %v554 = vunpack.c.h.b16 %v347
  %v555 = vunpack.c.l.b16 %v348
  %v556 = vunpack.c.h.b16 %v348
  %v557 = vunpack.c.l.b16 %v349
  %v558 = vunpack.c.h.b16 %v349
  %v559 = vunpack.c.l.b16 %v350
  %v560 = vunpack.c.h.b16 %v350
  %v561 = vunpack.c.l.b16 %v351
  %v562 = vunpack.c.h.b16 %v351
  %v563 = vunpack.c.l.b16 %v352
  %v564 = vunpack.c.h.b16 %v352
  %v565 = vunpack.c.l.b16 %v353
  %v566 = vunpack.c.h.b16 %v353
  %v567 = vunpack.c.l.b16 %v354
  %v568 = vunpack.c.h.b16 %v354
  %v569 = vunpack.c.l.b16 %v355
  %v570 = vunpack.c.h.b16 %v355
  %v571 = vunpack.c.l.b16 %v356
  %v572 = vunpack.c.h.b16 %v356
  %v573 = vunpack.c.l.b16 %v357
  %v574 = vunpack.c.h.b16 %v357
  %v575 = vunpack.c.l.b16 %v358
  %v576 = vunpack.c.h.b16 %v358
  %v577 = vunpack.c.l.b16 %v359
  %v578 = vunpack.c.h.b16 %v359
  %v579 = vunpack.c.l.b16 %v360
  %v580 = vunpack.c.h.b16 %v360
  %v581 = vunpack.c.l.b16 %v361
  %v582 = vunpack.c.h.b16 %v361
  %v583 = vunpack.c.l.b16 %v362
  %v584 = vunpack.c.h.b16 %v362
  %v585 = vunpack.c.l.b16 %v363
  %v586 = vunpack.c.h.b16 %v363
  %v587 = vunpack.c.l.b16 %v364
  %v588 = vunpack.c.h.b16 %v364
  %v589 = vunpack.c.l.b16 %v365
  %v590 = vunpack.c.h.b16 %v365
  %v591 = vunpack.c.l.b16 %v366
  %v592 = vunpack.c.h.b16 %v366
  %v593 = vunpack.c.l.b16 %v367
  %v594 = vunpack.c.h.b16 %v367
  %v595 = vunpack.c.l.b16 %v368
  %v596 = vunpack.c.h.b16 %v368
  %v597 = vunpack.c.l.b16 %v369
  %v598 = vunpack.c.h.b16 %v369
  %v599 = vunpack.c.l.b16 %v370
  %v600 = vunpack.c.h.b16 %v370
  %v601 = vunpack.c.l.b16 %v371
  %v602 = vunpack.c.h.b16 %v371
  %v603 = vunpack.c.l.b16 %v372
  %v604 = vunpack.c.h.b16 %v372
  %v605 = vunpack.c.l.b16 %v373
  %v606 = vunpack.c.h.b16 %v373
  %v607 = vunpack.c.l.b16 %v374
  %v608 = vunpack.c.h.b16 %v374
  %v609 = vunpack.c.l.b16 %v375
  %v610 = vunpack.c.h.b16 %v375
  %v611 = vunpack.c.l.b16 %v376
  %v612 = vunpack.c.h.b16 %v376
  %v613 = vunpack.c.l.b16 %v377
  %v614 = vunpack.c.h.b16 %v377
  %v615 = vunpack.c.l.b16 %v378
  %v616 = vunpack.c.h.b16 %v378
  %v617 = vunpack.c.l.b16 %v379
  %v618 = vunpack.c.h.b16 %v379
  %v619 = vunpack.c.l.b16 %v380
  %v620 = vunpack.c.h.b16 %v380
  %v621 = vunpack.c.l.b16 %v381
  %v622 = vunpack.c.h.b16 %v381
  %v623 = vunpack.c.l.b16 %v382
  %v624 = vunpack.c.h.b16 %v382
  %v625 = vunpack.c.l.b16 %v383
  %v626 = vunpack.c.h.b16 %v383
  %v627 = vunpack.c.l.b16 %v384
  %v628 = vunpack.c.h.b16 %v384
  %v629 = vunpack.c.l.b16 %v385
  %v630 = vunpack.c.h.b16 %v385
  %v631 = vunpack.c.l.b16 %v386
  %v632 = vunpack.c.h.b16 %v386
  %v633 = vunpack.c.l.b16 %v387
  %v634 = vunpack.c.h.b16 %v387
  %v635 = vunpack.c.l.b16 %v388
  %v636 = vunpack.c.h.b16 %v388
  %v637 = vunpack.c.l.b16 %v389
  %v638 = vunpack.c.h.b16 %v389
  %v639 = vunpack.c.l.b16 %v390
  %v640 = vunpack.c.h.b16 %v390
  %v641 = vunpack.c.l.b16 %v391
  %v642 = vunpack.c.h.b16 %v391
  %v643 = vunpack.c.l.b16 %v392
  %v644 = vunpack.c.h.b16 %v392
  %v645 = vunpack.c.l.b16 %v393
  %v646 = vunpack.c.h.b16 %v393
  %v647 = vunpack.c.l.b16 %v394
  %v648 = vunpack.c.h.b16 %v394
  %v649 = vunpack.c.l.b16 %v395
  %v650 = vunpack.c.h.b16 %v395
  %v651 = vunpack.c.l.b16 %v396
  %v652 = vunpack.c.h.b16 %v396
  %v653 = vunpack.c.l.b16 %v397
  %v654 = vunpack.c.h.b16 %v397
  %v655 = vunpack.c.l.b16 %v398
  %v656 = vunpack.c.h.b16 %v398
  %v657 = vunpack.c.l.b16 %v399
  %v658 = vunpack.c.h.b16 %v399
  %v659 = vunpack.c.l.b16 %v400
  %v660 = vunpack.c.h.b16 %v400
  %v661 = vunpack.c.l.b16 %v401
  %v662 = vunpack.c.h.b16 %v401
  %v663 = vunpack.c.l.b16 %v402
  %v664 = vunpack.c.h.b16 %v402
  %v665 = vunpack.c.l.b16 %v403
  %v666 = vunpack.c.h.b16 %v403
  %v667 = vunpack.c.l.b16 %v404
  %v668 = vunpack.c.h.b16 %v404
  %v669 = vunpack.c.l.b16 %v405
  %v670 = vunpack.c.h.b16 %v405
  %v671 = vunpack.c.l.b16 %v406
  %v672 = vunpack.c.h.b16 %v406
  %v673 = vunpack.c.l.b16 %v407
  %v674 = vunpack.c.h.b16 %v407
  %v675 = vunpack.c.l.b16 %v408
  %v676 = vunpack.c.h.b16 %v408
  %v677 = vunpack.c.l.b16 %v409
  %v678 = vunpack.c.h.b16 %v409
  %v679 = vunpack.c.l.b16 %v410
  %v680 = vunpack.c.h.b16 %v410
  %v681 = vunpack.c.l.b16 %v411
  %v682 = vunpack.c.h.b16 %v411
  %v683 = vunpack.c.l.b16 %v412
  %v684 = vunpack.c.h.b16 %v412
  %v685 = vunpack.c.l.b16 %v413
  %v686 = vunpack.c.h.b16 %v413
  %v687 = vunpack.c.l.b16 %v414
  %v688 = vunpack.c.h.b16 %v414
  %v689 = vunpack.c.l.b16 %v415
  %v690 = vunpack.c.h.b16 %v415
  %v691 = vunpack.c.l.b16 %v416
  %v692 = vunpack.c.h.b16 %v416
  %v693 = vunpack.c.l.b16 %v417
  %v694 = vunpack.c.h.b16 %v417
  %v695 = vunpack.c.l.b16 %v418
  %v696 = vunpack.c.h.b16 %v418
  %v697 = vunpack.c.l.b16 %v419
  %v698 = vunpack.c.h.b16 %v419
  %v699 = vunpack.c.l.b16 %v420
  %v700 = vunpack.c.h.b16 %v420
  %v701 = vunpack.c.l.b16 %v421
  %v702 = vunpack.c.h.b16 %v421
  %v703 = vunpack.c.l.b16 %v422
  %v704 = vunpack.c.h.b16 %v422
  %v705 = vunpack.c.l.b16 %v423
  %v706 = vunpack.c.h.b16 %v423
  %v707 = vunpack.c.l.b16 %v424
  %v708 = vunpack.c.h.b16 %v424
  %v709 = vunpack.c.l.b16 %v425
  %v710 = vunpack.c.h.b16 %v425
  %v711 = vunpack.c.l.b16 %v426
  %v712 = vunpack.c.h.b16 %v426
  %v713 = vunpack.c.l.b16 %v427
  %v714 = vunpack.c.h.b16 %v427
  %v715 = vunpack.c.l.b16 %v428
  %v716 = vunpack.c.h.b16 %v428
  %v717 = vunpack.c.l.b16 %v429
  %v718 = vunpack.c.h.b16 %v429
  %v719 = vunpack.c.l.b16 %v430
  %v720 = vunpack.c.h.b16 %v430
  %v721 = vunpack.c.l.b16 %v431
  %v722 = vunpack.c.h.b16 %v431
  %v723 = vunpack.c.l.b16 %v432
  %v724 = vunpack.c.h.b16 %v432
  %v725 = vunpack.c.l.b16 %v433
  %v726 = vunpack.c.h.b16 %v433
  %v727 = vunpack.c.l.b16 %v434
  %v728 = vunpack.c.h.b16 %v434
  %v729 = vunpack.c.l.b16 %v435
  %v730 = vunpack.c.h.b16 %v435
  %v731 = vunpack.c.l.b16 %v436
  %v732 = vunpack.c.h.b16 %v436
  %v733 = vunpack.c.l.b16 %v437
  %v734 = vunpack.c.h.b16 %v437
  %v735 = vunpack.c.l.b16 %v438
  %v736 = vunpack.c.h.b16 %v438
  %v737 = vunpack.c.l.b16 %v439
  %v738 = vunpack.c.h.b16 %v439
  %v739 = vunpack.c.l.b16 %v440
  %v740 = vunpack.c.h.b16 %v440
  %v741 = vunpack.c.l.b16 %v441
  %v742 = vunpack.c.h.b16 %v441
  %v743 = vunpack.c.l.b16 %v442
  %v744 = vunpack.c.h.b16 %v442
  %v745 = vpack.c.b16 %v559, %v553
  %v746 = vpack.c.b16 %v560, %v554
  %v747 = vpack.c.b16 %v561, %v555
  %v748 = vpack.c.b16 %v562, %v556
  %v749 = vpack.c.b16 %v563, %v557
  %v750 = vpack.c.b16 %v564, %v558
  %v751 = vpack.c.b16 %v571, %v565
  %v752 = vpack.c.b16 %v572, %v566
  %v753 = vpack.c.b16 %v573, %v567
  %v754 = vpack.c.b16 %v574, %v568
  %v755 = vpack.c.b16 %v575, %v569
  %v756 = vpack.c.b16 %v576, %v570
  %v757 = vpack.c.b16 %v583, %v577
  %v758 = vpack.c.b16 %v584, %v578
  %v759 = vpack.c.b16 %v585, %v579
  %v760 = vpack.c.b16 %v586, %v580
  %v761 = vpack.c.b16 %v587, %v581
  %v762 = vpack.c.b16 %v588, %v582
  %v763 = vpack.c.b16 %v595, %v589
  %v764 = vpack.c.b16 %v596, %v590
  %v765 = vpack.c.b16 %v597, %v591
  %v766 = vpack.c.b16 %v598, %v592
  %v767 = vpack.c.b16 %v599, %v593
  %v768 = vpack.c.b16 %v600, %v594
  %v769 = vpack.c.b16 %v607, %v601
  %v770 = vpack.c.b16 %v608, %v602
  %v771 = vpack.c.b16 %v609, %v603
  %v772 = vpack.c.b16 %v610, %v604
  %v773 = vpack.c.b16 %v611, %v605
  %v774 = vpack.c.b16 %v612, %v606
  %v775 = vpack.c.b16 %v619, %v613
  %v776 = vpack.c.b16 %v620, %v614
  %v777 = vpack.c.b16 %v621, %v615
  %v778 = vpack.c.b16 %v622, %v616
  %v779 = vpack.c.b16 %v623, %v617
  %v780 = vpack.c.b16 %v624, %v618
  %v781 = vpack.c.b16 %v631, %v625
  %v782 = vpack.c.b16 %v632, %v626
  %v783 = vpack.c.b16 %v633, %v627
  %v784 = vpack.c.b16 %v634, %v628
  %v785 = vpack.c.b16 %v635, %v629
  %v786 = vpack.c.b16 %v636, %v630
  %v787 = vpack.c.b16 %v643, %v637
  %v788 = vpack.c.b16 %v644, %v638
  %v789 = vpack.c.b16 %v645, %v639
  %v790 = vpack.c.b16 %v646, %v640
  %v791 = vpack.c.b16 %v647, %v641
  %v792 = vpack.c.b16 %v648, %v642
  %v793 = vpack.c.b16 %v655, %v649
  %v794 = vpack.c.b16 %v656, %v650
  %v795 = vpack.c.b16 %v657, %v651
  %v796 = vpack.c.b16 %v658, %v652
  %v797 = vpack.c.b16 %v659, %v653
  %v798 = vpack.c.b16 %v660, %v654
  %v799 = vpack.c.b16 %v667, %v661
  %v800 = vpack.c.b16 %v668, %v662
  %v801 = vpack.c.b16 %v669, %v663
  %v802 = vpack.c.b16 %v670, %v664
  %v803 = vpack.c.b16 %v671, %v665
  %v804 = vpack.c.b16 %v672, %v666
  %v805 = vpack.c.b16 %v679, %v673
  %v806 = vpack.c.b16 %v680, %v674
  %v807 = vpack.c.b16 %v681, %v675
  %v808 = vpack.c.b16 %v682, %v676
  %v809 = vpack.c.b16 %v683, %v677
  %v810 = vpack.c.b16 %v684, %v678
  %v811 = vpack.c.b16 %v691, %v685
  %v812 = vpack.c.b16 %v692, %v686
  %v813 = vpack.c.b16 %v693, %v687
  %v814 = vpack.c.b16 %v694, %v688
  %v815 = vpack.c.b16 %v695, %v689
  %v816 = vpack.c.b16 %v696, %v690
  %v817 = vpack.c.b16 %v703, %v697
  %v818 = vpack.c.b16 %v704, %v698
  %v819 = vpack.c.b16 %v705, %v699
  %v820 = vpack.c.b16 %v706, %v700
  %v821 = vpack.c.b16 %v707, %v701
  %v822 = vpack.c.b16 %v708, %v702
  %v823 = vpack.c.b16 %v715, %v709
  %v824 = vpack.c.b16 %v716, %v710
  %v825 = vpack.c.b16 %v717, %v711
  %v826 = vpack.c.b16 %v718, %v712
  %v827 = vpack.c.b16 %v719, %v713
  %v828 = vpack.c.b16 %v720, %v714
  %v829 = vpack.c.b16 %v727, %v721
  %v830 = vpack.c.b16 %v728, %v722
  %v831 = vpack.c.b16 %v729, %v723
  %v832 = vpack.c.b16 %v730, %v724
  %v833 = vpack.c.b16 %v731, %v725
  %v834 = vpack.c.b16 %v732, %v726
  %v835 = vpack.c.b16 %v739, %v733
  %v836 = vpack.c.b16 %v740, %v734
  %v837 = vpack.c.b16 %v741, %v735
  %v838 = vpack.c.b16 %v742, %v736
  %v839 = vpack.c.b16 %v743, %v737
  %v840 = vpack.c.b16 %v744, %v738
  %937 = vmatpush.bf16.msra.mxu0 %v787
  %938 = vmatpush.bf16.msra.mxu0 %v781
  %939 = vmatpush.bf16.msra.mxu0 %v775
  %940 = vmatpush.bf16.msra.mxu0 %v769
  %941 = vmatpush.bf16.msra.mxu0 %v763
  %942 = vmatpush.bf16.msra.mxu0 %v757
  %943 = vmatpush.bf16.msra.mxu0 %v751
  %944 = vmatpush.bf16.msra.mxu0 %v745
  %945 = vmatmul.bf16.gmra.mxu0 %v341
  %v946 = vpop.f32.mrf.mxu0
  %v947 = vadd.f32 %v445, %v946
  %v948 = vpop.f32.mrf.mxu0
  %v949 = vadd.f32 %v445, %v948
  %950 = vmatmul.bf16.gmra.mxu0 %v343
  %v951 = vpop.f32.mrf.mxu0
  %v952 = vadd.f32 %v445, %v951
  %v953 = vpop.f32.mrf.mxu0
  %v954 = vadd.f32 %v445, %v953
  %955 = vmatmul.bf16.gmra.mxu0 %v345
  %v956 = vpop.f32.mrf.mxu0
  %v957 = vadd.f32 %v445, %v956
  %v958 = vpop.f32.mrf.mxu0
  %959 = vdwg.mxu0
  %960 = vmatpush.bf16.msra.mxu0 %v835
  %961 = vmatpush.bf16.msra.mxu0 %v829
  %962 = vmatpush.bf16.msra.mxu0 %v823
  %963 = vmatpush.bf16.msra.mxu0 %v817
  %964 = vmatpush.bf16.msra.mxu0 %v811
  %965 = vmatpush.bf16.msra.mxu0 %v805
  %966 = vmatpush.bf16.msra.mxu0 %v799
  %967 = vmatpush.bf16.msra.mxu0 %v793
  %968 = vmatmul.bf16.gmra.mxu0 %v342
  %v969 = vpop.f32.mrf.mxu0
  %v970 = vadd.f32 %v947, %v969
  %v971 = vpop.f32.mrf.mxu0
  %v972 = vadd.f32 %v949, %v971
  %973 = vmatmul.bf16.gmra.mxu0 %v344
  %v974 = vpop.f32.mrf.mxu0
  %v975 = vadd.f32 %v952, %v974
  %v976 = vpop.f32.mrf.mxu0
  %v977 = vadd.f32 %v954, %v976
  %978 = vmatmul.bf16.gmra.mxu0 %v346
  %v979 = vpop.f32.mrf.mxu0
  %v980 = vadd.f32 %v957, %v979
  %v981 = vpop.f32.mrf.mxu0
  %982 = vdwg.mxu0
  %983 = vmatpush.bf16.msra.mxu0 %v788
  %984 = vmatpush.bf16.msra.mxu0 %v782
  %985 = vmatpush.bf16.msra.mxu0 %v776
  %986 = vmatpush.bf16.msra.mxu0 %v770
  %987 = vmatpush.bf16.msra.mxu0 %v764
  %988 = vmatpush.bf16.msra.mxu0 %v758
  %989 = vmatpush.bf16.msra.mxu0 %v752
  %990 = vmatpush.bf16.msra.mxu0 %v746
  %991 = vmatmul.bf16.gmra.mxu0 %v341
  %v992 = vpop.f32.mrf.mxu0
  %v993 = vadd.f32 %v446, %v992
  %v994 = vpop.f32.mrf.mxu0
  %v995 = vadd.f32 %v446, %v994
  %996 = vmatmul.bf16.gmra.mxu0 %v343
  %v997 = vpop.f32.mrf.mxu0
  %v998 = vadd.f32 %v446, %v997
  %v999 = vpop.f32.mrf.mxu0
  %v1000 = vadd.f32 %v446, %v999
  %1001 = vmatmul.bf16.gmra.mxu0 %v345
  %v1002 = vpop.f32.mrf.mxu0
  %v1003 = vadd.f32 %v446, %v1002
  %v1004 = vpop.f32.mrf.mxu0
  %1005 = vdwg.mxu0
  %1006 = vmatpush.bf16.msra.mxu0 %v836
  %1007 = vmatpush.bf16.msra.mxu0 %v830
  %1008 = vmatpush.bf16.msra.mxu0 %v824
  %1009 = vmatpush.bf16.msra.mxu0 %v818
  %1010 = vmatpush.bf16.msra.mxu0 %v812
  %1011 = vmatpush.bf16.msra.mxu0 %v806
  %1012 = vmatpush.bf16.msra.mxu0 %v800
  %1013 = vmatpush.bf16.msra.mxu0 %v794
  %1014 = vmatmul.bf16.gmra.mxu0 %v342
  %v1015 = vpop.f32.mrf.mxu0
  %v1016 = vadd.f32 %v993, %v1015
  %v1017 = vpop.f32.mrf.mxu0
  %v1018 = vadd.f32 %v995, %v1017
  %1019 = vmatmul.bf16.gmra.mxu0 %v344
  %v1020 = vpop.f32.mrf.mxu0
  %v1021 = vadd.f32 %v998, %v1020
  %v1022 = vpop.f32.mrf.mxu0
  %v1023 = vadd.f32 %v1000, %v1022
  %1024 = vmatmul.bf16.gmra.mxu0 %v346
  %v1025 = vpop.f32.mrf.mxu0
  %v1026 = vadd.f32 %v1003, %v1025
  %v1027 = vpop.f32.mrf.mxu0
  %1028 = vdwg.mxu0
  %1029 = vmatpush.bf16.msra.mxu0 %v789
  %1030 = vmatpush.bf16.msra.mxu0 %v783
  %1031 = vmatpush.bf16.msra.mxu0 %v777
  %1032 = vmatpush.bf16.msra.mxu0 %v771
  %1033 = vmatpush.bf16.msra.mxu0 %v765
  %1034 = vmatpush.bf16.msra.mxu0 %v759
  %1035 = vmatpush.bf16.msra.mxu0 %v753
  %1036 = vmatpush.bf16.msra.mxu0 %v747
  %1037 = vmatmul.bf16.gmra.mxu0 %v341
  %v1038 = vpop.f32.mrf.mxu0
  %v1039 = vadd.f32 %v447, %v1038
  %v1040 = vpop.f32.mrf.mxu0
  %v1041 = vadd.f32 %v447, %v1040
  %1042 = vmatmul.bf16.gmra.mxu0 %v343
  %v1043 = vpop.f32.mrf.mxu0
  %v1044 = vadd.f32 %v447, %v1043
  %v1045 = vpop.f32.mrf.mxu0
  %v1046 = vadd.f32 %v447, %v1045
  %1047 = vmatmul.bf16.gmra.mxu0 %v345
  %v1048 = vpop.f32.mrf.mxu0
  %v1049 = vadd.f32 %v447, %v1048
  %v1050 = vpop.f32.mrf.mxu0
  %1051 = vdwg.mxu0
  %1052 = vmatpush.bf16.msra.mxu0 %v837
  %1053 = vmatpush.bf16.msra.mxu0 %v831
  %1054 = vmatpush.bf16.msra.mxu0 %v825
  %1055 = vmatpush.bf16.msra.mxu0 %v819
  %1056 = vmatpush.bf16.msra.mxu0 %v813
  %1057 = vmatpush.bf16.msra.mxu0 %v807
  %1058 = vmatpush.bf16.msra.mxu0 %v801
  %1059 = vmatpush.bf16.msra.mxu0 %v795
  %1060 = vmatmul.bf16.gmra.mxu0 %v342
  %v1061 = vpop.f32.mrf.mxu0
  %v1062 = vadd.f32 %v1039, %v1061
  %v1063 = vpop.f32.mrf.mxu0
  %v1064 = vadd.f32 %v1041, %v1063
  %1065 = vmatmul.bf16.gmra.mxu0 %v344
  %v1066 = vpop.f32.mrf.mxu0
  %v1067 = vadd.f32 %v1044, %v1066
  %v1068 = vpop.f32.mrf.mxu0
  %v1069 = vadd.f32 %v1046, %v1068
  %1070 = vmatmul.bf16.gmra.mxu0 %v346
  %v1071 = vpop.f32.mrf.mxu0
  %v1072 = vadd.f32 %v1049, %v1071
  %v1073 = vpop.f32.mrf.mxu0
  %1074 = vdwg.mxu0
  %1075 = vmatpush.bf16.msra.mxu0 %v790
  %1076 = vmatpush.bf16.msra.mxu0 %v784
  %1077 = vmatpush.bf16.msra.mxu0 %v778
  %1078 = vmatpush.bf16.msra.mxu0 %v772
  %1079 = vmatpush.bf16.msra.mxu0 %v766
  %1080 = vmatpush.bf16.msra.mxu0 %v760
  %1081 = vmatpush.bf16.msra.mxu0 %v754
  %1082 = vmatpush.bf16.msra.mxu0 %v748
  %1083 = vmatmul.bf16.gmra.mxu0 %v341
  %v1084 = vpop.f32.mrf.mxu0
  %v1085 = vadd.f32 %v448, %v1084
  %v1086 = vpop.f32.mrf.mxu0
  %v1087 = vadd.f32 %v448, %v1086
  %1088 = vmatmul.bf16.gmra.mxu0 %v343
  %v1089 = vpop.f32.mrf.mxu0
  %v1090 = vadd.f32 %v448, %v1089
  %v1091 = vpop.f32.mrf.mxu0
  %v1092 = vadd.f32 %v448, %v1091
  %1093 = vmatmul.bf16.gmra.mxu0 %v345
  %v1094 = vpop.f32.mrf.mxu0
  %v1095 = vadd.f32 %v448, %v1094
  %v1096 = vpop.f32.mrf.mxu0
  %1097 = vdwg.mxu0
  %1098 = vmatpush.bf16.msra.mxu0 %v838
  %1099 = vmatpush.bf16.msra.mxu0 %v832
  %1100 = vmatpush.bf16.msra.mxu0 %v826
  %1101 = vmatpush.bf16.msra.mxu0 %v820
  %1102 = vmatpush.bf16.msra.mxu0 %v814
  %1103 = vmatpush.bf16.msra.mxu0 %v808
  %1104 = vmatpush.bf16.msra.mxu0 %v802
  %1105 = vmatpush.bf16.msra.mxu0 %v796
  %1106 = vmatmul.bf16.gmra.mxu0 %v342
  %v1107 = vpop.f32.mrf.mxu0
  %v1108 = vadd.f32 %v1085, %v1107
  %v1109 = vpop.f32.mrf.mxu0
  %v1110 = vadd.f32 %v1087, %v1109
  %1111 = vmatmul.bf16.gmra.mxu0 %v344
  %v1112 = vpop.f32.mrf.mxu0
  %v1113 = vadd.f32 %v1090, %v1112
  %v1114 = vpop.f32.mrf.mxu0
  %v1115 = vadd.f32 %v1092, %v1114
  %1116 = vmatmul.bf16.gmra.mxu0 %v346
  %v1117 = vpop.f32.mrf.mxu0
  %v1118 = vadd.f32 %v1095, %v1117
  %v1119 = vpop.f32.mrf.mxu0
  %1120 = vdwg.mxu0
  %1121 = vmatpush.bf16.msra.mxu0 %v791
  %1122 = vmatpush.bf16.msra.mxu0 %v785
  %1123 = vmatpush.bf16.msra.mxu0 %v779
  %1124 = vmatpush.bf16.msra.mxu0 %v773
  %1125 = vmatpush.bf16.msra.mxu0 %v767
  %1126 = vmatpush.bf16.msra.mxu0 %v761
  %1127 = vmatpush.bf16.msra.mxu0 %v755
  %1128 = vmatpush.bf16.msra.mxu0 %v749
  %1129 = vmatmul.bf16.gmra.mxu0 %v341
  %v1130 = vpop.f32.mrf.mxu0
  %v1131 = vadd.f32 %v449, %v1130
  %v1132 = vpop.f32.mrf.mxu0
  %v1133 = vadd.f32 %v449, %v1132
  %1134 = vmatmul.bf16.gmra.mxu0 %v343
  %v1135 = vpop.f32.mrf.mxu0
  %v1136 = vadd.f32 %v449, %v1135
  %v1137 = vpop.f32.mrf.mxu0
  %v1138 = vadd.f32 %v449, %v1137
  %1139 = vmatmul.bf16.gmra.mxu0 %v345
  %v1140 = vpop.f32.mrf.mxu0
  %v1141 = vadd.f32 %v449, %v1140
  %v1142 = vpop.f32.mrf.mxu0
  %1143 = vdwg.mxu0
  %1144 = vmatpush.bf16.msra.mxu0 %v839
  %1145 = vmatpush.bf16.msra.mxu0 %v833
  %1146 = vmatpush.bf16.msra.mxu0 %v827
  %1147 = vmatpush.bf16.msra.mxu0 %v821
  %1148 = vmatpush.bf16.msra.mxu0 %v815
  %1149 = vmatpush.bf16.msra.mxu0 %v809
  %1150 = vmatpush.bf16.msra.mxu0 %v803
  %1151 = vmatpush.bf16.msra.mxu0 %v797
  %1152 = vmatmul.bf16.gmra.mxu0 %v342
  %v1153 = vpop.f32.mrf.mxu0
  %v1154 = vadd.f32 %v1131, %v1153
  %v1155 = vpop.f32.mrf.mxu0
  %v1156 = vadd.f32 %v1133, %v1155
  %1157 = vmatmul.bf16.gmra.mxu0 %v344
  %v1158 = vpop.f32.mrf.mxu0
  %v1159 = vadd.f32 %v1136, %v1158
  %v1160 = vpop.f32.mrf.mxu0
  %v1161 = vadd.f32 %v1138, %v1160
  %1162 = vmatmul.bf16.gmra.mxu0 %v346
  %v1163 = vpop.f32.mrf.mxu0
  %v1164 = vadd.f32 %v1141, %v1163
  %v1165 = vpop.f32.mrf.mxu0
  %1166 = vdwg.mxu0
  %1167 = vmatpush.bf16.msra.mxu0 %v792
  %1168 = vmatpush.bf16.msra.mxu0 %v786
  %1169 = vmatpush.bf16.msra.mxu0 %v780
  %1170 = vmatpush.bf16.msra.mxu0 %v774
  %1171 = vmatpush.bf16.msra.mxu0 %v768
  %1172 = vmatpush.bf16.msra.mxu0 %v762
  %1173 = vmatpush.bf16.msra.mxu0 %v756
  %1174 = vmatpush.bf16.msra.mxu0 %v750
  %1175 = vmatmul.bf16.gmra.mxu0 %v341
  %v1176 = vpop.f32.mrf.mxu0
  %v1177 = vadd.f32 %v450, %v1176
  %v1178 = vpop.f32.mrf.mxu0
  %v1179 = vadd.f32 %v450, %v1178
  %1180 = vmatmul.bf16.gmra.mxu0 %v343
  %v1181 = vpop.f32.mrf.mxu0
  %v1182 = vadd.f32 %v450, %v1181
  %v1183 = vpop.f32.mrf.mxu0
  %v1184 = vadd.f32 %v450, %v1183
  %1185 = vmatmul.bf16.gmra.mxu0 %v345
  %v1186 = vpop.f32.mrf.mxu0
  %v1187 = vadd.f32 %v450, %v1186
  %v1188 = vpop.f32.mrf.mxu0
  %1189 = vdwg.mxu0
  %1190 = vmatpush.bf16.msra.mxu0 %v840
  %1191 = vmatpush.bf16.msra.mxu0 %v834
  %1192 = vmatpush.bf16.msra.mxu0 %v828
  %1193 = vmatpush.bf16.msra.mxu0 %v822
  %1194 = vmatpush.bf16.msra.mxu0 %v816
  %1195 = vmatpush.bf16.msra.mxu0 %v810
  %1196 = vmatpush.bf16.msra.mxu0 %v804
  %1197 = vmatpush.bf16.msra.mxu0 %v798
  %1198 = vmatmul.bf16.gmra.mxu0 %v342
  %v1199 = vpop.f32.mrf.mxu0
  %v1200 = vadd.f32 %v1177, %v1199
  %v1201 = vpop.f32.mrf.mxu0
  %v1202 = vadd.f32 %v1179, %v1201
  %1203 = vmatmul.bf16.gmra.mxu0 %v344
  %v1204 = vpop.f32.mrf.mxu0
  %v1205 = vadd.f32 %v1182, %v1204
  %v1206 = vpop.f32.mrf.mxu0
  %v1207 = vadd.f32 %v1184, %v1206
  %1208 = vmatmul.bf16.gmra.mxu0 %v346
  %v1209 = vpop.f32.mrf.mxu0
  %v1210 = vadd.f32 %v1187, %v1209
  %v1211 = vpop.f32.mrf.mxu0
  %1212 = vdwg.mxu0
  %v1213 = vld [vmem:[%s9] sm:$0x3]
  %1214 = vmatpush.xpose.msra.mxu0 0.0
  %1215 = vmatpush.xpose.msra.mxu0 0.0
  %1216 = vmatpush.xpose.msra.mxu0 0.0
  %1217 = vmatpush.xpose.msra.mxu0 0.0
  %1218 = vmatpush.xpose.msra.mxu0 0.0
  %1219 = vmatpush.xpose.msra.mxu0 0.0
  %1220 = vmatpush.xpose.msra.mxu0 0.0
  %1221 = vmatpush.xpose.msra.mxu0 0.0
  %1222 = vmatpush.xpose.msra.mxu0 0.0
  %1223 = vmatpush.xpose.msra.mxu0 0.0
  %1224 = vmatpush.xpose.msra.mxu0 0.0
  %1225 = vmatpush.xpose.msra.mxu0 %v1072
  %1226 = vmatpush.xpose.msra.mxu0 %v1069
  %1227 = vmatpush.xpose.msra.mxu0 %v1067
  %1228 = vmatpush.xpose.msra.mxu0 %v1064
  %1229 = vmatpush.xpose.msra.mxu0 %v1062
  %1230 = vmatmul.f32.gmra.mxu0 %v970
  %v1231 = vpop.f32.mrf.mxu0
  %v1232 = vadd.f32 0.0, %v1231
  %1233 = vmatmul.f32.gmra.mxu0 %v972
  %v1234 = vpop.f32.mrf.mxu0
  %v1235 = vadd.f32 0.0, %v1234
  %1236 = vmatmul.f32.gmra.mxu0 %v975
  %v1237 = vpop.f32.mrf.mxu0
  %v1238 = vadd.f32 0.0, %v1237
  %1239 = vmatmul.f32.gmra.mxu0 %v977
  %v1240 = vpop.f32.mrf.mxu0
  %v1241 = vadd.f32 0.0, %v1240
  %1242 = vmatmul.f32.gmra.mxu0 %v980
  %v1243 = vpop.f32.mrf.mxu0
  %v1244 = vadd.f32 0.0, %v1243
  %1245 = vdwg.mxu0
  %v1246 = vmul.f32 %v1232, 0.088388346
  %v1247 = vmul.f32 %v1235, 0.088388346
  %v1248 = vmul.f32 %v1238, 0.088388346
  %v1249 = vmul.f32 %v1241, 0.088388346
  %v1250 = vmul.f32 %v1244, 0.088388346
  %v1251 = vld [vmem:[%s3] sm:$0xff]
  %v1252 = vld [vmem:[%s3 + $0x8] sm:$0xff]
  %v1253 = vld [vmem:[%s3 + $0x10] sm:$0xff]
  %v1254 = vld [vmem:[%s3 + $0x18] sm:$0xff]
  %v1255 = vld [vmem:[%s3 + $0x20] sm:$0x3]
  %v1256 = vadd.f32 %v1246, %v1251
  %v1257 = vadd.f32 %v1247, %v1252
  %v1258 = vadd.f32 %v1248, %v1253
  %v1259 = vadd.f32 %v1249, %v1254
  %v1260 = vadd.f32 %v1250, %v1255
  %vm1261 = vcmask 277504
  %v1262 = vsel %vm1261, %v1256, -inf
  %1263 = vmax.xlane.f32.xlu0 %v1262
  %v1264 = vpop.xlane.xlu0 %1263
  %v1265 = vsel %vm1261, %v1257, -inf
  %1266 = vmax.xlane.f32.xlu0 %v1265
  %v1267 = vpop.xlane.xlu0 %1266
  %v1268 = vsel %vm1261, %v1258, -inf
  %1269 = vmax.xlane.f32.xlu0 %v1268
  %v1270 = vpop.xlane.xlu0 %1269
  %v1271 = vsel %vm1261, %v1259, -inf
  %1272 = vmax.xlane.f32.xlu0 %v1271
  %v1273 = vpop.xlane.xlu0 %1272
  %vm1274 = vcmask 271360
  %v1275 = vsel %vm1274, %v1260, -inf
  %1276 = vmax.xlane.f32.xlu0 %v1275
  %v1277 = vpop.xlane.xlu0 %1276
  %v1278 = vsub.f32 %v1256, %v1264
  %v1279 = vsub.f32 %v1257, %v1267
  %v1280 = vsub.f32 %v1258, %v1270
  %v1281 = vsub.f32 %v1259, %v1273
  %v1282 = vsub.f32 %v1260, %v1277
  %v1283 = vmul.f32 %v1278, 1.442695
  %v1284 = vpow.pop %v1283
  %v1285 = vmul.f32 %v1279, 1.442695
  %v1286 = vpow.pop %v1285
  %v1287 = vmul.f32 %v1280, 1.442695
  %v1288 = vpow.pop %v1287
  %v1289 = vmul.f32 %v1281, 1.442695
  %v1290 = vpow.pop %v1289
  %v1291 = vmul.f32 %v1282, 1.442695
  %v1292 = vpow.pop %v1291
  %v1293 = vsel %vm1261, %v1284, 0.0
  %1294 = vadd.xlane.f32.xlu0 %v1293
  %v1295 = vpop.xlane.xlu0 %1294
  %v1296 = vsel %vm1261, %v1286, 0.0
  %1297 = vadd.xlane.f32.xlu0 %v1296
  %v1298 = vpop.xlane.xlu0 %1297
  %v1299 = vsel %vm1261, %v1288, 0.0
  %1300 = vadd.xlane.f32.xlu0 %v1299
  %v1301 = vpop.xlane.xlu0 %1300
  %v1302 = vsel %vm1261, %v1290, 0.0
  %1303 = vadd.xlane.f32.xlu0 %v1302
  %v1304 = vpop.xlane.xlu0 %1303
  %v1305 = vsel %vm1274, %v1292, 0.0
  %1306 = vadd.xlane.f32.xlu0 %v1305
  %v1307 = vpop.xlane.xlu0 %1306
  %v1308 = vrcp.pop %v1295
  %v1309 = vrcp.pop %v1298
  %v1310 = vrcp.pop %v1301
  %v1311 = vrcp.pop %v1304
  %v1312 = vrcp.pop %v1307
  %v1313 = vmul.f32 %v1284, %v1308
  %v1314 = vmul.f32 %v1286, %v1309
  %v1315 = vmul.f32 %v1288, %v1310
  %v1316 = vmul.f32 %v1290, %v1311
  %v1317 = vmul.f32 %v1292, %v1312
  %v1319 = vsel %vm1261, %v1313, 0
  %v1322 = vsel %vm1261, %v1314, 0
  %v1325 = vsel %vm1261, %v1315, 0
  %v1328 = vsel %vm1261, %v1316, 0
  %v1331 = vsel %vm1261, %v1317, 0
  %v1334 = vsel %vm186, %v1164, 0
  %1336 = vmatpush.msra.mxu0 0.0
  %1337 = vmatpush.msra.mxu0 0.0
  %1338 = vmatpush.msra.mxu0 0.0
  %1339 = vmatpush.msra.mxu0 0.0
  %1340 = vmatpush.msra.mxu0 0.0
  %1341 = vmatpush.msra.mxu0 0.0
  %1342 = vmatpush.msra.mxu0 0.0
  %1343 = vmatpush.msra.mxu0 0.0
  %1344 = vmatpush.msra.mxu0 0.0
  %1345 = vmatpush.msra.mxu0 0.0
  %1346 = vmatpush.msra.mxu0 0.0
  %1347 = vmatpush.msra.mxu0 %v1334
  %1348 = vmatpush.msra.mxu0 %v1161
  %1349 = vmatpush.msra.mxu0 %v1159
  %1350 = vmatpush.msra.mxu0 %v1156
  %1351 = vmatpush.msra.mxu0 %v1154
  %1352 = vmatmul.f32.gmra.mxu0 %v1319
  %v1353 = vpop.f32.mrf.mxu0
  %v1354 = vadd.f32 0.0, %v1353
  %1355 = vmatmul.f32.gmra.mxu0 %v1322
  %v1356 = vpop.f32.mrf.mxu0
  %v1357 = vadd.f32 0.0, %v1356
  %1358 = vmatmul.f32.gmra.mxu0 %v1325
  %v1359 = vpop.f32.mrf.mxu0
  %v1360 = vadd.f32 0.0, %v1359
  %1361 = vmatmul.f32.gmra.mxu0 %v1328
  %v1362 = vpop.f32.mrf.mxu0
  %v1363 = vadd.f32 0.0, %v1362
  %1364 = vmatmul.f32.gmra.mxu0 %v1331
  %v1365 = vpop.f32.mrf.mxu0
  %v1366 = vadd.f32 0.0, %v1365
  %1367 = vdwg.mxu0
  %v1368 = vpack.c.bf16 %v1357, %v1354
  %v1369 = vpack.c.bf16 %v1363, %v1360
  %v1370 = vpack.c.bf16 %v1366, %v1366
  %v1371 = vld [vmem:[%s8] sm:$0xff]
  %v1372 = vld [vmem:[%s8 + $0x8] sm:$0xff]
  %v1373 = vld [vmem:[%s8 + $0x10] sm:$0xff]
  %v1374 = vld [vmem:[%s8 + $0x18] sm:$0xff]
  %v1375 = vld [vmem:[%s8 + $0x20] sm:$0xff]
  %v1376 = vld [vmem:[%s8 + $0x28] sm:$0xff]
  %v1377 = vld [vmem:[%s8 + $0x30] sm:$0xff]
  %v1378 = vld [vmem:[%s8 + $0x38] sm:$0xff]
  %v1379 = vld [vmem:[%s8 + $0x40] sm:$0xff]
  %v1380 = vld [vmem:[%s8 + $0x48] sm:$0xff]
  %v1381 = vld [vmem:[%s8 + $0x50] sm:$0xff]
  %v1382 = vld [vmem:[%s8 + $0x58] sm:$0xff]
  %v1383 = vld [vmem:[%s8 + $0x60] sm:$0xff]
  %v1384 = vld [vmem:[%s8 + $0x68] sm:$0xff]
  %v1385 = vld [vmem:[%s8 + $0x70] sm:$0xff]
  %v1386 = vld [vmem:[%s8 + $0x78] sm:$0xff]
  %v1403 = vunpack.c.l.b16 %v1371
  %v1404 = vunpack.c.h.b16 %v1371
  %v1405 = vunpack.c.l.b16 %v1372
  %v1406 = vunpack.c.h.b16 %v1372
  %v1407 = vunpack.c.l.b16 %v1373
  %v1408 = vunpack.c.h.b16 %v1373
  %v1409 = vunpack.c.l.b16 %v1374
  %v1410 = vunpack.c.h.b16 %v1374
  %v1411 = vunpack.c.l.b16 %v1375
  %v1412 = vunpack.c.h.b16 %v1375
  %v1413 = vunpack.c.l.b16 %v1376
  %v1414 = vunpack.c.h.b16 %v1376
  %v1415 = vunpack.c.l.b16 %v1377
  %v1416 = vunpack.c.h.b16 %v1377
  %v1417 = vunpack.c.l.b16 %v1378
  %v1418 = vunpack.c.h.b16 %v1378
  %v1419 = vunpack.c.l.b16 %v1379
  %v1420 = vunpack.c.h.b16 %v1379
  %v1421 = vunpack.c.l.b16 %v1380
  %v1422 = vunpack.c.h.b16 %v1380
  %v1423 = vunpack.c.l.b16 %v1381
  %v1424 = vunpack.c.h.b16 %v1381
  %v1425 = vunpack.c.l.b16 %v1382
  %v1426 = vunpack.c.h.b16 %v1382
  %v1427 = vunpack.c.l.b16 %v1383
  %v1428 = vunpack.c.h.b16 %v1383
  %v1429 = vunpack.c.l.b16 %v1384
  %v1430 = vunpack.c.h.b16 %v1384
  %v1431 = vunpack.c.l.b16 %v1385
  %v1432 = vunpack.c.h.b16 %v1385
  %v1433 = vunpack.c.l.b16 %v1386
  %v1434 = vunpack.c.h.b16 %v1386
  %v1435 = vpack.c.b16 %v1405, %v1403
  %v1436 = vpack.c.b16 %v1406, %v1404
  %v1437 = vpack.c.b16 %v1409, %v1407
  %v1438 = vpack.c.b16 %v1410, %v1408
  %v1439 = vpack.c.b16 %v1413, %v1411
  %v1440 = vpack.c.b16 %v1414, %v1412
  %v1441 = vpack.c.b16 %v1417, %v1415
  %v1442 = vpack.c.b16 %v1418, %v1416
  %v1443 = vpack.c.b16 %v1421, %v1419
  %v1444 = vpack.c.b16 %v1422, %v1420
  %v1445 = vpack.c.b16 %v1425, %v1423
  %v1446 = vpack.c.b16 %v1426, %v1424
  %v1447 = vpack.c.b16 %v1429, %v1427
  %v1448 = vpack.c.b16 %v1430, %v1428
  %v1449 = vpack.c.b16 %v1433, %v1431
  %v1450 = vpack.c.b16 %v1434, %v1432
  %1467 = vmatpush.bf16.msra.mxu0 %v1449
  %1468 = vmatpush.bf16.msra.mxu0 %v1447
  %1469 = vmatpush.bf16.msra.mxu0 %v1445
  %1470 = vmatpush.bf16.msra.mxu0 %v1443
  %1471 = vmatpush.bf16.msra.mxu0 %v1441
  %1472 = vmatpush.bf16.msra.mxu0 %v1439
  %1473 = vmatpush.bf16.msra.mxu0 %v1437
  %1474 = vmatpush.bf16.msra.mxu0 %v1435
  %1475 = vmatmul.bf16.gmra.mxu0 %v1368
  %v1476 = vpop.f32.mrf.mxu0
  %v1477 = vadd.f32 0.0, %v1476
  %v1478 = vpop.f32.mrf.mxu0
  %v1479 = vadd.f32 0.0, %v1478
  %1480 = vmatmul.bf16.gmra.mxu0 %v1369
  %v1481 = vpop.f32.mrf.mxu0
  %v1482 = vadd.f32 0.0, %v1481
  %v1483 = vpop.f32.mrf.mxu0
  %v1484 = vadd.f32 0.0, %v1483
  %1485 = vmatmul.bf16.gmra.mxu0 %v1370
  %v1486 = vpop.f32.mrf.mxu0
  %v1487 = vadd.f32 0.0, %v1486
  %v1488 = vpop.f32.mrf.mxu0
  %1489 = vdwg.mxu0
  %1490 = vmatpush.bf16.msra.mxu0 %v1450
  %1491 = vmatpush.bf16.msra.mxu0 %v1448
  %1492 = vmatpush.bf16.msra.mxu0 %v1446
  %1493 = vmatpush.bf16.msra.mxu0 %v1444
  %1494 = vmatpush.bf16.msra.mxu0 %v1442
  %1495 = vmatpush.bf16.msra.mxu0 %v1440
  %1496 = vmatpush.bf16.msra.mxu0 %v1438
  %1497 = vmatpush.bf16.msra.mxu0 %v1436
  %1498 = vmatmul.bf16.gmra.mxu0 %v1368
  %v1499 = vpop.f32.mrf.mxu0
  %v1500 = vadd.f32 0.0, %v1499
  %v1501 = vpop.f32.mrf.mxu0
  %v1502 = vadd.f32 0.0, %v1501
  %1503 = vmatmul.bf16.gmra.mxu0 %v1369
  %v1504 = vpop.f32.mrf.mxu0
  %v1505 = vadd.f32 0.0, %v1504
  %v1506 = vpop.f32.mrf.mxu0
  %v1507 = vadd.f32 0.0, %v1506
  %1508 = vmatmul.bf16.gmra.mxu0 %v1370
  %v1509 = vpop.f32.mrf.mxu0
  %v1510 = vadd.f32 0.0, %v1509
  %v1511 = vpop.f32.mrf.mxu0
  %1512 = vdwg.mxu0
  %v1514 = vperm.slane %v1213, 0
  %v1515 = vperm.slane %v1213, 1
  %v1518 = vadd.f32 %v1514, %v1477
  %v1519 = vadd.f32 %v1515, %v1500
  %v1520 = vadd.f32 %v1514, %v1479
  %v1521 = vadd.f32 %v1515, %v1502
  %v1522 = vadd.f32 %v1514, %v1482
  %v1523 = vadd.f32 %v1515, %v1505
  %v1524 = vadd.f32 %v1514, %v1484
  %v1525 = vadd.f32 %v1515, %v1507
  %v1526 = vadd.f32 %v1514, %v1487
  %v1527 = vadd.f32 %v1515, %v1510
  %1528 = vmatpush.xpose.msra.mxu0 0.0
  %1529 = vmatpush.xpose.msra.mxu0 0.0
  %1530 = vmatpush.xpose.msra.mxu0 0.0
  %1531 = vmatpush.xpose.msra.mxu0 0.0
  %1532 = vmatpush.xpose.msra.mxu0 0.0
  %1533 = vmatpush.xpose.msra.mxu0 0.0
  %1534 = vmatpush.xpose.msra.mxu0 0.0
  %1535 = vmatpush.xpose.msra.mxu0 0.0
  %1536 = vmatpush.xpose.msra.mxu0 0.0
  %1537 = vmatpush.xpose.msra.mxu0 0.0
  %1538 = vmatpush.xpose.msra.mxu0 0.0
  %1539 = vmatpush.xpose.msra.mxu0 %v1118
  %1540 = vmatpush.xpose.msra.mxu0 %v1115
  %1541 = vmatpush.xpose.msra.mxu0 %v1113
  %1542 = vmatpush.xpose.msra.mxu0 %v1110
  %1543 = vmatpush.xpose.msra.mxu0 %v1108
  %1544 = vmatmul.f32.gmra.mxu0 %v1016
  %v1545 = vpop.f32.mrf.mxu0
  %v1546 = vadd.f32 0.0, %v1545
  %1547 = vmatmul.f32.gmra.mxu0 %v1018
  %v1548 = vpop.f32.mrf.mxu0
  %v1549 = vadd.f32 0.0, %v1548
  %1550 = vmatmul.f32.gmra.mxu0 %v1021
  %v1551 = vpop.f32.mrf.mxu0
  %v1552 = vadd.f32 0.0, %v1551
  %1553 = vmatmul.f32.gmra.mxu0 %v1023
  %v1554 = vpop.f32.mrf.mxu0
  %v1555 = vadd.f32 0.0, %v1554
  %1556 = vmatmul.f32.gmra.mxu0 %v1026
  %v1557 = vpop.f32.mrf.mxu0
  %v1558 = vadd.f32 0.0, %v1557
  %1559 = vdwg.mxu0
  %v1560 = vmul.f32 %v1546, 0.088388346
  %v1561 = vmul.f32 %v1549, 0.088388346
  %v1562 = vmul.f32 %v1552, 0.088388346
  %v1563 = vmul.f32 %v1555, 0.088388346
  %v1564 = vmul.f32 %v1558, 0.088388346
  %v1565 = vadd.f32 %v1560, %v1251
  %v1566 = vadd.f32 %v1561, %v1252
  %v1567 = vadd.f32 %v1562, %v1253
  %v1568 = vadd.f32 %v1563, %v1254
  %v1569 = vadd.f32 %v1564, %v1255
  %v1570 = vsel %vm1261, %v1565, -inf
  %1571 = vmax.xlane.f32.xlu0 %v1570
  %v1572 = vpop.xlane.xlu0 %1571
  %v1573 = vsel %vm1261, %v1566, -inf
  %1574 = vmax.xlane.f32.xlu0 %v1573
  %v1575 = vpop.xlane.xlu0 %1574
  %v1576 = vsel %vm1261, %v1567, -inf
  %1577 = vmax.xlane.f32.xlu0 %v1576
  %v1578 = vpop.xlane.xlu0 %1577
  %v1579 = vsel %vm1261, %v1568, -inf
  %1580 = vmax.xlane.f32.xlu0 %v1579
  %v1581 = vpop.xlane.xlu0 %1580
  %v1582 = vsel %vm1274, %v1569, -inf
  %1583 = vmax.xlane.f32.xlu0 %v1582
  %v1584 = vpop.xlane.xlu0 %1583
  %v1585 = vsub.f32 %v1565, %v1572
  %v1586 = vsub.f32 %v1566, %v1575
  %v1587 = vsub.f32 %v1567, %v1578
  %v1588 = vsub.f32 %v1568, %v1581
  %v1589 = vsub.f32 %v1569, %v1584
  %v1590 = vmul.f32 %v1585, 1.442695
  %v1591 = vpow.pop %v1590
  %v1592 = vmul.f32 %v1586, 1.442695
  %v1593 = vpow.pop %v1592
  %v1594 = vmul.f32 %v1587, 1.442695
  %v1595 = vpow.pop %v1594
  %v1596 = vmul.f32 %v1588, 1.442695
  %v1597 = vpow.pop %v1596
  %v1598 = vmul.f32 %v1589, 1.442695
  %v1599 = vpow.pop %v1598
  %v1600 = vsel %vm1261, %v1591, 0.0
  %1601 = vadd.xlane.f32.xlu0 %v1600
  %v1602 = vpop.xlane.xlu0 %1601
  %v1603 = vsel %vm1261, %v1593, 0.0
  %1604 = vadd.xlane.f32.xlu0 %v1603
  %v1605 = vpop.xlane.xlu0 %1604
  %v1606 = vsel %vm1261, %v1595, 0.0
  %1607 = vadd.xlane.f32.xlu0 %v1606
  %v1608 = vpop.xlane.xlu0 %1607
  %v1609 = vsel %vm1261, %v1597, 0.0
  %1610 = vadd.xlane.f32.xlu0 %v1609
  %v1611 = vpop.xlane.xlu0 %1610
  %v1612 = vsel %vm1274, %v1599, 0.0
  %1613 = vadd.xlane.f32.xlu0 %v1612
  %v1614 = vpop.xlane.xlu0 %1613
  %v1615 = vrcp.pop %v1602
  %v1616 = vrcp.pop %v1605
  %v1617 = vrcp.pop %v1608
  %v1618 = vrcp.pop %v1611
  %v1619 = vrcp.pop %v1614
  %v1620 = vmul.f32 %v1591, %v1615
  %v1621 = vmul.f32 %v1593, %v1616
  %v1622 = vmul.f32 %v1595, %v1617
  %v1623 = vmul.f32 %v1597, %v1618
  %v1624 = vmul.f32 %v1599, %v1619
  %v1626 = vsel %vm1261, %v1620, 0
  %v1629 = vsel %vm1261, %v1621, 0
  %v1632 = vsel %vm1261, %v1622, 0
  %v1635 = vsel %vm1261, %v1623, 0
  %v1638 = vsel %vm1261, %v1624, 0
  %v1641 = vsel %vm186, %v1210, 0
  %1643 = vmatpush.msra.mxu0 0.0
  %1644 = vmatpush.msra.mxu0 0.0
  %1645 = vmatpush.msra.mxu0 0.0
  %1646 = vmatpush.msra.mxu0 0.0
  %1647 = vmatpush.msra.mxu0 0.0
  %1648 = vmatpush.msra.mxu0 0.0
  %1649 = vmatpush.msra.mxu0 0.0
  %1650 = vmatpush.msra.mxu0 0.0
  %1651 = vmatpush.msra.mxu0 0.0
  %1652 = vmatpush.msra.mxu0 0.0
  %1653 = vmatpush.msra.mxu0 0.0
  %1654 = vmatpush.msra.mxu0 %v1641
  %1655 = vmatpush.msra.mxu0 %v1207
  %1656 = vmatpush.msra.mxu0 %v1205
  %1657 = vmatpush.msra.mxu0 %v1202
  %1658 = vmatpush.msra.mxu0 %v1200
  %1659 = vmatmul.f32.gmra.mxu0 %v1626
  %v1660 = vpop.f32.mrf.mxu0
  %v1661 = vadd.f32 0.0, %v1660
  %1662 = vmatmul.f32.gmra.mxu0 %v1629
  %v1663 = vpop.f32.mrf.mxu0
  %v1664 = vadd.f32 0.0, %v1663
  %1665 = vmatmul.f32.gmra.mxu0 %v1632
  %v1666 = vpop.f32.mrf.mxu0
  %v1667 = vadd.f32 0.0, %v1666
  %1668 = vmatmul.f32.gmra.mxu0 %v1635
  %v1669 = vpop.f32.mrf.mxu0
  %v1670 = vadd.f32 0.0, %v1669
  %1671 = vmatmul.f32.gmra.mxu0 %v1638
  %v1672 = vpop.f32.mrf.mxu0
  %v1673 = vadd.f32 0.0, %v1672
  %1674 = vdwg.mxu0
  %v1675 = vpack.c.bf16 %v1664, %v1661
  %v1676 = vpack.c.bf16 %v1670, %v1667
  %v1677 = vpack.c.bf16 %v1673, %v1673
  %v1678 = vld [vmem:[%s8 + $0x80] sm:$0xff]
  %v1679 = vld [vmem:[%s8 + $0x88] sm:$0xff]
  %v1680 = vld [vmem:[%s8 + $0x90] sm:$0xff]
  %v1681 = vld [vmem:[%s8 + $0x98] sm:$0xff]
  %v1682 = vld [vmem:[%s8 + $0xa0] sm:$0xff]
  %v1683 = vld [vmem:[%s8 + $0xa8] sm:$0xff]
  %v1684 = vld [vmem:[%s8 + $0xb0] sm:$0xff]
  %v1685 = vld [vmem:[%s8 + $0xb8] sm:$0xff]
  %v1686 = vld [vmem:[%s8 + $0xc0] sm:$0xff]
  %v1687 = vld [vmem:[%s8 + $0xc8] sm:$0xff]
  %v1688 = vld [vmem:[%s8 + $0xd0] sm:$0xff]
  %v1689 = vld [vmem:[%s8 + $0xd8] sm:$0xff]
  %v1690 = vld [vmem:[%s8 + $0xe0] sm:$0xff]
  %v1691 = vld [vmem:[%s8 + $0xe8] sm:$0xff]
  %v1692 = vld [vmem:[%s8 + $0xf0] sm:$0xff]
  %v1693 = vld [vmem:[%s8 + $0xf8] sm:$0xff]
  %v1710 = vunpack.c.l.b16 %v1678
  %v1711 = vunpack.c.h.b16 %v1678
  %v1712 = vunpack.c.l.b16 %v1679
  %v1713 = vunpack.c.h.b16 %v1679
  %v1714 = vunpack.c.l.b16 %v1680
  %v1715 = vunpack.c.h.b16 %v1680
  %v1716 = vunpack.c.l.b16 %v1681
  %v1717 = vunpack.c.h.b16 %v1681
  %v1718 = vunpack.c.l.b16 %v1682
  %v1719 = vunpack.c.h.b16 %v1682
  %v1720 = vunpack.c.l.b16 %v1683
  %v1721 = vunpack.c.h.b16 %v1683
  %v1722 = vunpack.c.l.b16 %v1684
  %v1723 = vunpack.c.h.b16 %v1684
  %v1724 = vunpack.c.l.b16 %v1685
  %v1725 = vunpack.c.h.b16 %v1685
  %v1726 = vunpack.c.l.b16 %v1686
  %v1727 = vunpack.c.h.b16 %v1686
  %v1728 = vunpack.c.l.b16 %v1687
  %v1729 = vunpack.c.h.b16 %v1687
  %v1730 = vunpack.c.l.b16 %v1688
  %v1731 = vunpack.c.h.b16 %v1688
  %v1732 = vunpack.c.l.b16 %v1689
  %v1733 = vunpack.c.h.b16 %v1689
  %v1734 = vunpack.c.l.b16 %v1690
  %v1735 = vunpack.c.h.b16 %v1690
  %v1736 = vunpack.c.l.b16 %v1691
  %v1737 = vunpack.c.h.b16 %v1691
  %v1738 = vunpack.c.l.b16 %v1692
  %v1739 = vunpack.c.h.b16 %v1692
  %v1740 = vunpack.c.l.b16 %v1693
  %v1741 = vunpack.c.h.b16 %v1693
  %v1742 = vpack.c.b16 %v1712, %v1710
  %v1743 = vpack.c.b16 %v1713, %v1711
  %v1744 = vpack.c.b16 %v1716, %v1714
  %v1745 = vpack.c.b16 %v1717, %v1715
  %v1746 = vpack.c.b16 %v1720, %v1718
  %v1747 = vpack.c.b16 %v1721, %v1719
  %v1748 = vpack.c.b16 %v1724, %v1722
  %v1749 = vpack.c.b16 %v1725, %v1723
  %v1750 = vpack.c.b16 %v1728, %v1726
  %v1751 = vpack.c.b16 %v1729, %v1727
  %v1752 = vpack.c.b16 %v1732, %v1730
  %v1753 = vpack.c.b16 %v1733, %v1731
  %v1754 = vpack.c.b16 %v1736, %v1734
  %v1755 = vpack.c.b16 %v1737, %v1735
  %v1756 = vpack.c.b16 %v1740, %v1738
  %v1757 = vpack.c.b16 %v1741, %v1739
  %1774 = vmatpush.bf16.msra.mxu0 %v1756
  %1775 = vmatpush.bf16.msra.mxu0 %v1754
  %1776 = vmatpush.bf16.msra.mxu0 %v1752
  %1777 = vmatpush.bf16.msra.mxu0 %v1750
  %1778 = vmatpush.bf16.msra.mxu0 %v1748
  %1779 = vmatpush.bf16.msra.mxu0 %v1746
  %1780 = vmatpush.bf16.msra.mxu0 %v1744
  %1781 = vmatpush.bf16.msra.mxu0 %v1742
  %1782 = vmatmul.bf16.gmra.mxu0 %v1675
  %v1783 = vpop.f32.mrf.mxu0
  %v1784 = vadd.f32 0.0, %v1783
  %v1785 = vpop.f32.mrf.mxu0
  %v1786 = vadd.f32 0.0, %v1785
  %1787 = vmatmul.bf16.gmra.mxu0 %v1676
  %v1788 = vpop.f32.mrf.mxu0
  %v1789 = vadd.f32 0.0, %v1788
  %v1790 = vpop.f32.mrf.mxu0
  %v1791 = vadd.f32 0.0, %v1790
  %1792 = vmatmul.bf16.gmra.mxu0 %v1677
  %v1793 = vpop.f32.mrf.mxu0
  %v1794 = vadd.f32 0.0, %v1793
  %v1795 = vpop.f32.mrf.mxu0
  %1796 = vdwg.mxu0
  %1797 = vmatpush.bf16.msra.mxu0 %v1757
  %1798 = vmatpush.bf16.msra.mxu0 %v1755
  %1799 = vmatpush.bf16.msra.mxu0 %v1753
  %1800 = vmatpush.bf16.msra.mxu0 %v1751
  %1801 = vmatpush.bf16.msra.mxu0 %v1749
  %1802 = vmatpush.bf16.msra.mxu0 %v1747
  %1803 = vmatpush.bf16.msra.mxu0 %v1745
  %1804 = vmatpush.bf16.msra.mxu0 %v1743
  %1805 = vmatmul.bf16.gmra.mxu0 %v1675
  %v1806 = vpop.f32.mrf.mxu0
  %v1807 = vadd.f32 0.0, %v1806
  %v1808 = vpop.f32.mrf.mxu0
  %v1809 = vadd.f32 0.0, %v1808
  %1810 = vmatmul.bf16.gmra.mxu0 %v1676
  %v1811 = vpop.f32.mrf.mxu0
  %v1812 = vadd.f32 0.0, %v1811
  %v1813 = vpop.f32.mrf.mxu0
  %v1814 = vadd.f32 0.0, %v1813
  %1815 = vmatmul.bf16.gmra.mxu0 %v1677
  %v1816 = vpop.f32.mrf.mxu0
  %v1817 = vadd.f32 0.0, %v1816
  %v1818 = vpop.f32.mrf.mxu0
  %1819 = vdwg.mxu0
  %v1820 = vadd.f32 %v1518, %v1784
  %v1821 = vadd.f32 %v1519, %v1807
  %v1822 = vadd.f32 %v1520, %v1786
  %v1823 = vadd.f32 %v1521, %v1809
  %v1824 = vadd.f32 %v1522, %v1789
  %v1825 = vadd.f32 %v1523, %v1812
  %v1826 = vadd.f32 %v1524, %v1791
  %v1827 = vadd.f32 %v1525, %v1814
  %v1828 = vadd.f32 %v1526, %v1794
  %v1829 = vadd.f32 %v1527, %v1817
  %v1830 = vadd.f32 %v126, %v1820
  %v1831 = vadd.f32 %v158, %v1821
  %v1832 = vadd.f32 %v129, %v1822
  %v1833 = vadd.f32 %v161, %v1823
  %v1834 = vadd.f32 %v132, %v1824
  %v1835 = vadd.f32 %v164, %v1825
  %v1836 = vadd.f32 %v135, %v1826
  %v1837 = vadd.f32 %v167, %v1827
  %v1838 = vadd.f32 %v138, %v1828
  %v1839 = vadd.f32 %v170, %v1829
  %v1840 = vld [vmem:[%s10] sm:$0x3]
  %v1841 = vld [vmem:[%s11] sm:$0x3]
  %v1842 = vadd.f32 %v1830, %v1831
  %1843 = vadd.xlane.f32.xlu0 %v1842
  %v1844 = vpop.xlane.xlu0 %1843
  %v1845 = vadd.f32 %v1832, %v1833
  %1846 = vadd.xlane.f32.xlu0 %v1845
  %v1847 = vpop.xlane.xlu0 %1846
  %v1848 = vadd.f32 %v1834, %v1835
  %1849 = vadd.xlane.f32.xlu0 %v1848
  %v1850 = vpop.xlane.xlu0 %1849
  %v1851 = vadd.f32 %v1836, %v1837
  %1852 = vadd.xlane.f32.xlu0 %v1851
  %v1853 = vpop.xlane.xlu0 %1852
  %v1854 = vsel %vm186, %v1838, 0.0
  %v1855 = vsel %vm186, %v1839, 0.0
  %v1856 = vadd.f32 %v1854, %v1855
  %1857 = vadd.xlane.f32.xlu0 %v1856
  %v1858 = vpop.xlane.xlu0 %1857
  %v1859 = vmul.f32 %v1844, %v198
  %v1860 = vmul.f32 %v1847, %v198
  %v1861 = vmul.f32 %v1850, %v198
  %v1862 = vmul.f32 %v1853, %v198
  %v1863 = vmul.f32 %v1858, %v198
  %v1864 = vsub.f32 %v1830, %v1859
  %v1865 = vsub.f32 %v1831, %v1859
  %v1866 = vsub.f32 %v1832, %v1860
  %v1867 = vsub.f32 %v1833, %v1860
  %v1868 = vsub.f32 %v1834, %v1861
  %v1869 = vsub.f32 %v1835, %v1861
  %v1870 = vsub.f32 %v1836, %v1862
  %v1871 = vsub.f32 %v1837, %v1862
  %v1872 = vsub.f32 %v1838, %v1863
  %v1873 = vsub.f32 %v1839, %v1863
  %v1874 = vmul.f32 %v1864, %v1864
  %v1875 = vmul.f32 %v1865, %v1865
  %v1876 = vmul.f32 %v1866, %v1866
  %v1877 = vmul.f32 %v1867, %v1867
  %v1878 = vmul.f32 %v1868, %v1868
  %v1879 = vmul.f32 %v1869, %v1869
  %v1880 = vmul.f32 %v1870, %v1870
  %v1881 = vmul.f32 %v1871, %v1871
  %v1882 = vmul.f32 %v1872, %v1872
  %v1883 = vmul.f32 %v1873, %v1873
  %v1884 = vadd.f32 %v1874, %v1875
  %1885 = vadd.xlane.f32.xlu0 %v1884
  %v1886 = vpop.xlane.xlu0 %1885
  %v1887 = vadd.f32 %v1876, %v1877
  %1888 = vadd.xlane.f32.xlu0 %v1887
  %v1889 = vpop.xlane.xlu0 %1888
  %v1890 = vadd.f32 %v1878, %v1879
  %1891 = vadd.xlane.f32.xlu0 %v1890
  %v1892 = vpop.xlane.xlu0 %1891
  %v1893 = vadd.f32 %v1880, %v1881
  %1894 = vadd.xlane.f32.xlu0 %v1893
  %v1895 = vpop.xlane.xlu0 %1894
  %v1896 = vsel %vm186, %v1882, 0.0
  %v1897 = vsel %vm186, %v1883, 0.0
  %v1898 = vadd.f32 %v1896, %v1897
  %1899 = vadd.xlane.f32.xlu0 %v1898
  %v1900 = vpop.xlane.xlu0 %1899
  %v1901 = vmul.f32 %v1886, %v198
  %v1902 = vmul.f32 %v1889, %v198
  %v1903 = vmul.f32 %v1892, %v198
  %v1904 = vmul.f32 %v1895, %v198
  %v1905 = vmul.f32 %v1900, %v198
  %v1906 = vadd.f32 %v1901, 1e-06
  %v1907 = vadd.f32 %v1902, 1e-06
  %v1908 = vadd.f32 %v1903, 1e-06
  %v1909 = vadd.f32 %v1904, 1e-06
  %v1910 = vadd.f32 %v1905, 1e-06
  %v1911 = vrsqrt.pop %v1906
  %v1912 = vmul.f32 %v1911, %v1906
  %v1913 = vmul.f32 %v1912, %v1911
  %v1914 = vmul.f32 0.5, %v1913
  %v1915 = vsub.f32 1.5, %v1914
  %v1916 = vmul.f32 %v1911, %v1915
  %vm1917 = vweird.f32 %v1906
  %vm1918 = vweird.f32 %v1911
  %vm1919 = vmor %vm1917, %vm1918
  %v1920 = vsel %vm1919, %v1911, %v1916
  %v1921 = vrsqrt.pop %v1907
  %v1922 = vmul.f32 %v1921, %v1907
  %v1923 = vmul.f32 %v1922, %v1921
  %v1924 = vmul.f32 0.5, %v1923
  %v1925 = vsub.f32 1.5, %v1924
  %v1926 = vmul.f32 %v1921, %v1925
  %vm1927 = vweird.f32 %v1907
  %vm1928 = vweird.f32 %v1921
  %vm1929 = vmor %vm1927, %vm1928
  %v1930 = vsel %vm1929, %v1921, %v1926
  %v1931 = vrsqrt.pop %v1908
  %v1932 = vmul.f32 %v1931, %v1908
  %v1933 = vmul.f32 %v1932, %v1931
  %v1934 = vmul.f32 0.5, %v1933
  %v1935 = vsub.f32 1.5, %v1934
  %v1936 = vmul.f32 %v1931, %v1935
  %vm1937 = vweird.f32 %v1908
  %vm1938 = vweird.f32 %v1931
  %vm1939 = vmor %vm1937, %vm1938
  %v1940 = vsel %vm1939, %v1931, %v1936
  %v1941 = vrsqrt.pop %v1909
  %v1942 = vmul.f32 %v1941, %v1909
  %v1943 = vmul.f32 %v1942, %v1941
  %v1944 = vmul.f32 0.5, %v1943
  %v1945 = vsub.f32 1.5, %v1944
  %v1946 = vmul.f32 %v1941, %v1945
  %vm1947 = vweird.f32 %v1909
  %vm1948 = vweird.f32 %v1941
  %vm1949 = vmor %vm1947, %vm1948
  %v1950 = vsel %vm1949, %v1941, %v1946
  %v1951 = vrsqrt.pop %v1910
  %v1952 = vmul.f32 %v1951, %v1910
  %v1953 = vmul.f32 %v1952, %v1951
  %v1954 = vmul.f32 0.5, %v1953
  %v1955 = vsub.f32 1.5, %v1954
  %v1956 = vmul.f32 %v1951, %v1955
  %vm1957 = vweird.f32 %v1910
  %vm1958 = vweird.f32 %v1951
  %vm1959 = vmor %vm1957, %vm1958
  %v1960 = vsel %vm1959, %v1951, %v1956
  %v1961 = vmul.f32 %v1864, %v1920
  %v1962 = vmul.f32 %v1865, %v1920
  %v1963 = vmul.f32 %v1866, %v1930
  %v1964 = vmul.f32 %v1867, %v1930
  %v1965 = vmul.f32 %v1868, %v1940
  %v1966 = vmul.f32 %v1869, %v1940
  %v1967 = vmul.f32 %v1870, %v1950
  %v1968 = vmul.f32 %v1871, %v1950
  %v1969 = vmul.f32 %v1872, %v1960
  %v1970 = vmul.f32 %v1873, %v1960
  %v1972 = vperm.slane %v1840, 0
  %v1973 = vperm.slane %v1840, 1
  %v1976 = vmul.f32 %v1961, %v1972
  %v1977 = vmul.f32 %v1962, %v1973
  %v1978 = vmul.f32 %v1963, %v1972
  %v1979 = vmul.f32 %v1964, %v1973
  %v1980 = vmul.f32 %v1965, %v1972
  %v1981 = vmul.f32 %v1966, %v1973
  %v1982 = vmul.f32 %v1967, %v1972
  %v1983 = vmul.f32 %v1968, %v1973
  %v1984 = vmul.f32 %v1969, %v1972
  %v1985 = vmul.f32 %v1970, %v1973
  %v1987 = vperm.slane %v1841, 0
  %v1988 = vperm.slane %v1841, 1
  %v1991 = vadd.f32 %v1976, %v1987
  %v1992 = vadd.f32 %v1977, %v1988
  %v1993 = vadd.f32 %v1978, %v1987
  %v1994 = vadd.f32 %v1979, %v1988
  %v1995 = vadd.f32 %v1980, %v1987
  %v1996 = vadd.f32 %v1981, %v1988
  %v1997 = vadd.f32 %v1982, %v1987
  %v1998 = vadd.f32 %v1983, %v1988
  %v1999 = vadd.f32 %v1984, %v1987
  %v2000 = vadd.f32 %v1985, %v1988
  %v2001 = vpack.c.bf16 %v1993, %v1991
  %v2002 = vpack.c.bf16 %v1994, %v1992
  %v2003 = vpack.c.bf16 %v1997, %v1995
  %v2004 = vpack.c.bf16 %v1998, %v1996
  %v2005 = vpack.c.bf16 %v1999, %v1999
  %v2006 = vpack.c.bf16 %v2000, %v2000
  %v2007 = vld [vmem:[%s12] sm:$0xff]
  %v2008 = vld [vmem:[%s12 + $0x8] sm:$0xff]
  %v2009 = vld [vmem:[%s12 + $0x10] sm:$0xff]
  %v2010 = vld [vmem:[%s12 + $0x18] sm:$0xff]
  %v2011 = vld [vmem:[%s12 + $0x20] sm:$0xff]
  %v2012 = vld [vmem:[%s12 + $0x28] sm:$0xff]
  %v2013 = vld [vmem:[%s12 + $0x30] sm:$0xff]
  %v2014 = vld [vmem:[%s12 + $0x38] sm:$0xff]
  %v2015 = vld [vmem:[%s12 + $0x40] sm:$0xff]
  %v2016 = vld [vmem:[%s12 + $0x48] sm:$0xff]
  %v2017 = vld [vmem:[%s12 + $0x50] sm:$0xff]
  %v2018 = vld [vmem:[%s12 + $0x58] sm:$0xff]
  %v2019 = vld [vmem:[%s12 + $0x60] sm:$0xff]
  %v2020 = vld [vmem:[%s12 + $0x68] sm:$0xff]
  %v2021 = vld [vmem:[%s12 + $0x70] sm:$0xff]
  %v2022 = vld [vmem:[%s12 + $0x78] sm:$0xff]
  %v2023 = vld [vmem:[%s12 + $0x80] sm:$0xff]
  %v2024 = vld [vmem:[%s12 + $0x88] sm:$0xff]
  %v2025 = vld [vmem:[%s12 + $0x90] sm:$0xff]
  %v2026 = vld [vmem:[%s12 + $0x98] sm:$0xff]
  %v2027 = vld [vmem:[%s12 + $0xa0] sm:$0xff]
  %v2028 = vld [vmem:[%s12 + $0xa8] sm:$0xff]
  %v2029 = vld [vmem:[%s12 + $0xb0] sm:$0xff]
  %v2030 = vld [vmem:[%s12 + $0xb8] sm:$0xff]
  %v2031 = vld [vmem:[%s12 + $0xc0] sm:$0xff]
  %v2032 = vld [vmem:[%s12 + $0xc8] sm:$0xff]
  %v2033 = vld [vmem:[%s12 + $0xd0] sm:$0xff]
  %v2034 = vld [vmem:[%s12 + $0xd8] sm:$0xff]
  %v2035 = vld [vmem:[%s12 + $0xe0] sm:$0xff]
  %v2036 = vld [vmem:[%s12 + $0xe8] sm:$0xff]
  %v2037 = vld [vmem:[%s12 + $0xf0] sm:$0xff]
  %v2038 = vld [vmem:[%s12 + $0xf8] sm:$0xff]
  %v2039 = vld [vmem:[%s12 + $0x100] sm:$0xff]
  %v2040 = vld [vmem:[%s12 + $0x108] sm:$0xff]
  %v2041 = vld [vmem:[%s12 + $0x110] sm:$0xff]
  %v2042 = vld [vmem:[%s12 + $0x118] sm:$0xff]
  %v2043 = vld [vmem:[%s12 + $0x120] sm:$0xff]
  %v2044 = vld [vmem:[%s12 + $0x128] sm:$0xff]
  %v2045 = vld [vmem:[%s12 + $0x130] sm:$0xff]
  %v2046 = vld [vmem:[%s12 + $0x138] sm:$0xff]
  %v2047 = vld [vmem:[%s12 + $0x140] sm:$0xff]
  %v2048 = vld [vmem:[%s12 + $0x148] sm:$0xff]
  %v2049 = vld [vmem:[%s12 + $0x150] sm:$0xff]
  %v2050 = vld [vmem:[%s12 + $0x158] sm:$0xff]
  %v2051 = vld [vmem:[%s12 + $0x160] sm:$0xff]
  %v2052 = vld [vmem:[%s12 + $0x168] sm:$0xff]
  %v2053 = vld [vmem:[%s12 + $0x170] sm:$0xff]
  %v2054 = vld [vmem:[%s12 + $0x178] sm:$0xff]
  %v2055 = vld [vmem:[%s12 + $0x180] sm:$0xff]
  %v2056 = vld [vmem:[%s12 + $0x188] sm:$0xff]
  %v2057 = vld [vmem:[%s12 + $0x190] sm:$0xff]
  %v2058 = vld [vmem:[%s12 + $0x198] sm:$0xff]
  %v2059 = vld [vmem:[%s12 + $0x1a0] sm:$0xff]
  %v2060 = vld [vmem:[%s12 + $0x1a8] sm:$0xff]
  %v2061 = vld [vmem:[%s12 + $0x1b0] sm:$0xff]
  %v2062 = vld [vmem:[%s12 + $0x1b8] sm:$0xff]
  %v2063 = vld [vmem:[%s12 + $0x1c0] sm:$0xff]
  %v2064 = vld [vmem:[%s12 + $0x1c8] sm:$0xff]
  %v2065 = vld [vmem:[%s12 + $0x1d0] sm:$0xff]
  %v2066 = vld [vmem:[%s12 + $0x1d8] sm:$0xff]
  %v2067 = vld [vmem:[%s12 + $0x1e0] sm:$0xff]
  %v2068 = vld [vmem:[%s12 + $0x1e8] sm:$0xff]
  %v2069 = vld [vmem:[%s12 + $0x1f0] sm:$0xff]
  %v2070 = vld [vmem:[%s12 + $0x1f8] sm:$0xff]
  %v2071 = vld [vmem:[%s12 + $0x200] sm:$0xff]
  %v2072 = vld [vmem:[%s12 + $0x208] sm:$0xff]
  %v2073 = vld [vmem:[%s12 + $0x210] sm:$0xff]
  %v2074 = vld [vmem:[%s12 + $0x218] sm:$0xff]
  %v2075 = vld [vmem:[%s12 + $0x220] sm:$0xff]
  %v2076 = vld [vmem:[%s12 + $0x228] sm:$0xff]
  %v2077 = vld [vmem:[%s12 + $0x230] sm:$0xff]
  %v2078 = vld [vmem:[%s12 + $0x238] sm:$0xff]
  %v2079 = vld [vmem:[%s12 + $0x240] sm:$0xff]
  %v2080 = vld [vmem:[%s12 + $0x248] sm:$0xff]
  %v2081 = vld [vmem:[%s12 + $0x250] sm:$0xff]
  %v2082 = vld [vmem:[%s12 + $0x258] sm:$0xff]
  %v2083 = vld [vmem:[%s12 + $0x260] sm:$0xff]
  %v2084 = vld [vmem:[%s12 + $0x268] sm:$0xff]
  %v2085 = vld [vmem:[%s12 + $0x270] sm:$0xff]
  %v2086 = vld [vmem:[%s12 + $0x278] sm:$0xff]
  %v2087 = vld [vmem:[%s12 + $0x280] sm:$0xff]
  %v2088 = vld [vmem:[%s12 + $0x288] sm:$0xff]
  %v2089 = vld [vmem:[%s12 + $0x290] sm:$0xff]
  %v2090 = vld [vmem:[%s12 + $0x298] sm:$0xff]
  %v2091 = vld [vmem:[%s12 + $0x2a0] sm:$0xff]
  %v2092 = vld [vmem:[%s12 + $0x2a8] sm:$0xff]
  %v2093 = vld [vmem:[%s12 + $0x2b0] sm:$0xff]
  %v2094 = vld [vmem:[%s12 + $0x2b8] sm:$0xff]
  %v2095 = vld [vmem:[%s12 + $0x2c0] sm:$0xff]
  %v2096 = vld [vmem:[%s12 + $0x2c8] sm:$0xff]
  %v2097 = vld [vmem:[%s12 + $0x2d0] sm:$0xff]
  %v2098 = vld [vmem:[%s12 + $0x2d8] sm:$0xff]
  %v2099 = vld [vmem:[%s12 + $0x2e0] sm:$0xff]
  %v2100 = vld [vmem:[%s12 + $0x2e8] sm:$0xff]
  %v2101 = vld [vmem:[%s12 + $0x2f0] sm:$0xff]
  %v2102 = vld [vmem:[%s12 + $0x2f8] sm:$0xff]
  %v2103 = vld [vmem:[%s12 + $0x300] sm:$0xff]
  %v2104 = vld [vmem:[%s12 + $0x308] sm:$0xff]
  %v2105 = vld [vmem:[%s12 + $0x310] sm:$0xff]
  %v2106 = vld [vmem:[%s12 + $0x318] sm:$0xff]
  %v2107 = vld [vmem:[%s12 + $0x320] sm:$0xff]
  %v2108 = vld [vmem:[%s12 + $0x328] sm:$0xff]
  %v2109 = vld [vmem:[%s12 + $0x330] sm:$0xff]
  %v2110 = vld [vmem:[%s12 + $0x338] sm:$0xff]
  %v2111 = vld [vmem:[%s12 + $0x340] sm:$0xff]
  %v2112 = vld [vmem:[%s12 + $0x348] sm:$0xff]
  %v2113 = vld [vmem:[%s12 + $0x350] sm:$0xff]
  %v2114 = vld [vmem:[%s12 + $0x358] sm:$0xff]
  %v2115 = vld [vmem:[%s12 + $0x360] sm:$0xff]
  %v2116 = vld [vmem:[%s12 + $0x368] sm:$0xff]
  %v2117 = vld [vmem:[%s12 + $0x370] sm:$0xff]
  %v2118 = vld [vmem:[%s12 + $0x378] sm:$0xff]
  %v2119 = vld [vmem:[%s12 + $0x380] sm:$0xff]
  %v2120 = vld [vmem:[%s12 + $0x388] sm:$0xff]
  %v2121 = vld [vmem:[%s12 + $0x390] sm:$0xff]
  %v2122 = vld [vmem:[%s12 + $0x398] sm:$0xff]
  %v2123 = vld [vmem:[%s12 + $0x3a0] sm:$0xff]
  %v2124 = vld [vmem:[%s12 + $0x3a8] sm:$0xff]
  %v2125 = vld [vmem:[%s12 + $0x3b0] sm:$0xff]
  %v2126 = vld [vmem:[%s12 + $0x3b8] sm:$0xff]
  %v2127 = vld [vmem:[%s12 + $0x3c0] sm:$0xff]
  %v2128 = vld [vmem:[%s12 + $0x3c8] sm:$0xff]
  %v2129 = vld [vmem:[%s12 + $0x3d0] sm:$0xff]
  %v2130 = vld [vmem:[%s12 + $0x3d8] sm:$0xff]
  %v2131 = vld [vmem:[%s12 + $0x3e0] sm:$0xff]
  %v2132 = vld [vmem:[%s12 + $0x3e8] sm:$0xff]
  %v2133 = vld [vmem:[%s12 + $0x3f0] sm:$0xff]
  %v2134 = vld [vmem:[%s12 + $0x3f8] sm:$0xff]
  %v2135 = vld [vmem:[%s13] sm:$0xff]
  %v2137 = vperm.slane %v2135, 0
  %v2138 = vperm.slane %v2135, 1
  %v2139 = vperm.slane %v2135, 2
  %v2140 = vperm.slane %v2135, 3
  %v2141 = vperm.slane %v2135, 4
  %v2142 = vperm.slane %v2135, 5
  %v2143 = vperm.slane %v2135, 6
  %v2144 = vperm.slane %v2135, 7
  %v2281 = vunpack.c.l.b16 %v2007
  %v2282 = vunpack.c.h.b16 %v2007
  %v2283 = vunpack.c.l.b16 %v2008
  %v2284 = vunpack.c.h.b16 %v2008
  %v2285 = vunpack.c.l.b16 %v2009
  %v2286 = vunpack.c.h.b16 %v2009
  %v2287 = vunpack.c.l.b16 %v2010
  %v2288 = vunpack.c.h.b16 %v2010
  %v2289 = vunpack.c.l.b16 %v2011
  %v2290 = vunpack.c.h.b16 %v2011
  %v2291 = vunpack.c.l.b16 %v2012
  %v2292 = vunpack.c.h.b16 %v2012
  %v2293 = vunpack.c.l.b16 %v2013
  %v2294 = vunpack.c.h.b16 %v2013
  %v2295 = vunpack.c.l.b16 %v2014
  %v2296 = vunpack.c.h.b16 %v2014
  %v2297 = vunpack.c.l.b16 %v2015
  %v2298 = vunpack.c.h.b16 %v2015
  %v2299 = vunpack.c.l.b16 %v2016
  %v2300 = vunpack.c.h.b16 %v2016
  %v2301 = vunpack.c.l.b16 %v2017
  %v2302 = vunpack.c.h.b16 %v2017
  %v2303 = vunpack.c.l.b16 %v2018
  %v2304 = vunpack.c.h.b16 %v2018
  %v2305 = vunpack.c.l.b16 %v2019
  %v2306 = vunpack.c.h.b16 %v2019
  %v2307 = vunpack.c.l.b16 %v2020
  %v2308 = vunpack.c.h.b16 %v2020
  %v2309 = vunpack.c.l.b16 %v2021
  %v2310 = vunpack.c.h.b16 %v2021
  %v2311 = vunpack.c.l.b16 %v2022
  %v2312 = vunpack.c.h.b16 %v2022
  %v2313 = vunpack.c.l.b16 %v2023
  %v2314 = vunpack.c.h.b16 %v2023
  %v2315 = vunpack.c.l.b16 %v2024
  %v2316 = vunpack.c.h.b16 %v2024
  %v2317 = vunpack.c.l.b16 %v2025
  %v2318 = vunpack.c.h.b16 %v2025
  %v2319 = vunpack.c.l.b16 %v2026
  %v2320 = vunpack.c.h.b16 %v2026
  %v2321 = vunpack.c.l.b16 %v2027
  %v2322 = vunpack.c.h.b16 %v2027
  %v2323 = vunpack.c.l.b16 %v2028
  %v2324 = vunpack.c.h.b16 %v2028
  %v2325 = vunpack.c.l.b16 %v2029
  %v2326 = vunpack.c.h.b16 %v2029
  %v2327 = vunpack.c.l.b16 %v2030
  %v2328 = vunpack.c.h.b16 %v2030
  %v2329 = vunpack.c.l.b16 %v2031
  %v2330 = vunpack.c.h.b16 %v2031
  %v2331 = vunpack.c.l.b16 %v2032
  %v2332 = vunpack.c.h.b16 %v2032
  %v2333 = vunpack.c.l.b16 %v2033
  %v2334 = vunpack.c.h.b16 %v2033
  %v2335 = vunpack.c.l.b16 %v2034
  %v2336 = vunpack.c.h.b16 %v2034
  %v2337 = vunpack.c.l.b16 %v2035
  %v2338 = vunpack.c.h.b16 %v2035
  %v2339 = vunpack.c.l.b16 %v2036
  %v2340 = vunpack.c.h.b16 %v2036
  %v2341 = vunpack.c.l.b16 %v2037
  %v2342 = vunpack.c.h.b16 %v2037
  %v2343 = vunpack.c.l.b16 %v2038
  %v2344 = vunpack.c.h.b16 %v2038
  %v2345 = vunpack.c.l.b16 %v2039
  %v2346 = vunpack.c.h.b16 %v2039
  %v2347 = vunpack.c.l.b16 %v2040
  %v2348 = vunpack.c.h.b16 %v2040
  %v2349 = vunpack.c.l.b16 %v2041
  %v2350 = vunpack.c.h.b16 %v2041
  %v2351 = vunpack.c.l.b16 %v2042
  %v2352 = vunpack.c.h.b16 %v2042
  %v2353 = vunpack.c.l.b16 %v2043
  %v2354 = vunpack.c.h.b16 %v2043
  %v2355 = vunpack.c.l.b16 %v2044
  %v2356 = vunpack.c.h.b16 %v2044
  %v2357 = vunpack.c.l.b16 %v2045
  %v2358 = vunpack.c.h.b16 %v2045
  %v2359 = vunpack.c.l.b16 %v2046
  %v2360 = vunpack.c.h.b16 %v2046
  %v2361 = vunpack.c.l.b16 %v2047
  %v2362 = vunpack.c.h.b16 %v2047
  %v2363 = vunpack.c.l.b16 %v2048
  %v2364 = vunpack.c.h.b16 %v2048
  %v2365 = vunpack.c.l.b16 %v2049
  %v2366 = vunpack.c.h.b16 %v2049
  %v2367 = vunpack.c.l.b16 %v2050
  %v2368 = vunpack.c.h.b16 %v2050
  %v2369 = vunpack.c.l.b16 %v2051
  %v2370 = vunpack.c.h.b16 %v2051
  %v2371 = vunpack.c.l.b16 %v2052
  %v2372 = vunpack.c.h.b16 %v2052
  %v2373 = vunpack.c.l.b16 %v2053
  %v2374 = vunpack.c.h.b16 %v2053
  %v2375 = vunpack.c.l.b16 %v2054
  %v2376 = vunpack.c.h.b16 %v2054
  %v2377 = vunpack.c.l.b16 %v2055
  %v2378 = vunpack.c.h.b16 %v2055
  %v2379 = vunpack.c.l.b16 %v2056
  %v2380 = vunpack.c.h.b16 %v2056
  %v2381 = vunpack.c.l.b16 %v2057
  %v2382 = vunpack.c.h.b16 %v2057
  %v2383 = vunpack.c.l.b16 %v2058
  %v2384 = vunpack.c.h.b16 %v2058
  %v2385 = vunpack.c.l.b16 %v2059
  %v2386 = vunpack.c.h.b16 %v2059
  %v2387 = vunpack.c.l.b16 %v2060
  %v2388 = vunpack.c.h.b16 %v2060
  %v2389 = vunpack.c.l.b16 %v2061
  %v2390 = vunpack.c.h.b16 %v2061
  %v2391 = vunpack.c.l.b16 %v2062
  %v2392 = vunpack.c.h.b16 %v2062
  %v2393 = vunpack.c.l.b16 %v2063
  %v2394 = vunpack.c.h.b16 %v2063
  %v2395 = vunpack.c.l.b16 %v2064
  %v2396 = vunpack.c.h.b16 %v2064
  %v2397 = vunpack.c.l.b16 %v2065
  %v2398 = vunpack.c.h.b16 %v2065
  %v2399 = vunpack.c.l.b16 %v2066
  %v2400 = vunpack.c.h.b16 %v2066
  %v2401 = vunpack.c.l.b16 %v2067
  %v2402 = vunpack.c.h.b16 %v2067
  %v2403 = vunpack.c.l.b16 %v2068
  %v2404 = vunpack.c.h.b16 %v2068
  %v2405 = vunpack.c.l.b16 %v2069
  %v2406 = vunpack.c.h.b16 %v2069
  %v2407 = vunpack.c.l.b16 %v2070
  %v2408 = vunpack.c.h.b16 %v2070
  %v2409 = vunpack.c.l.b16 %v2071
  %v2410 = vunpack.c.h.b16 %v2071
  %v2411 = vunpack.c.l.b16 %v2072
  %v2412 = vunpack.c.h.b16 %v2072
  %v2413 = vunpack.c.l.b16 %v2073
  %v2414 = vunpack.c.h.b16 %v2073
  %v2415 = vunpack.c.l.b16 %v2074
  %v2416 = vunpack.c.h.b16 %v2074
  %v2417 = vunpack.c.l.b16 %v2075
  %v2418 = vunpack.c.h.b16 %v2075
  %v2419 = vunpack.c.l.b16 %v2076
  %v2420 = vunpack.c.h.b16 %v2076
  %v2421 = vunpack.c.l.b16 %v2077
  %v2422 = vunpack.c.h.b16 %v2077
  %v2423 = vunpack.c.l.b16 %v2078
  %v2424 = vunpack.c.h.b16 %v2078
  %v2425 = vunpack.c.l.b16 %v2079
  %v2426 = vunpack.c.h.b16 %v2079
  %v2427 = vunpack.c.l.b16 %v2080
  %v2428 = vunpack.c.h.b16 %v2080
  %v2429 = vunpack.c.l.b16 %v2081
  %v2430 = vunpack.c.h.b16 %v2081
  %v2431 = vunpack.c.l.b16 %v2082
  %v2432 = vunpack.c.h.b16 %v2082
  %v2433 = vunpack.c.l.b16 %v2083
  %v2434 = vunpack.c.h.b16 %v2083
  %v2435 = vunpack.c.l.b16 %v2084
  %v2436 = vunpack.c.h.b16 %v2084
  %v2437 = vunpack.c.l.b16 %v2085
  %v2438 = vunpack.c.h.b16 %v2085
  %v2439 = vunpack.c.l.b16 %v2086
  %v2440 = vunpack.c.h.b16 %v2086
  %v2441 = vunpack.c.l.b16 %v2087
  %v2442 = vunpack.c.h.b16 %v2087
  %v2443 = vunpack.c.l.b16 %v2088
  %v2444 = vunpack.c.h.b16 %v2088
  %v2445 = vunpack.c.l.b16 %v2089
  %v2446 = vunpack.c.h.b16 %v2089
  %v2447 = vunpack.c.l.b16 %v2090
  %v2448 = vunpack.c.h.b16 %v2090
  %v2449 = vunpack.c.l.b16 %v2091
  %v2450 = vunpack.c.h.b16 %v2091
  %v2451 = vunpack.c.l.b16 %v2092
  %v2452 = vunpack.c.h.b16 %v2092
  %v2453 = vunpack.c.l.b16 %v2093
  %v2454 = vunpack.c.h.b16 %v2093
  %v2455 = vunpack.c.l.b16 %v2094
  %v2456 = vunpack.c.h.b16 %v2094
  %v2457 = vunpack.c.l.b16 %v2095
  %v2458 = vunpack.c.h.b16 %v2095
  %v2459 = vunpack.c.l.b16 %v2096
  %v2460 = vunpack.c.h.b16 %v2096
  %v2461 = vunpack.c.l.b16 %v2097
  %v2462 = vunpack.c.h.b16 %v2097
  %v2463 = vunpack.c.l.b16 %v2098
  %v2464 = vunpack.c.h.b16 %v2098
  %v2465 = vunpack.c.l.b16 %v2099
  %v2466 = vunpack.c.h.b16 %v2099
  %v2467 = vunpack.c.l.b16 %v2100
  %v2468 = vunpack.c.h.b16 %v2100
  %v2469 = vunpack.c.l.b16 %v2101
  %v2470 = vunpack.c.h.b16 %v2101
  %v2471 = vunpack.c.l.b16 %v2102
  %v2472 = vunpack.c.h.b16 %v2102
  %v2473 = vunpack.c.l.b16 %v2103
  %v2474 = vunpack.c.h.b16 %v2103
  %v2475 = vunpack.c.l.b16 %v2104
  %v2476 = vunpack.c.h.b16 %v2104
  %v2477 = vunpack.c.l.b16 %v2105
  %v2478 = vunpack.c.h.b16 %v2105
  %v2479 = vunpack.c.l.b16 %v2106
  %v2480 = vunpack.c.h.b16 %v2106
  %v2481 = vunpack.c.l.b16 %v2107
  %v2482 = vunpack.c.h.b16 %v2107
  %v2483 = vunpack.c.l.b16 %v2108
  %v2484 = vunpack.c.h.b16 %v2108
  %v2485 = vunpack.c.l.b16 %v2109
  %v2486 = vunpack.c.h.b16 %v2109
  %v2487 = vunpack.c.l.b16 %v2110
  %v2488 = vunpack.c.h.b16 %v2110
  %v2489 = vunpack.c.l.b16 %v2111
  %v2490 = vunpack.c.h.b16 %v2111
  %v2491 = vunpack.c.l.b16 %v2112
  %v2492 = vunpack.c.h.b16 %v2112
  %v2493 = vunpack.c.l.b16 %v2113
  %v2494 = vunpack.c.h.b16 %v2113
  %v2495 = vunpack.c.l.b16 %v2114
  %v2496 = vunpack.c.h.b16 %v2114
  %v2497 = vunpack.c.l.b16 %v2115
  %v2498 = vunpack.c.h.b16 %v2115
  %v2499 = vunpack.c.l.b16 %v2116
  %v2500 = vunpack.c.h.b16 %v2116
  %v2501 = vunpack.c.l.b16 %v2117
  %v2502 = vunpack.c.h.b16 %v2117
  %v2503 = vunpack.c.l.b16 %v2118
  %v2504 = vunpack.c.h.b16 %v2118
  %v2505 = vunpack.c.l.b16 %v2119
  %v2506 = vunpack.c.h.b16 %v2119
  %v2507 = vunpack.c.l.b16 %v2120
  %v2508 = vunpack.c.h.b16 %v2120
  %v2509 = vunpack.c.l.b16 %v2121
  %v2510 = vunpack.c.h.b16 %v2121
  %v2511 = vunpack.c.l.b16 %v2122
  %v2512 = vunpack.c.h.b16 %v2122
  %v2513 = vunpack.c.l.b16 %v2123
  %v2514 = vunpack.c.h.b16 %v2123
  %v2515 = vunpack.c.l.b16 %v2124
  %v2516 = vunpack.c.h.b16 %v2124
  %v2517 = vunpack.c.l.b16 %v2125
  %v2518 = vunpack.c.h.b16 %v2125
  %v2519 = vunpack.c.l.b16 %v2126
  %v2520 = vunpack.c.h.b16 %v2126
  %v2521 = vunpack.c.l.b16 %v2127
  %v2522 = vunpack.c.h.b16 %v2127
  %v2523 = vunpack.c.l.b16 %v2128
  %v2524 = vunpack.c.h.b16 %v2128
  %v2525 = vunpack.c.l.b16 %v2129
  %v2526 = vunpack.c.h.b16 %v2129
  %v2527 = vunpack.c.l.b16 %v2130
  %v2528 = vunpack.c.h.b16 %v2130
  %v2529 = vunpack.c.l.b16 %v2131
  %v2530 = vunpack.c.h.b16 %v2131
  %v2531 = vunpack.c.l.b16 %v2132
  %v2532 = vunpack.c.h.b16 %v2132
  %v2533 = vunpack.c.l.b16 %v2133
  %v2534 = vunpack.c.h.b16 %v2133
  %v2535 = vunpack.c.l.b16 %v2134
  %v2536 = vunpack.c.h.b16 %v2134
  %v2537 = vpack.c.b16 %v2289, %v2281
  %v2538 = vpack.c.b16 %v2290, %v2282
  %v2539 = vpack.c.b16 %v2291, %v2283
  %v2540 = vpack.c.b16 %v2292, %v2284
  %v2541 = vpack.c.b16 %v2293, %v2285
  %v2542 = vpack.c.b16 %v2294, %v2286
  %v2543 = vpack.c.b16 %v2295, %v2287
  %v2544 = vpack.c.b16 %v2296, %v2288
  %v2545 = vpack.c.b16 %v2305, %v2297
  %v2546 = vpack.c.b16 %v2306, %v2298
  %v2547 = vpack.c.b16 %v2307, %v2299
  %v2548 = vpack.c.b16 %v2308, %v2300
  %v2549 = vpack.c.b16 %v2309, %v2301
  %v2550 = vpack.c.b16 %v2310, %v2302
  %v2551 = vpack.c.b16 %v2311, %v2303
  %v2552 = vpack.c.b16 %v2312, %v2304
  %v2553 = vpack.c.b16 %v2321, %v2313
  %v2554 = vpack.c.b16 %v2322, %v2314
  %v2555 = vpack.c.b16 %v2323, %v2315
  %v2556 = vpack.c.b16 %v2324, %v2316
  %v2557 = vpack.c.b16 %v2325, %v2317
  %v2558 = vpack.c.b16 %v2326, %v2318
  %v2559 = vpack.c.b16 %v2327, %v2319
  %v2560 = vpack.c.b16 %v2328, %v2320
  %v2561 = vpack.c.b16 %v2337, %v2329
  %v2562 = vpack.c.b16 %v2338, %v2330
  %v2563 = vpack.c.b16 %v2339, %v2331
  %v2564 = vpack.c.b16 %v2340, %v2332
  %v2565 = vpack.c.b16 %v2341, %v2333
  %v2566 = vpack.c.b16 %v2342, %v2334
  %v2567 = vpack.c.b16 %v2343, %v2335
  %v2568 = vpack.c.b16 %v2344, %v2336
  %v2569 = vpack.c.b16 %v2353, %v2345
  %v2570 = vpack.c.b16 %v2354, %v2346
  %v2571 = vpack.c.b16 %v2355, %v2347
  %v2572 = vpack.c.b16 %v2356, %v2348
  %v2573 = vpack.c.b16 %v2357, %v2349
  %v2574 = vpack.c.b16 %v2358, %v2350
  %v2575 = vpack.c.b16 %v2359, %v2351
  %v2576 = vpack.c.b16 %v2360, %v2352
  %v2577 = vpack.c.b16 %v2369, %v2361
  %v2578 = vpack.c.b16 %v2370, %v2362
  %v2579 = vpack.c.b16 %v2371, %v2363
  %v2580 = vpack.c.b16 %v2372, %v2364
  %v2581 = vpack.c.b16 %v2373, %v2365
  %v2582 = vpack.c.b16 %v2374, %v2366
  %v2583 = vpack.c.b16 %v2375, %v2367
  %v2584 = vpack.c.b16 %v2376, %v2368
  %v2585 = vpack.c.b16 %v2385, %v2377
  %v2586 = vpack.c.b16 %v2386, %v2378
  %v2587 = vpack.c.b16 %v2387, %v2379
  %v2588 = vpack.c.b16 %v2388, %v2380
  %v2589 = vpack.c.b16 %v2389, %v2381
  %v2590 = vpack.c.b16 %v2390, %v2382
  %v2591 = vpack.c.b16 %v2391, %v2383
  %v2592 = vpack.c.b16 %v2392, %v2384
  %v2593 = vpack.c.b16 %v2401, %v2393
  %v2594 = vpack.c.b16 %v2402, %v2394
  %v2595 = vpack.c.b16 %v2403, %v2395
  %v2596 = vpack.c.b16 %v2404, %v2396
  %v2597 = vpack.c.b16 %v2405, %v2397
  %v2598 = vpack.c.b16 %v2406, %v2398
  %v2599 = vpack.c.b16 %v2407, %v2399
  %v2600 = vpack.c.b16 %v2408, %v2400
  %v2601 = vpack.c.b16 %v2417, %v2409
  %v2602 = vpack.c.b16 %v2418, %v2410
  %v2603 = vpack.c.b16 %v2419, %v2411
  %v2604 = vpack.c.b16 %v2420, %v2412
  %v2605 = vpack.c.b16 %v2421, %v2413
  %v2606 = vpack.c.b16 %v2422, %v2414
  %v2607 = vpack.c.b16 %v2423, %v2415
  %v2608 = vpack.c.b16 %v2424, %v2416
  %v2609 = vpack.c.b16 %v2433, %v2425
  %v2610 = vpack.c.b16 %v2434, %v2426
  %v2611 = vpack.c.b16 %v2435, %v2427
  %v2612 = vpack.c.b16 %v2436, %v2428
  %v2613 = vpack.c.b16 %v2437, %v2429
  %v2614 = vpack.c.b16 %v2438, %v2430
  %v2615 = vpack.c.b16 %v2439, %v2431
  %v2616 = vpack.c.b16 %v2440, %v2432
  %v2617 = vpack.c.b16 %v2449, %v2441
  %v2618 = vpack.c.b16 %v2450, %v2442
  %v2619 = vpack.c.b16 %v2451, %v2443
  %v2620 = vpack.c.b16 %v2452, %v2444
  %v2621 = vpack.c.b16 %v2453, %v2445
  %v2622 = vpack.c.b16 %v2454, %v2446
  %v2623 = vpack.c.b16 %v2455, %v2447
  %v2624 = vpack.c.b16 %v2456, %v2448
  %v2625 = vpack.c.b16 %v2465, %v2457
  %v2626 = vpack.c.b16 %v2466, %v2458
  %v2627 = vpack.c.b16 %v2467, %v2459
  %v2628 = vpack.c.b16 %v2468, %v2460
  %v2629 = vpack.c.b16 %v2469, %v2461
  %v2630 = vpack.c.b16 %v2470, %v2462
  %v2631 = vpack.c.b16 %v2471, %v2463
  %v2632 = vpack.c.b16 %v2472, %v2464
  %v2633 = vpack.c.b16 %v2481, %v2473
  %v2634 = vpack.c.b16 %v2482, %v2474
  %v2635 = vpack.c.b16 %v2483, %v2475
  %v2636 = vpack.c.b16 %v2484, %v2476
  %v2637 = vpack.c.b16 %v2485, %v2477
  %v2638 = vpack.c.b16 %v2486, %v2478
  %v2639 = vpack.c.b16 %v2487, %v2479
  %v2640 = vpack.c.b16 %v2488, %v2480
  %v2641 = vpack.c.b16 %v2497, %v2489
  %v2642 = vpack.c.b16 %v2498, %v2490
  %v2643 = vpack.c.b16 %v2499, %v2491
  %v2644 = vpack.c.b16 %v2500, %v2492
  %v2645 = vpack.c.b16 %v2501, %v2493
  %v2646 = vpack.c.b16 %v2502, %v2494
  %v2647 = vpack.c.b16 %v2503, %v2495
  %v2648 = vpack.c.b16 %v2504, %v2496
  %v2649 = vpack.c.b16 %v2513, %v2505
  %v2650 = vpack.c.b16 %v2514, %v2506
  %v2651 = vpack.c.b16 %v2515, %v2507
  %v2652 = vpack.c.b16 %v2516, %v2508
  %v2653 = vpack.c.b16 %v2517, %v2509
  %v2654 = vpack.c.b16 %v2518, %v2510
  %v2655 = vpack.c.b16 %v2519, %v2511
  %v2656 = vpack.c.b16 %v2520, %v2512
  %v2657 = vpack.c.b16 %v2529, %v2521
  %v2658 = vpack.c.b16 %v2530, %v2522
  %v2659 = vpack.c.b16 %v2531, %v2523
  %v2660 = vpack.c.b16 %v2532, %v2524
  %v2661 = vpack.c.b16 %v2533, %v2525
  %v2662 = vpack.c.b16 %v2534, %v2526
  %v2663 = vpack.c.b16 %v2535, %v2527
  %v2664 = vpack.c.b16 %v2536, %v2528
  %2793 = vmatpush.bf16.msra.mxu0 %v2593
  %2794 = vmatpush.bf16.msra.mxu0 %v2585
  %2795 = vmatpush.bf16.msra.mxu0 %v2577
  %2796 = vmatpush.bf16.msra.mxu0 %v2569
  %2797 = vmatpush.bf16.msra.mxu0 %v2561
  %2798 = vmatpush.bf16.msra.mxu0 %v2553
  %2799 = vmatpush.bf16.msra.mxu0 %v2545
  %2800 = vmatpush.bf16.msra.mxu0 %v2537
  %2801 = vmatmul.bf16.gmra.mxu0 %v2001
  %v2802 = vpop.f32.mrf.mxu0
  %v2803 = vadd.f32 %v2137, %v2802
  %v2804 = vpop.f32.mrf.mxu0
  %v2805 = vadd.f32 %v2137, %v2804
  %2806 = vmatmul.bf16.gmra.mxu0 %v2003
  %v2807 = vpop.f32.mrf.mxu0
  %v2808 = vadd.f32 %v2137, %v2807
  %v2809 = vpop.f32.mrf.mxu0
  %v2810 = vadd.f32 %v2137, %v2809
  %2811 = vmatmul.bf16.gmra.mxu0 %v2005
  %v2812 = vpop.f32.mrf.mxu0
  %v2813 = vadd.f32 %v2137, %v2812
  %v2814 = vpop.f32.mrf.mxu0
  %2815 = vdwg.mxu0
  %2816 = vmatpush.bf16.msra.mxu0 %v2657
  %2817 = vmatpush.bf16.msra.mxu0 %v2649
  %2818 = vmatpush.bf16.msra.mxu0 %v2641
  %2819 = vmatpush.bf16.msra.mxu0 %v2633
  %2820 = vmatpush.bf16.msra.mxu0 %v2625
  %2821 = vmatpush.bf16.msra.mxu0 %v2617
  %2822 = vmatpush.bf16.msra.mxu0 %v2609
  %2823 = vmatpush.bf16.msra.mxu0 %v2601
  %2824 = vmatmul.bf16.gmra.mxu0 %v2002
  %v2825 = vpop.f32.mrf.mxu0
  %v2826 = vadd.f32 %v2803, %v2825
  %v2827 = vpop.f32.mrf.mxu0
  %v2828 = vadd.f32 %v2805, %v2827
  %2829 = vmatmul.bf16.gmra.mxu0 %v2004
  %v2830 = vpop.f32.mrf.mxu0
  %v2831 = vadd.f32 %v2808, %v2830
  %v2832 = vpop.f32.mrf.mxu0
  %v2833 = vadd.f32 %v2810, %v2832
  %2834 = vmatmul.bf16.gmra.mxu0 %v2006
  %v2835 = vpop.f32.mrf.mxu0
  %v2836 = vadd.f32 %v2813, %v2835
  %v2837 = vpop.f32.mrf.mxu0
  %2838 = vdwg.mxu0
  %2839 = vmatpush.bf16.msra.mxu0 %v2594
  %2840 = vmatpush.bf16.msra.mxu0 %v2586
  %2841 = vmatpush.bf16.msra.mxu0 %v2578
  %2842 = vmatpush.bf16.msra.mxu0 %v2570
  %2843 = vmatpush.bf16.msra.mxu0 %v2562
  %2844 = vmatpush.bf16.msra.mxu0 %v2554
  %2845 = vmatpush.bf16.msra.mxu0 %v2546
  %2846 = vmatpush.bf16.msra.mxu0 %v2538
  %2847 = vmatmul.bf16.gmra.mxu0 %v2001
  %v2848 = vpop.f32.mrf.mxu0
  %v2849 = vadd.f32 %v2138, %v2848
  %v2850 = vpop.f32.mrf.mxu0
  %v2851 = vadd.f32 %v2138, %v2850
  %2852 = vmatmul.bf16.gmra.mxu0 %v2003
  %v2853 = vpop.f32.mrf.mxu0
  %v2854 = vadd.f32 %v2138, %v2853
  %v2855 = vpop.f32.mrf.mxu0
  %v2856 = vadd.f32 %v2138, %v2855
  %2857 = vmatmul.bf16.gmra.mxu0 %v2005
  %v2858 = vpop.f32.mrf.mxu0
  %v2859 = vadd.f32 %v2138, %v2858
  %v2860 = vpop.f32.mrf.mxu0
  %2861 = vdwg.mxu0
  %2862 = vmatpush.bf16.msra.mxu0 %v2658
  %2863 = vmatpush.bf16.msra.mxu0 %v2650
  %2864 = vmatpush.bf16.msra.mxu0 %v2642
  %2865 = vmatpush.bf16.msra.mxu0 %v2634
  %2866 = vmatpush.bf16.msra.mxu0 %v2626
  %2867 = vmatpush.bf16.msra.mxu0 %v2618
  %2868 = vmatpush.bf16.msra.mxu0 %v2610
  %2869 = vmatpush.bf16.msra.mxu0 %v2602
  %2870 = vmatmul.bf16.gmra.mxu0 %v2002
  %v2871 = vpop.f32.mrf.mxu0
  %v2872 = vadd.f32 %v2849, %v2871
  %v2873 = vpop.f32.mrf.mxu0
  %v2874 = vadd.f32 %v2851, %v2873
  %2875 = vmatmul.bf16.gmra.mxu0 %v2004
  %v2876 = vpop.f32.mrf.mxu0
  %v2877 = vadd.f32 %v2854, %v2876
  %v2878 = vpop.f32.mrf.mxu0
  %v2879 = vadd.f32 %v2856, %v2878
  %2880 = vmatmul.bf16.gmra.mxu0 %v2006
  %v2881 = vpop.f32.mrf.mxu0
  %v2882 = vadd.f32 %v2859, %v2881
  %v2883 = vpop.f32.mrf.mxu0
  %2884 = vdwg.mxu0
  %2885 = vmatpush.bf16.msra.mxu0 %v2595
  %2886 = vmatpush.bf16.msra.mxu0 %v2587
  %2887 = vmatpush.bf16.msra.mxu0 %v2579
  %2888 = vmatpush.bf16.msra.mxu0 %v2571
  %2889 = vmatpush.bf16.msra.mxu0 %v2563
  %2890 = vmatpush.bf16.msra.mxu0 %v2555
  %2891 = vmatpush.bf16.msra.mxu0 %v2547
  %2892 = vmatpush.bf16.msra.mxu0 %v2539
  %2893 = vmatmul.bf16.gmra.mxu0 %v2001
  %v2894 = vpop.f32.mrf.mxu0
  %v2895 = vadd.f32 %v2139, %v2894
  %v2896 = vpop.f32.mrf.mxu0
  %v2897 = vadd.f32 %v2139, %v2896
  %2898 = vmatmul.bf16.gmra.mxu0 %v2003
  %v2899 = vpop.f32.mrf.mxu0
  %v2900 = vadd.f32 %v2139, %v2899
  %v2901 = vpop.f32.mrf.mxu0
  %v2902 = vadd.f32 %v2139, %v2901
  %2903 = vmatmul.bf16.gmra.mxu0 %v2005
  %v2904 = vpop.f32.mrf.mxu0
  %v2905 = vadd.f32 %v2139, %v2904
  %v2906 = vpop.f32.mrf.mxu0
  %2907 = vdwg.mxu0
  %2908 = vmatpush.bf16.msra.mxu0 %v2659
  %2909 = vmatpush.bf16.msra.mxu0 %v2651
  %2910 = vmatpush.bf16.msra.mxu0 %v2643
  %2911 = vmatpush.bf16.msra.mxu0 %v2635
  %2912 = vmatpush.bf16.msra.mxu0 %v2627
  %2913 = vmatpush.bf16.msra.mxu0 %v2619
  %2914 = vmatpush.bf16.msra.mxu0 %v2611
  %2915 = vmatpush.bf16.msra.mxu0 %v2603
  %2916 = vmatmul.bf16.gmra.mxu0 %v2002
  %v2917 = vpop.f32.mrf.mxu0
  %v2918 = vadd.f32 %v2895, %v2917
  %v2919 = vpop.f32.mrf.mxu0
  %v2920 = vadd.f32 %v2897, %v2919
  %2921 = vmatmul.bf16.gmra.mxu0 %v2004
  %v2922 = vpop.f32.mrf.mxu0
  %v2923 = vadd.f32 %v2900, %v2922
  %v2924 = vpop.f32.mrf.mxu0
  %v2925 = vadd.f32 %v2902, %v2924
  %2926 = vmatmul.bf16.gmra.mxu0 %v2006
  %v2927 = vpop.f32.mrf.mxu0
  %v2928 = vadd.f32 %v2905, %v2927
  %v2929 = vpop.f32.mrf.mxu0
  %2930 = vdwg.mxu0
  %2931 = vmatpush.bf16.msra.mxu0 %v2596
  %2932 = vmatpush.bf16.msra.mxu0 %v2588
  %2933 = vmatpush.bf16.msra.mxu0 %v2580
  %2934 = vmatpush.bf16.msra.mxu0 %v2572
  %2935 = vmatpush.bf16.msra.mxu0 %v2564
  %2936 = vmatpush.bf16.msra.mxu0 %v2556
  %2937 = vmatpush.bf16.msra.mxu0 %v2548
  %2938 = vmatpush.bf16.msra.mxu0 %v2540
  %2939 = vmatmul.bf16.gmra.mxu0 %v2001
  %v2940 = vpop.f32.mrf.mxu0
  %v2941 = vadd.f32 %v2140, %v2940
  %v2942 = vpop.f32.mrf.mxu0
  %v2943 = vadd.f32 %v2140, %v2942
  %2944 = vmatmul.bf16.gmra.mxu0 %v2003
  %v2945 = vpop.f32.mrf.mxu0
  %v2946 = vadd.f32 %v2140, %v2945
  %v2947 = vpop.f32.mrf.mxu0
  %v2948 = vadd.f32 %v2140, %v2947
  %2949 = vmatmul.bf16.gmra.mxu0 %v2005
  %v2950 = vpop.f32.mrf.mxu0
  %v2951 = vadd.f32 %v2140, %v2950
  %v2952 = vpop.f32.mrf.mxu0
  %2953 = vdwg.mxu0
  %2954 = vmatpush.bf16.msra.mxu0 %v2660
  %2955 = vmatpush.bf16.msra.mxu0 %v2652
  %2956 = vmatpush.bf16.msra.mxu0 %v2644
  %2957 = vmatpush.bf16.msra.mxu0 %v2636
  %2958 = vmatpush.bf16.msra.mxu0 %v2628
  %2959 = vmatpush.bf16.msra.mxu0 %v2620
  %2960 = vmatpush.bf16.msra.mxu0 %v2612
  %2961 = vmatpush.bf16.msra.mxu0 %v2604
  %2962 = vmatmul.bf16.gmra.mxu0 %v2002
  %v2963 = vpop.f32.mrf.mxu0
  %v2964 = vadd.f32 %v2941, %v2963
  %v2965 = vpop.f32.mrf.mxu0
  %v2966 = vadd.f32 %v2943, %v2965
  %2967 = vmatmul.bf16.gmra.mxu0 %v2004
  %v2968 = vpop.f32.mrf.mxu0
  %v2969 = vadd.f32 %v2946, %v2968
  %v2970 = vpop.f32.mrf.mxu0
  %v2971 = vadd.f32 %v2948, %v2970
  %2972 = vmatmul.bf16.gmra.mxu0 %v2006
  %v2973 = vpop.f32.mrf.mxu0
  %v2974 = vadd.f32 %v2951, %v2973
  %v2975 = vpop.f32.mrf.mxu0
  %2976 = vdwg.mxu0
  %2977 = vmatpush.bf16.msra.mxu0 %v2597
  %2978 = vmatpush.bf16.msra.mxu0 %v2589
  %2979 = vmatpush.bf16.msra.mxu0 %v2581
  %2980 = vmatpush.bf16.msra.mxu0 %v2573
  %2981 = vmatpush.bf16.msra.mxu0 %v2565
  %2982 = vmatpush.bf16.msra.mxu0 %v2557
  %2983 = vmatpush.bf16.msra.mxu0 %v2549
  %2984 = vmatpush.bf16.msra.mxu0 %v2541
  %2985 = vmatmul.bf16.gmra.mxu0 %v2001
  %v2986 = vpop.f32.mrf.mxu0
  %v2987 = vadd.f32 %v2141, %v2986
  %v2988 = vpop.f32.mrf.mxu0
  %v2989 = vadd.f32 %v2141, %v2988
  %2990 = vmatmul.bf16.gmra.mxu0 %v2003
  %v2991 = vpop.f32.mrf.mxu0
  %v2992 = vadd.f32 %v2141, %v2991
  %v2993 = vpop.f32.mrf.mxu0
  %v2994 = vadd.f32 %v2141, %v2993
  %2995 = vmatmul.bf16.gmra.mxu0 %v2005
  %v2996 = vpop.f32.mrf.mxu0
  %v2997 = vadd.f32 %v2141, %v2996
  %v2998 = vpop.f32.mrf.mxu0
  %2999 = vdwg.mxu0
  %3000 = vmatpush.bf16.msra.mxu0 %v2661
  %3001 = vmatpush.bf16.msra.mxu0 %v2653
  %3002 = vmatpush.bf16.msra.mxu0 %v2645
  %3003 = vmatpush.bf16.msra.mxu0 %v2637
  %3004 = vmatpush.bf16.msra.mxu0 %v2629
  %3005 = vmatpush.bf16.msra.mxu0 %v2621
  %3006 = vmatpush.bf16.msra.mxu0 %v2613
  %3007 = vmatpush.bf16.msra.mxu0 %v2605
  %3008 = vmatmul.bf16.gmra.mxu0 %v2002
  %v3009 = vpop.f32.mrf.mxu0
  %v3010 = vadd.f32 %v2987, %v3009
  %v3011 = vpop.f32.mrf.mxu0
  %v3012 = vadd.f32 %v2989, %v3011
  %3013 = vmatmul.bf16.gmra.mxu0 %v2004
  %v3014 = vpop.f32.mrf.mxu0
  %v3015 = vadd.f32 %v2992, %v3014
  %v3016 = vpop.f32.mrf.mxu0
  %v3017 = vadd.f32 %v2994, %v3016
  %3018 = vmatmul.bf16.gmra.mxu0 %v2006
  %v3019 = vpop.f32.mrf.mxu0
  %v3020 = vadd.f32 %v2997, %v3019
  %v3021 = vpop.f32.mrf.mxu0
  %3022 = vdwg.mxu0
  %3023 = vmatpush.bf16.msra.mxu0 %v2598
  %3024 = vmatpush.bf16.msra.mxu0 %v2590
  %3025 = vmatpush.bf16.msra.mxu0 %v2582
  %3026 = vmatpush.bf16.msra.mxu0 %v2574
  %3027 = vmatpush.bf16.msra.mxu0 %v2566
  %3028 = vmatpush.bf16.msra.mxu0 %v2558
  %3029 = vmatpush.bf16.msra.mxu0 %v2550
  %3030 = vmatpush.bf16.msra.mxu0 %v2542
  %3031 = vmatmul.bf16.gmra.mxu0 %v2001
  %v3032 = vpop.f32.mrf.mxu0
  %v3033 = vadd.f32 %v2142, %v3032
  %v3034 = vpop.f32.mrf.mxu0
  %v3035 = vadd.f32 %v2142, %v3034
  %3036 = vmatmul.bf16.gmra.mxu0 %v2003
  %v3037 = vpop.f32.mrf.mxu0
  %v3038 = vadd.f32 %v2142, %v3037
  %v3039 = vpop.f32.mrf.mxu0
  %v3040 = vadd.f32 %v2142, %v3039
  %3041 = vmatmul.bf16.gmra.mxu0 %v2005
  %v3042 = vpop.f32.mrf.mxu0
  %v3043 = vadd.f32 %v2142, %v3042
  %v3044 = vpop.f32.mrf.mxu0
  %3045 = vdwg.mxu0
  %3046 = vmatpush.bf16.msra.mxu0 %v2662
  %3047 = vmatpush.bf16.msra.mxu0 %v2654
  %3048 = vmatpush.bf16.msra.mxu0 %v2646
  %3049 = vmatpush.bf16.msra.mxu0 %v2638
  %3050 = vmatpush.bf16.msra.mxu0 %v2630
  %3051 = vmatpush.bf16.msra.mxu0 %v2622
  %3052 = vmatpush.bf16.msra.mxu0 %v2614
  %3053 = vmatpush.bf16.msra.mxu0 %v2606
  %3054 = vmatmul.bf16.gmra.mxu0 %v2002
  %v3055 = vpop.f32.mrf.mxu0
  %v3056 = vadd.f32 %v3033, %v3055
  %v3057 = vpop.f32.mrf.mxu0
  %v3058 = vadd.f32 %v3035, %v3057
  %3059 = vmatmul.bf16.gmra.mxu0 %v2004
  %v3060 = vpop.f32.mrf.mxu0
  %v3061 = vadd.f32 %v3038, %v3060
  %v3062 = vpop.f32.mrf.mxu0
  %v3063 = vadd.f32 %v3040, %v3062
  %3064 = vmatmul.bf16.gmra.mxu0 %v2006
  %v3065 = vpop.f32.mrf.mxu0
  %v3066 = vadd.f32 %v3043, %v3065
  %v3067 = vpop.f32.mrf.mxu0
  %3068 = vdwg.mxu0
  %3069 = vmatpush.bf16.msra.mxu0 %v2599
  %3070 = vmatpush.bf16.msra.mxu0 %v2591
  %3071 = vmatpush.bf16.msra.mxu0 %v2583
  %3072 = vmatpush.bf16.msra.mxu0 %v2575
  %3073 = vmatpush.bf16.msra.mxu0 %v2567
  %3074 = vmatpush.bf16.msra.mxu0 %v2559
  %3075 = vmatpush.bf16.msra.mxu0 %v2551
  %3076 = vmatpush.bf16.msra.mxu0 %v2543
  %3077 = vmatmul.bf16.gmra.mxu0 %v2001
  %v3078 = vpop.f32.mrf.mxu0
  %v3079 = vadd.f32 %v2143, %v3078
  %v3080 = vpop.f32.mrf.mxu0
  %v3081 = vadd.f32 %v2143, %v3080
  %3082 = vmatmul.bf16.gmra.mxu0 %v2003
  %v3083 = vpop.f32.mrf.mxu0
  %v3084 = vadd.f32 %v2143, %v3083
  %v3085 = vpop.f32.mrf.mxu0
  %v3086 = vadd.f32 %v2143, %v3085
  %3087 = vmatmul.bf16.gmra.mxu0 %v2005
  %v3088 = vpop.f32.mrf.mxu0
  %v3089 = vadd.f32 %v2143, %v3088
  %v3090 = vpop.f32.mrf.mxu0
  %3091 = vdwg.mxu0
  %3092 = vmatpush.bf16.msra.mxu0 %v2663
  %3093 = vmatpush.bf16.msra.mxu0 %v2655
  %3094 = vmatpush.bf16.msra.mxu0 %v2647
  %3095 = vmatpush.bf16.msra.mxu0 %v2639
  %3096 = vmatpush.bf16.msra.mxu0 %v2631
  %3097 = vmatpush.bf16.msra.mxu0 %v2623
  %3098 = vmatpush.bf16.msra.mxu0 %v2615
  %3099 = vmatpush.bf16.msra.mxu0 %v2607
  %3100 = vmatmul.bf16.gmra.mxu0 %v2002
  %v3101 = vpop.f32.mrf.mxu0
  %v3102 = vadd.f32 %v3079, %v3101
  %v3103 = vpop.f32.mrf.mxu0
  %v3104 = vadd.f32 %v3081, %v3103
  %3105 = vmatmul.bf16.gmra.mxu0 %v2004
  %v3106 = vpop.f32.mrf.mxu0
  %v3107 = vadd.f32 %v3084, %v3106
  %v3108 = vpop.f32.mrf.mxu0
  %v3109 = vadd.f32 %v3086, %v3108
  %3110 = vmatmul.bf16.gmra.mxu0 %v2006
  %v3111 = vpop.f32.mrf.mxu0
  %v3112 = vadd.f32 %v3089, %v3111
  %v3113 = vpop.f32.mrf.mxu0
  %3114 = vdwg.mxu0
  %3115 = vmatpush.bf16.msra.mxu0 %v2600
  %3116 = vmatpush.bf16.msra.mxu0 %v2592
  %3117 = vmatpush.bf16.msra.mxu0 %v2584
  %3118 = vmatpush.bf16.msra.mxu0 %v2576
  %3119 = vmatpush.bf16.msra.mxu0 %v2568
  %3120 = vmatpush.bf16.msra.mxu0 %v2560
  %3121 = vmatpush.bf16.msra.mxu0 %v2552
  %3122 = vmatpush.bf16.msra.mxu0 %v2544
  %3123 = vmatmul.bf16.gmra.mxu0 %v2001
  %v3124 = vpop.f32.mrf.mxu0
  %v3125 = vadd.f32 %v2144, %v3124
  %v3126 = vpop.f32.mrf.mxu0
  %v3127 = vadd.f32 %v2144, %v3126
  %3128 = vmatmul.bf16.gmra.mxu0 %v2003
  %v3129 = vpop.f32.mrf.mxu0
  %v3130 = vadd.f32 %v2144, %v3129
  %v3131 = vpop.f32.mrf.mxu0
  %v3132 = vadd.f32 %v2144, %v3131
  %3133 = vmatmul.bf16.gmra.mxu0 %v2005
  %v3134 = vpop.f32.mrf.mxu0
  %v3135 = vadd.f32 %v2144, %v3134
  %v3136 = vpop.f32.mrf.mxu0
  %3137 = vdwg.mxu0
  %3138 = vmatpush.bf16.msra.mxu0 %v2664
  %3139 = vmatpush.bf16.msra.mxu0 %v2656
  %3140 = vmatpush.bf16.msra.mxu0 %v2648
  %3141 = vmatpush.bf16.msra.mxu0 %v2640
  %3142 = vmatpush.bf16.msra.mxu0 %v2632
  %3143 = vmatpush.bf16.msra.mxu0 %v2624
  %3144 = vmatpush.bf16.msra.mxu0 %v2616
  %3145 = vmatpush.bf16.msra.mxu0 %v2608
  %3146 = vmatmul.bf16.gmra.mxu0 %v2002
  %v3147 = vpop.f32.mrf.mxu0
  %v3148 = vadd.f32 %v3125, %v3147
  %v3149 = vpop.f32.mrf.mxu0
  %v3150 = vadd.f32 %v3127, %v3149
  %3151 = vmatmul.bf16.gmra.mxu0 %v2004
  %v3152 = vpop.f32.mrf.mxu0
  %v3153 = vadd.f32 %v3130, %v3152
  %v3154 = vpop.f32.mrf.mxu0
  %v3155 = vadd.f32 %v3132, %v3154
  %3156 = vmatmul.bf16.gmra.mxu0 %v2006
  %v3157 = vpop.f32.mrf.mxu0
  %v3158 = vadd.f32 %v3135, %v3157
  %v3159 = vpop.f32.mrf.mxu0
  %3160 = vdwg.mxu0
  %v3161 = vmul.f32 %v2826, 0.5
  %v3162 = vmul.f32 %v2872, 0.5
  %v3163 = vmul.f32 %v2918, 0.5
  %v3164 = vmul.f32 %v2964, 0.5
  %v3165 = vmul.f32 %v3010, 0.5
  %v3166 = vmul.f32 %v3056, 0.5
  %v3167 = vmul.f32 %v3102, 0.5
  %v3168 = vmul.f32 %v3148, 0.5
  %v3169 = vmul.f32 %v2828, 0.5
  %v3170 = vmul.f32 %v2874, 0.5
  %v3171 = vmul.f32 %v2920, 0.5
  %v3172 = vmul.f32 %v2966, 0.5
  %v3173 = vmul.f32 %v3012, 0.5
  %v3174 = vmul.f32 %v3058, 0.5
  %v3175 = vmul.f32 %v3104, 0.5
  %v3176 = vmul.f32 %v3150, 0.5
  %v3177 = vmul.f32 %v2831, 0.5
  %v3178 = vmul.f32 %v2877, 0.5
  %v3179 = vmul.f32 %v2923, 0.5
  %v3180 = vmul.f32 %v2969, 0.5
  %v3181 = vmul.f32 %v3015, 0.5
  %v3182 = vmul.f32 %v3061, 0.5
  %v3183 = vmul.f32 %v3107, 0.5
  %v3184 = vmul.f32 %v3153, 0.5
  %v3185 = vmul.f32 %v2833, 0.5
  %v3186 = vmul.f32 %v2879, 0.5
  %v3187 = vmul.f32 %v2925, 0.5
  %v3188 = vmul.f32 %v2971, 0.5
  %v3189 = vmul.f32 %v3017, 0.5
  %v3190 = vmul.f32 %v3063, 0.5
  %v3191 = vmul.f32 %v3109, 0.5
  %v3192 = vmul.f32 %v3155, 0.5
  %v3193 = vmul.f32 %v2836, 0.5
  %v3194 = vmul.f32 %v2882, 0.5
  %v3195 = vmul.f32 %v2928, 0.5
  %v3196 = vmul.f32 %v2974, 0.5
  %v3197 = vmul.f32 %v3020, 0.5
  %v3198 = vmul.f32 %v3066, 0.5
  %v3199 = vmul.f32 %v3112, 0.5
  %v3200 = vmul.f32 %v3158, 0.5
  %v3201 = vmul.f32 %v2826, 0.70710677
  %v3202 = vmul.f32 %v2872, 0.70710677
  %v3203 = vmul.f32 %v2918, 0.70710677
  %v3204 = vmul.f32 %v2964, 0.70710677
  %v3205 = vmul.f32 %v3010, 0.70710677
  %v3206 = vmul.f32 %v3056, 0.70710677
  %v3207 = vmul.f32 %v3102, 0.70710677
  %v3208 = vmul.f32 %v3148, 0.70710677
  %v3209 = vmul.f32 %v2828, 0.70710677
  %v3210 = vmul.f32 %v2874, 0.70710677
  %v3211 = vmul.f32 %v2920, 0.70710677
  %v3212 = vmul.f32 %v2966, 0.70710677
  %v3213 = vmul.f32 %v3012, 0.70710677
  %v3214 = vmul.f32 %v3058, 0.70710677
  %v3215 = vmul.f32 %v3104, 0.70710677
  %v3216 = vmul.f32 %v3150, 0.70710677
  %v3217 = vmul.f32 %v2831, 0.70710677
  %v3218 = vmul.f32 %v2877, 0.70710677
  %v3219 = vmul.f32 %v2923, 0.70710677
  %v3220 = vmul.f32 %v2969, 0.70710677
  %v3221 = vmul.f32 %v3015, 0.70710677
  %v3222 = vmul.f32 %v3061, 0.70710677
  %v3223 = vmul.f32 %v3107, 0.70710677
  %v3224 = vmul.f32 %v3153, 0.70710677
  %v3225 = vmul.f32 %v2833, 0.70710677
  %v3226 = vmul.f32 %v2879, 0.70710677
  %v3227 = vmul.f32 %v2925, 0.70710677
  %v3228 = vmul.f32 %v2971, 0.70710677
  %v3229 = vmul.f32 %v3017, 0.70710677
  %v3230 = vmul.f32 %v3063, 0.70710677
  %v3231 = vmul.f32 %v3109, 0.70710677
  %v3232 = vmul.f32 %v3155, 0.70710677
  %v3233 = vmul.f32 %v2836, 0.70710677
  %v3234 = vmul.f32 %v2882, 0.70710677
  %v3235 = vmul.f32 %v2928, 0.70710677
  %v3236 = vmul.f32 %v2974, 0.70710677
  %v3237 = vmul.f32 %v3020, 0.70710677
  %v3238 = vmul.f32 %v3066, 0.70710677
  %v3239 = vmul.f32 %v3112, 0.70710677
  %v3240 = vmul.f32 %v3158, 0.70710677
  %v3241 = vand.u32 2147483647, %v3201
  %v3242 = vand.u32 2147483647, %v3202
  %v3243 = vand.u32 2147483647, %v3203
  %v3244 = vand.u32 2147483647, %v3204
  %v3245 = vand.u32 2147483647, %v3205
  %v3246 = vand.u32 2147483647, %v3206
  %v3247 = vand.u32 2147483647, %v3207
  %v3248 = vand.u32 2147483647, %v3208
  %v3249 = vand.u32 2147483647, %v3209
  %v3250 = vand.u32 2147483647, %v3210
  %v3251 = vand.u32 2147483647, %v3211
  %v3252 = vand.u32 2147483647, %v3212
  %v3253 = vand.u32 2147483647, %v3213
  %v3254 = vand.u32 2147483647, %v3214
  %v3255 = vand.u32 2147483647, %v3215
  %v3256 = vand.u32 2147483647, %v3216
  %v3257 = vand.u32 2147483647, %v3217
  %v3258 = vand.u32 2147483647, %v3218
  %v3259 = vand.u32 2147483647, %v3219
  %v3260 = vand.u32 2147483647, %v3220
  %v3261 = vand.u32 2147483647, %v3221
  %v3262 = vand.u32 2147483647, %v3222
  %v3263 = vand.u32 2147483647, %v3223
  %v3264 = vand.u32 2147483647, %v3224
  %v3265 = vand.u32 2147483647, %v3225
  %v3266 = vand.u32 2147483647, %v3226
  %v3267 = vand.u32 2147483647, %v3227
  %v3268 = vand.u32 2147483647, %v3228
  %v3269 = vand.u32 2147483647, %v3229
  %v3270 = vand.u32 2147483647, %v3230
  %v3271 = vand.u32 2147483647, %v3231
  %v3272 = vand.u32 2147483647, %v3232
  %v3273 = vand.u32 2147483647, %v3233
  %v3274 = vand.u32 2147483647, %v3234
  %v3275 = vand.u32 2147483647, %v3235
  %v3276 = vand.u32 2147483647, %v3236
  %v3277 = vand.u32 2147483647, %v3237
  %v3278 = vand.u32 2147483647, %v3238
  %v3279 = vand.u32 2147483647, %v3239
  %v3280 = vand.u32 2147483647, %v3240
  %v3281 = vmul.f32 %v3241, 0.3275911
  %v3282 = vmul.f32 %v3242, 0.3275911
  %v3283 = vmul.f32 %v3243, 0.3275911
  %v3284 = vmul.f32 %v3244, 0.3275911
  %v3285 = vmul.f32 %v3245, 0.3275911
  %v3286 = vmul.f32 %v3246, 0.3275911
  %v3287 = vmul.f32 %v3247, 0.3275911
  %v3288 = vmul.f32 %v3248, 0.3275911
  %v3289 = vmul.f32 %v3249, 0.3275911
  %v3290 = vmul.f32 %v3250, 0.3275911
  %v3291 = vmul.f32 %v3251, 0.3275911
  %v3292 = vmul.f32 %v3252, 0.3275911
  %v3293 = vmul.f32 %v3253, 0.3275911
  %v3294 = vmul.f32 %v3254, 0.3275911
  %v3295 = vmul.f32 %v3255, 0.3275911
  %v3296 = vmul.f32 %v3256, 0.3275911
  %v3297 = vmul.f32 %v3257, 0.3275911
  %v3298 = vmul.f32 %v3258, 0.3275911
  %v3299 = vmul.f32 %v3259, 0.3275911
  %v3300 = vmul.f32 %v3260, 0.3275911
  %v3301 = vmul.f32 %v3261, 0.3275911
  %v3302 = vmul.f32 %v3262, 0.3275911
  %v3303 = vmul.f32 %v3263, 0.3275911
  %v3304 = vmul.f32 %v3264, 0.3275911
  %v3305 = vmul.f32 %v3265, 0.3275911
  %v3306 = vmul.f32 %v3266, 0.3275911
  %v3307 = vmul.f32 %v3267, 0.3275911
  %v3308 = vmul.f32 %v3268, 0.3275911
  %v3309 = vmul.f32 %v3269, 0.3275911
  %v3310 = vmul.f32 %v3270, 0.3275911
  %v3311 = vmul.f32 %v3271, 0.3275911
  %v3312 = vmul.f32 %v3272, 0.3275911
  %v3313 = vmul.f32 %v3273, 0.3275911
  %v3314 = vmul.f32 %v3274, 0.3275911
  %v3315 = vmul.f32 %v3275, 0.3275911
  %v3316 = vmul.f32 %v3276, 0.3275911
  %v3317 = vmul.f32 %v3277, 0.3275911
  %v3318 = vmul.f32 %v3278, 0.3275911
  %v3319 = vmul.f32 %v3279, 0.3275911
  %v3320 = vmul.f32 %v3280, 0.3275911
  %v3321 = vadd.f32 %v3281, 1.0
  %v3322 = vadd.f32 %v3282, 1.0
  %v3323 = vadd.f32 %v3283, 1.0
  %v3324 = vadd.f32 %v3284, 1.0
  %v3325 = vadd.f32 %v3285, 1.0
  %v3326 = vadd.f32 %v3286, 1.0
  %v3327 = vadd.f32 %v3287, 1.0
  %v3328 = vadd.f32 %v3288, 1.0
  %v3329 = vadd.f32 %v3289, 1.0
  %v3330 = vadd.f32 %v3290, 1.0
  %v3331 = vadd.f32 %v3291, 1.0
  %v3332 = vadd.f32 %v3292, 1.0
  %v3333 = vadd.f32 %v3293, 1.0
  %v3334 = vadd.f32 %v3294, 1.0
  %v3335 = vadd.f32 %v3295, 1.0
  %v3336 = vadd.f32 %v3296, 1.0
  %v3337 = vadd.f32 %v3297, 1.0
  %v3338 = vadd.f32 %v3298, 1.0
  %v3339 = vadd.f32 %v3299, 1.0
  %v3340 = vadd.f32 %v3300, 1.0
  %v3341 = vadd.f32 %v3301, 1.0
  %v3342 = vadd.f32 %v3302, 1.0
  %v3343 = vadd.f32 %v3303, 1.0
  %v3344 = vadd.f32 %v3304, 1.0
  %v3345 = vadd.f32 %v3305, 1.0
  %v3346 = vadd.f32 %v3306, 1.0
  %v3347 = vadd.f32 %v3307, 1.0
  %v3348 = vadd.f32 %v3308, 1.0
  %v3349 = vadd.f32 %v3309, 1.0
  %v3350 = vadd.f32 %v3310, 1.0
  %v3351 = vadd.f32 %v3311, 1.0
  %v3352 = vadd.f32 %v3312, 1.0
  %v3353 = vadd.f32 %v3313, 1.0
  %v3354 = vadd.f32 %v3314, 1.0
  %v3355 = vadd.f32 %v3315, 1.0
  %v3356 = vadd.f32 %v3316, 1.0
  %v3357 = vadd.f32 %v3317, 1.0
  %v3358 = vadd.f32 %v3318, 1.0
  %v3359 = vadd.f32 %v3319, 1.0
  %v3360 = vadd.f32 %v3320, 1.0
  %v3361 = vrcp.pop %v3321
  %v3362 = vmul.f32 %v3321, %v3361
  %v3363 = vsub.f32 1.0, %v3362
  %v3364 = vmul.f32 %v3361, %v3363
  %v3365 = vadd.f32 %v3361, %v3364
  %vm3366 = vweird.f32 %v3321
  %vm3367 = vweird.f32 %v3361
  %vm3368 = vmor %vm3366, %vm3367
  %v3369 = vsel %vm3368, %v3361, %v3365
  %v3370 = vand.u32 2147483647, %v3321
  %vm3371 = vcmp.eq.f32.partialorder %v3370, 8.507059e+37
  %v3372 = vand.u32 %v3321, 2147483648
  %v3373 = vor.u32 1.1754944e-38, %v3372
  %v3374 = vsel %vm3371, %v3373, %v3369
  %v3375 = vmul.f32 1.0, %v3374
  %v3376 = vrcp.pop %v3322
  %v3377 = vmul.f32 %v3322, %v3376
  %v3378 = vsub.f32 1.0, %v3377
  %v3379 = vmul.f32 %v3376, %v3378
  %v3380 = vadd.f32 %v3376, %v3379
  %vm3381 = vweird.f32 %v3322
  %vm3382 = vweird.f32 %v3376
  %vm3383 = vmor %vm3381, %vm3382
  %v3384 = vsel %vm3383, %v3376, %v3380
  %v3385 = vand.u32 2147483647, %v3322
  %vm3386 = vcmp.eq.f32.partialorder %v3385, 8.507059e+37
  %v3387 = vand.u32 %v3322, 2147483648
  %v3388 = vor.u32 1.1754944e-38, %v3387
  %v3389 = vsel %vm3386, %v3388, %v3384
  %v3390 = vmul.f32 1.0, %v3389
  %v3391 = vrcp.pop %v3323
  %v3392 = vmul.f32 %v3323, %v3391
  %v3393 = vsub.f32 1.0, %v3392
  %v3394 = vmul.f32 %v3391, %v3393
  %v3395 = vadd.f32 %v3391, %v3394
  %vm3396 = vweird.f32 %v3323
  %vm3397 = vweird.f32 %v3391
  %vm3398 = vmor %vm3396, %vm3397
  %v3399 = vsel %vm3398, %v3391, %v3395
  %v3400 = vand.u32 2147483647, %v3323
  %vm3401 = vcmp.eq.f32.partialorder %v3400, 8.507059e+37
  %v3402 = vand.u32 %v3323, 2147483648
  %v3403 = vor.u32 1.1754944e-38, %v3402
  %v3404 = vsel %vm3401, %v3403, %v3399
  %v3405 = vmul.f32 1.0, %v3404
  %v3406 = vrcp.pop %v3324
  %v3407 = vmul.f32 %v3324, %v3406
  %v3408 = vsub.f32 1.0, %v3407
  %v3409 = vmul.f32 %v3406, %v3408
  %v3410 = vadd.f32 %v3406, %v3409
  %vm3411 = vweird.f32 %v3324
  %vm3412 = vweird.f32 %v3406
  %vm3413 = vmor %vm3411, %vm3412
  %v3414 = vsel %vm3413, %v3406, %v3410
  %v3415 = vand.u32 2147483647, %v3324
  %vm3416 = vcmp.eq.f32.partialorder %v3415, 8.507059e+37
  %v3417 = vand.u32 %v3324, 2147483648
  %v3418 = vor.u32 1.1754944e-38, %v3417
  %v3419 = vsel %vm3416, %v3418, %v3414
  %v3420 = vmul.f32 1.0, %v3419
  %v3421 = vrcp.pop %v3325
  %v3422 = vmul.f32 %v3325, %v3421
  %v3423 = vsub.f32 1.0, %v3422
  %v3424 = vmul.f32 %v3421, %v3423
  %v3425 = vadd.f32 %v3421, %v3424
  %vm3426 = vweird.f32 %v3325
  %vm3427 = vweird.f32 %v3421
  %vm3428 = vmor %vm3426, %vm3427
  %v3429 = vsel %vm3428, %v3421, %v3425
  %v3430 = vand.u32 2147483647, %v3325
  %vm3431 = vcmp.eq.f32.partialorder %v3430, 8.507059e+37
  %v3432 = vand.u32 %v3325, 2147483648
  %v3433 = vor.u32 1.1754944e-38, %v3432
  %v3434 = vsel %vm3431, %v3433, %v3429
  %v3435 = vmul.f32 1.0, %v3434
  %v3436 = vrcp.pop %v3326
  %v3437 = vmul.f32 %v3326, %v3436
  %v3438 = vsub.f32 1.0, %v3437
  %v3439 = vmul.f32 %v3436, %v3438
  %v3440 = vadd.f32 %v3436, %v3439
  %vm3441 = vweird.f32 %v3326
  %vm3442 = vweird.f32 %v3436
  %vm3443 = vmor %vm3441, %vm3442
  %v3444 = vsel %vm3443, %v3436, %v3440
  %v3445 = vand.u32 2147483647, %v3326
  %vm3446 = vcmp.eq.f32.partialorder %v3445, 8.507059e+37
  %v3447 = vand.u32 %v3326, 2147483648
  %v3448 = vor.u32 1.1754944e-38, %v3447
  %v3449 = vsel %vm3446, %v3448, %v3444
  %v3450 = vmul.f32 1.0, %v3449
  %v3451 = vrcp.pop %v3327
  %v3452 = vmul.f32 %v3327, %v3451
  %v3453 = vsub.f32 1.0, %v3452
  %v3454 = vmul.f32 %v3451, %v3453
  %v3455 = vadd.f32 %v3451, %v3454
  %vm3456 = vweird.f32 %v3327
  %vm3457 = vweird.f32 %v3451
  %vm3458 = vmor %vm3456, %vm3457
  %v3459 = vsel %vm3458, %v3451, %v3455
  %v3460 = vand.u32 2147483647, %v3327
  %vm3461 = vcmp.eq.f32.partialorder %v3460, 8.507059e+37
  %v3462 = vand.u32 %v3327, 2147483648
  %v3463 = vor.u32 1.1754944e-38, %v3462
  %v3464 = vsel %vm3461, %v3463, %v3459
  %v3465 = vmul.f32 1.0, %v3464
  %v3466 = vrcp.pop %v3328
  %v3467 = vmul.f32 %v3328, %v3466
  %v3468 = vsub.f32 1.0, %v3467
  %v3469 = vmul.f32 %v3466, %v3468
  %v3470 = vadd.f32 %v3466, %v3469
  %vm3471 = vweird.f32 %v3328
  %vm3472 = vweird.f32 %v3466
  %vm3473 = vmor %vm3471, %vm3472
  %v3474 = vsel %vm3473, %v3466, %v3470
  %v3475 = vand.u32 2147483647, %v3328
  %vm3476 = vcmp.eq.f32.partialorder %v3475, 8.507059e+37
  %v3477 = vand.u32 %v3328, 2147483648
  %v3478 = vor.u32 1.1754944e-38, %v3477
  %v3479 = vsel %vm3476, %v3478, %v3474
  %v3480 = vmul.f32 1.0, %v3479
  %v3481 = vrcp.pop %v3329
  %v3482 = vmul.f32 %v3329, %v3481
  %v3483 = vsub.f32 1.0, %v3482
  %v3484 = vmul.f32 %v3481, %v3483
  %v3485 = vadd.f32 %v3481, %v3484
  %vm3486 = vweird.f32 %v3329
  %vm3487 = vweird.f32 %v3481
  %vm3488 = vmor %vm3486, %vm3487
  %v3489 = vsel %vm3488, %v3481, %v3485
  %v3490 = vand.u32 2147483647, %v3329
  %vm3491 = vcmp.eq.f32.partialorder %v3490, 8.507059e+37
  %v3492 = vand.u32 %v3329, 2147483648
  %v3493 = vor.u32 1.1754944e-38, %v3492
  %v3494 = vsel %vm3491, %v3493, %v3489
  %v3495 = vmul.f32 1.0, %v3494
  %v3496 = vrcp.pop %v3330
  %v3497 = vmul.f32 %v3330, %v3496
  %v3498 = vsub.f32 1.0, %v3497
  %v3499 = vmul.f32 %v3496, %v3498
  %v3500 = vadd.f32 %v3496, %v3499
  %vm3501 = vweird.f32 %v3330
  %vm3502 = vweird.f32 %v3496
  %vm3503 = vmor %vm3501, %vm3502
  %v3504 = vsel %vm3503, %v3496, %v3500
  %v3505 = vand.u32 2147483647, %v3330
  %vm3506 = vcmp.eq.f32.partialorder %v3505, 8.507059e+37
  %v3507 = vand.u32 %v3330, 2147483648
  %v3508 = vor.u32 1.1754944e-38, %v3507
  %v3509 = vsel %vm3506, %v3508, %v3504
  %v3510 = vmul.f32 1.0, %v3509
  %v3511 = vrcp.pop %v3331
  %v3512 = vmul.f32 %v3331, %v3511
  %v3513 = vsub.f32 1.0, %v3512
  %v3514 = vmul.f32 %v3511, %v3513
  %v3515 = vadd.f32 %v3511, %v3514
  %vm3516 = vweird.f32 %v3331
  %vm3517 = vweird.f32 %v3511
  %vm3518 = vmor %vm3516, %vm3517
  %v3519 = vsel %vm3518, %v3511, %v3515
  %v3520 = vand.u32 2147483647, %v3331
  %vm3521 = vcmp.eq.f32.partialorder %v3520, 8.507059e+37
  %v3522 = vand.u32 %v3331, 2147483648
  %v3523 = vor.u32 1.1754944e-38, %v3522
  %v3524 = vsel %vm3521, %v3523, %v3519
  %v3525 = vmul.f32 1.0, %v3524
  %v3526 = vrcp.pop %v3332
  %v3527 = vmul.f32 %v3332, %v3526
  %v3528 = vsub.f32 1.0, %v3527
  %v3529 = vmul.f32 %v3526, %v3528
  %v3530 = vadd.f32 %v3526, %v3529
  %vm3531 = vweird.f32 %v3332
  %vm3532 = vweird.f32 %v3526
  %vm3533 = vmor %vm3531, %vm3532
  %v3534 = vsel %vm3533, %v3526, %v3530
  %v3535 = vand.u32 2147483647, %v3332
  %vm3536 = vcmp.eq.f32.partialorder %v3535, 8.507059e+37
  %v3537 = vand.u32 %v3332, 2147483648
  %v3538 = vor.u32 1.1754944e-38, %v3537
  %v3539 = vsel %vm3536, %v3538, %v3534
  %v3540 = vmul.f32 1.0, %v3539
  %v3541 = vrcp.pop %v3333
  %v3542 = vmul.f32 %v3333, %v3541
  %v3543 = vsub.f32 1.0, %v3542
  %v3544 = vmul.f32 %v3541, %v3543
  %v3545 = vadd.f32 %v3541, %v3544
  %vm3546 = vweird.f32 %v3333
  %vm3547 = vweird.f32 %v3541
  %vm3548 = vmor %vm3546, %vm3547
  %v3549 = vsel %vm3548, %v3541, %v3545
  %v3550 = vand.u32 2147483647, %v3333
  %vm3551 = vcmp.eq.f32.partialorder %v3550, 8.507059e+37
  %v3552 = vand.u32 %v3333, 2147483648
  %v3553 = vor.u32 1.1754944e-38, %v3552
  %v3554 = vsel %vm3551, %v3553, %v3549
  %v3555 = vmul.f32 1.0, %v3554
  %v3556 = vrcp.pop %v3334
  %v3557 = vmul.f32 %v3334, %v3556
  %v3558 = vsub.f32 1.0, %v3557
  %v3559 = vmul.f32 %v3556, %v3558
  %v3560 = vadd.f32 %v3556, %v3559
  %vm3561 = vweird.f32 %v3334
  %vm3562 = vweird.f32 %v3556
  %vm3563 = vmor %vm3561, %vm3562
  %v3564 = vsel %vm3563, %v3556, %v3560
  %v3565 = vand.u32 2147483647, %v3334
  %vm3566 = vcmp.eq.f32.partialorder %v3565, 8.507059e+37
  %v3567 = vand.u32 %v3334, 2147483648
  %v3568 = vor.u32 1.1754944e-38, %v3567
  %v3569 = vsel %vm3566, %v3568, %v3564
  %v3570 = vmul.f32 1.0, %v3569
  %v3571 = vrcp.pop %v3335
  %v3572 = vmul.f32 %v3335, %v3571
  %v3573 = vsub.f32 1.0, %v3572
  %v3574 = vmul.f32 %v3571, %v3573
  %v3575 = vadd.f32 %v3571, %v3574
  %vm3576 = vweird.f32 %v3335
  %vm3577 = vweird.f32 %v3571
  %vm3578 = vmor %vm3576, %vm3577
  %v3579 = vsel %vm3578, %v3571, %v3575
  %v3580 = vand.u32 2147483647, %v3335
  %vm3581 = vcmp.eq.f32.partialorder %v3580, 8.507059e+37
  %v3582 = vand.u32 %v3335, 2147483648
  %v3583 = vor.u32 1.1754944e-38, %v3582
  %v3584 = vsel %vm3581, %v3583, %v3579
  %v3585 = vmul.f32 1.0, %v3584
  %v3586 = vrcp.pop %v3336
  %v3587 = vmul.f32 %v3336, %v3586
  %v3588 = vsub.f32 1.0, %v3587
  %v3589 = vmul.f32 %v3586, %v3588
  %v3590 = vadd.f32 %v3586, %v3589
  %vm3591 = vweird.f32 %v3336
  %vm3592 = vweird.f32 %v3586
  %vm3593 = vmor %vm3591, %vm3592
  %v3594 = vsel %vm3593, %v3586, %v3590
  %v3595 = vand.u32 2147483647, %v3336
  %vm3596 = vcmp.eq.f32.partialorder %v3595, 8.507059e+37
  %v3597 = vand.u32 %v3336, 2147483648
  %v3598 = vor.u32 1.1754944e-38, %v3597
  %v3599 = vsel %vm3596, %v3598, %v3594
  %v3600 = vmul.f32 1.0, %v3599
  %v3601 = vrcp.pop %v3337
  %v3602 = vmul.f32 %v3337, %v3601
  %v3603 = vsub.f32 1.0, %v3602
  %v3604 = vmul.f32 %v3601, %v3603
  %v3605 = vadd.f32 %v3601, %v3604
  %vm3606 = vweird.f32 %v3337
  %vm3607 = vweird.f32 %v3601
  %vm3608 = vmor %vm3606, %vm3607
  %v3609 = vsel %vm3608, %v3601, %v3605
  %v3610 = vand.u32 2147483647, %v3337
  %vm3611 = vcmp.eq.f32.partialorder %v3610, 8.507059e+37
  %v3612 = vand.u32 %v3337, 2147483648
  %v3613 = vor.u32 1.1754944e-38, %v3612
  %v3614 = vsel %vm3611, %v3613, %v3609
  %v3615 = vmul.f32 1.0, %v3614
  %v3616 = vrcp.pop %v3338
  %v3617 = vmul.f32 %v3338, %v3616
  %v3618 = vsub.f32 1.0, %v3617
  %v3619 = vmul.f32 %v3616, %v3618
  %v3620 = vadd.f32 %v3616, %v3619
  %vm3621 = vweird.f32 %v3338
  %vm3622 = vweird.f32 %v3616
  %vm3623 = vmor %vm3621, %vm3622
  %v3624 = vsel %vm3623, %v3616, %v3620
  %v3625 = vand.u32 2147483647, %v3338
  %vm3626 = vcmp.eq.f32.partialorder %v3625, 8.507059e+37
  %v3627 = vand.u32 %v3338, 2147483648
  %v3628 = vor.u32 1.1754944e-38, %v3627
  %v3629 = vsel %vm3626, %v3628, %v3624
  %v3630 = vmul.f32 1.0, %v3629
  %v3631 = vrcp.pop %v3339
  %v3632 = vmul.f32 %v3339, %v3631
  %v3633 = vsub.f32 1.0, %v3632
  %v3634 = vmul.f32 %v3631, %v3633
  %v3635 = vadd.f32 %v3631, %v3634
  %vm3636 = vweird.f32 %v3339
  %vm3637 = vweird.f32 %v3631
  %vm3638 = vmor %vm3636, %vm3637
  %v3639 = vsel %vm3638, %v3631, %v3635
  %v3640 = vand.u32 2147483647, %v3339
  %vm3641 = vcmp.eq.f32.partialorder %v3640, 8.507059e+37
  %v3642 = vand.u32 %v3339, 2147483648
  %v3643 = vor.u32 1.1754944e-38, %v3642
  %v3644 = vsel %vm3641, %v3643, %v3639
  %v3645 = vmul.f32 1.0, %v3644
  %v3646 = vrcp.pop %v3340
  %v3647 = vmul.f32 %v3340, %v3646
  %v3648 = vsub.f32 1.0, %v3647
  %v3649 = vmul.f32 %v3646, %v3648
  %v3650 = vadd.f32 %v3646, %v3649
  %vm3651 = vweird.f32 %v3340
  %vm3652 = vweird.f32 %v3646
  %vm3653 = vmor %vm3651, %vm3652
  %v3654 = vsel %vm3653, %v3646, %v3650
  %v3655 = vand.u32 2147483647, %v3340
  %vm3656 = vcmp.eq.f32.partialorder %v3655, 8.507059e+37
  %v3657 = vand.u32 %v3340, 2147483648
  %v3658 = vor.u32 1.1754944e-38, %v3657
  %v3659 = vsel %vm3656, %v3658, %v3654
  %v3660 = vmul.f32 1.0, %v3659
  %v3661 = vrcp.pop %v3341
  %v3662 = vmul.f32 %v3341, %v3661
  %v3663 = vsub.f32 1.0, %v3662
  %v3664 = vmul.f32 %v3661, %v3663
  %v3665 = vadd.f32 %v3661, %v3664
  %vm3666 = vweird.f32 %v3341
  %vm3667 = vweird.f32 %v3661
  %vm3668 = vmor %vm3666, %vm3667
  %v3669 = vsel %vm3668, %v3661, %v3665
  %v3670 = vand.u32 2147483647, %v3341
  %vm3671 = vcmp.eq.f32.partialorder %v3670, 8.507059e+37
  %v3672 = vand.u32 %v3341, 2147483648
  %v3673 = vor.u32 1.1754944e-38, %v3672
  %v3674 = vsel %vm3671, %v3673, %v3669
  %v3675 = vmul.f32 1.0, %v3674
  %v3676 = vrcp.pop %v3342
  %v3677 = vmul.f32 %v3342, %v3676
  %v3678 = vsub.f32 1.0, %v3677
  %v3679 = vmul.f32 %v3676, %v3678
  %v3680 = vadd.f32 %v3676, %v3679
  %vm3681 = vweird.f32 %v3342
  %vm3682 = vweird.f32 %v3676
  %vm3683 = vmor %vm3681, %vm3682
  %v3684 = vsel %vm3683, %v3676, %v3680
  %v3685 = vand.u32 2147483647, %v3342
  %vm3686 = vcmp.eq.f32.partialorder %v3685, 8.507059e+37
  %v3687 = vand.u32 %v3342, 2147483648
  %v3688 = vor.u32 1.1754944e-38, %v3687
  %v3689 = vsel %vm3686, %v3688, %v3684
  %v3690 = vmul.f32 1.0, %v3689
  %v3691 = vrcp.pop %v3343
  %v3692 = vmul.f32 %v3343, %v3691
  %v3693 = vsub.f32 1.0, %v3692
  %v3694 = vmul.f32 %v3691, %v3693
  %v3695 = vadd.f32 %v3691, %v3694
  %vm3696 = vweird.f32 %v3343
  %vm3697 = vweird.f32 %v3691
  %vm3698 = vmor %vm3696, %vm3697
  %v3699 = vsel %vm3698, %v3691, %v3695
  %v3700 = vand.u32 2147483647, %v3343
  %vm3701 = vcmp.eq.f32.partialorder %v3700, 8.507059e+37
  %v3702 = vand.u32 %v3343, 2147483648
  %v3703 = vor.u32 1.1754944e-38, %v3702
  %v3704 = vsel %vm3701, %v3703, %v3699
  %v3705 = vmul.f32 1.0, %v3704
  %v3706 = vrcp.pop %v3344
  %v3707 = vmul.f32 %v3344, %v3706
  %v3708 = vsub.f32 1.0, %v3707
  %v3709 = vmul.f32 %v3706, %v3708
  %v3710 = vadd.f32 %v3706, %v3709
  %vm3711 = vweird.f32 %v3344
  %vm3712 = vweird.f32 %v3706
  %vm3713 = vmor %vm3711, %vm3712
  %v3714 = vsel %vm3713, %v3706, %v3710
  %v3715 = vand.u32 2147483647, %v3344
  %vm3716 = vcmp.eq.f32.partialorder %v3715, 8.507059e+37
  %v3717 = vand.u32 %v3344, 2147483648
  %v3718 = vor.u32 1.1754944e-38, %v3717
  %v3719 = vsel %vm3716, %v3718, %v3714
  %v3720 = vmul.f32 1.0, %v3719
  %v3721 = vrcp.pop %v3345
  %v3722 = vmul.f32 %v3345, %v3721
  %v3723 = vsub.f32 1.0, %v3722
  %v3724 = vmul.f32 %v3721, %v3723
  %v3725 = vadd.f32 %v3721, %v3724
  %vm3726 = vweird.f32 %v3345
  %vm3727 = vweird.f32 %v3721
  %vm3728 = vmor %vm3726, %vm3727
  %v3729 = vsel %vm3728, %v3721, %v3725
  %v3730 = vand.u32 2147483647, %v3345
  %vm3731 = vcmp.eq.f32.partialorder %v3730, 8.507059e+37
  %v3732 = vand.u32 %v3345, 2147483648
  %v3733 = vor.u32 1.1754944e-38, %v3732
  %v3734 = vsel %vm3731, %v3733, %v3729
  %v3735 = vmul.f32 1.0, %v3734
  %v3736 = vrcp.pop %v3346
  %v3737 = vmul.f32 %v3346, %v3736
  %v3738 = vsub.f32 1.0, %v3737
  %v3739 = vmul.f32 %v3736, %v3738
  %v3740 = vadd.f32 %v3736, %v3739
  %vm3741 = vweird.f32 %v3346
  %vm3742 = vweird.f32 %v3736
  %vm3743 = vmor %vm3741, %vm3742
  %v3744 = vsel %vm3743, %v3736, %v3740
  %v3745 = vand.u32 2147483647, %v3346
  %vm3746 = vcmp.eq.f32.partialorder %v3745, 8.507059e+37
  %v3747 = vand.u32 %v3346, 2147483648
  %v3748 = vor.u32 1.1754944e-38, %v3747
  %v3749 = vsel %vm3746, %v3748, %v3744
  %v3750 = vmul.f32 1.0, %v3749
  %v3751 = vrcp.pop %v3347
  %v3752 = vmul.f32 %v3347, %v3751
  %v3753 = vsub.f32 1.0, %v3752
  %v3754 = vmul.f32 %v3751, %v3753
  %v3755 = vadd.f32 %v3751, %v3754
  %vm3756 = vweird.f32 %v3347
  %vm3757 = vweird.f32 %v3751
  %vm3758 = vmor %vm3756, %vm3757
  %v3759 = vsel %vm3758, %v3751, %v3755
  %v3760 = vand.u32 2147483647, %v3347
  %vm3761 = vcmp.eq.f32.partialorder %v3760, 8.507059e+37
  %v3762 = vand.u32 %v3347, 2147483648
  %v3763 = vor.u32 1.1754944e-38, %v3762
  %v3764 = vsel %vm3761, %v3763, %v3759
  %v3765 = vmul.f32 1.0, %v3764
  %v3766 = vrcp.pop %v3348
  %v3767 = vmul.f32 %v3348, %v3766
  %v3768 = vsub.f32 1.0, %v3767
  %v3769 = vmul.f32 %v3766, %v3768
  %v3770 = vadd.f32 %v3766, %v3769
  %vm3771 = vweird.f32 %v3348
  %vm3772 = vweird.f32 %v3766
  %vm3773 = vmor %vm3771, %vm3772
  %v3774 = vsel %vm3773, %v3766, %v3770
  %v3775 = vand.u32 2147483647, %v3348
  %vm3776 = vcmp.eq.f32.partialorder %v3775, 8.507059e+37
  %v3777 = vand.u32 %v3348, 2147483648
  %v3778 = vor.u32 1.1754944e-38, %v3777
  %v3779 = vsel %vm3776, %v3778, %v3774
  %v3780 = vmul.f32 1.0, %v3779
  %v3781 = vrcp.pop %v3349
  %v3782 = vmul.f32 %v3349, %v3781
  %v3783 = vsub.f32 1.0, %v3782
  %v3784 = vmul.f32 %v3781, %v3783
  %v3785 = vadd.f32 %v3781, %v3784
  %vm3786 = vweird.f32 %v3349
  %vm3787 = vweird.f32 %v3781
  %vm3788 = vmor %vm3786, %vm3787
  %v3789 = vsel %vm3788, %v3781, %v3785
  %v3790 = vand.u32 2147483647, %v3349
  %vm3791 = vcmp.eq.f32.partialorder %v3790, 8.507059e+37
  %v3792 = vand.u32 %v3349, 2147483648
  %v3793 = vor.u32 1.1754944e-38, %v3792
  %v3794 = vsel %vm3791, %v3793, %v3789
  %v3795 = vmul.f32 1.0, %v3794
  %v3796 = vrcp.pop %v3350
  %v3797 = vmul.f32 %v3350, %v3796
  %v3798 = vsub.f32 1.0, %v3797
  %v3799 = vmul.f32 %v3796, %v3798
  %v3800 = vadd.f32 %v3796, %v3799
  %vm3801 = vweird.f32 %v3350
  %vm3802 = vweird.f32 %v3796
  %vm3803 = vmor %vm3801, %vm3802
  %v3804 = vsel %vm3803, %v3796, %v3800
  %v3805 = vand.u32 2147483647, %v3350
  %vm3806 = vcmp.eq.f32.partialorder %v3805, 8.507059e+37
  %v3807 = vand.u32 %v3350, 2147483648
  %v3808 = vor.u32 1.1754944e-38, %v3807
  %v3809 = vsel %vm3806, %v3808, %v3804
  %v3810 = vmul.f32 1.0, %v3809
  %v3811 = vrcp.pop %v3351
  %v3812 = vmul.f32 %v3351, %v3811
  %v3813 = vsub.f32 1.0, %v3812
  %v3814 = vmul.f32 %v3811, %v3813
  %v3815 = vadd.f32 %v3811, %v3814
  %vm3816 = vweird.f32 %v3351
  %vm3817 = vweird.f32 %v3811
  %vm3818 = vmor %vm3816, %vm3817
  %v3819 = vsel %vm3818, %v3811, %v3815
  %v3820 = vand.u32 2147483647, %v3351
  %vm3821 = vcmp.eq.f32.partialorder %v3820, 8.507059e+37
  %v3822 = vand.u32 %v3351, 2147483648
  %v3823 = vor.u32 1.1754944e-38, %v3822
  %v3824 = vsel %vm3821, %v3823, %v3819
  %v3825 = vmul.f32 1.0, %v3824
  %v3826 = vrcp.pop %v3352
  %v3827 = vmul.f32 %v3352, %v3826
  %v3828 = vsub.f32 1.0, %v3827
  %v3829 = vmul.f32 %v3826, %v3828
  %v3830 = vadd.f32 %v3826, %v3829
  %vm3831 = vweird.f32 %v3352
  %vm3832 = vweird.f32 %v3826
  %vm3833 = vmor %vm3831, %vm3832
  %v3834 = vsel %vm3833, %v3826, %v3830
  %v3835 = vand.u32 2147483647, %v3352
  %vm3836 = vcmp.eq.f32.partialorder %v3835, 8.507059e+37
  %v3837 = vand.u32 %v3352, 2147483648
  %v3838 = vor.u32 1.1754944e-38, %v3837
  %v3839 = vsel %vm3836, %v3838, %v3834
  %v3840 = vmul.f32 1.0, %v3839
  %v3841 = vrcp.pop %v3353
  %v3842 = vmul.f32 %v3353, %v3841
  %v3843 = vsub.f32 1.0, %v3842
  %v3844 = vmul.f32 %v3841, %v3843
  %v3845 = vadd.f32 %v3841, %v3844
  %vm3846 = vweird.f32 %v3353
  %vm3847 = vweird.f32 %v3841
  %vm3848 = vmor %vm3846, %vm3847
  %v3849 = vsel %vm3848, %v3841, %v3845
  %v3850 = vand.u32 2147483647, %v3353
  %vm3851 = vcmp.eq.f32.partialorder %v3850, 8.507059e+37
  %v3852 = vand.u32 %v3353, 2147483648
  %v3853 = vor.u32 1.1754944e-38, %v3852
  %v3854 = vsel %vm3851, %v3853, %v3849
  %v3855 = vmul.f32 1.0, %v3854
  %v3856 = vrcp.pop %v3354
  %v3857 = vmul.f32 %v3354, %v3856
  %v3858 = vsub.f32 1.0, %v3857
  %v3859 = vmul.f32 %v3856, %v3858
  %v3860 = vadd.f32 %v3856, %v3859
  %vm3861 = vweird.f32 %v3354
  %vm3862 = vweird.f32 %v3856
  %vm3863 = vmor %vm3861, %vm3862
  %v3864 = vsel %vm3863, %v3856, %v3860
  %v3865 = vand.u32 2147483647, %v3354
  %vm3866 = vcmp.eq.f32.partialorder %v3865, 8.507059e+37
  %v3867 = vand.u32 %v3354, 2147483648
  %v3868 = vor.u32 1.1754944e-38, %v3867
  %v3869 = vsel %vm3866, %v3868, %v3864
  %v3870 = vmul.f32 1.0, %v3869
  %v3871 = vrcp.pop %v3355
  %v3872 = vmul.f32 %v3355, %v3871
  %v3873 = vsub.f32 1.0, %v3872
  %v3874 = vmul.f32 %v3871, %v3873
  %v3875 = vadd.f32 %v3871, %v3874
  %vm3876 = vweird.f32 %v3355
  %vm3877 = vweird.f32 %v3871
  %vm3878 = vmor %vm3876, %vm3877
  %v3879 = vsel %vm3878, %v3871, %v3875
  %v3880 = vand.u32 2147483647, %v3355
  %vm3881 = vcmp.eq.f32.partialorder %v3880, 8.507059e+37
  %v3882 = vand.u32 %v3355, 2147483648
  %v3883 = vor.u32 1.1754944e-38, %v3882
  %v3884 = vsel %vm3881, %v3883, %v3879
  %v3885 = vmul.f32 1.0, %v3884
  %v3886 = vrcp.pop %v3356
  %v3887 = vmul.f32 %v3356, %v3886
  %v3888 = vsub.f32 1.0, %v3887
  %v3889 = vmul.f32 %v3886, %v3888
  %v3890 = vadd.f32 %v3886, %v3889
  %vm3891 = vweird.f32 %v3356
  %vm3892 = vweird.f32 %v3886
  %vm3893 = vmor %vm3891, %vm3892
  %v3894 = vsel %vm3893, %v3886, %v3890
  %v3895 = vand.u32 2147483647, %v3356
  %vm3896 = vcmp.eq.f32.partialorder %v3895, 8.507059e+37
  %v3897 = vand.u32 %v3356, 2147483648
  %v3898 = vor.u32 1.1754944e-38, %v3897
  %v3899 = vsel %vm3896, %v3898, %v3894
  %v3900 = vmul.f32 1.0, %v3899
  %v3901 = vrcp.pop %v3357
  %v3902 = vmul.f32 %v3357, %v3901
  %v3903 = vsub.f32 1.0, %v3902
  %v3904 = vmul.f32 %v3901, %v3903
  %v3905 = vadd.f32 %v3901, %v3904
  %vm3906 = vweird.f32 %v3357
  %vm3907 = vweird.f32 %v3901
  %vm3908 = vmor %vm3906, %vm3907
  %v3909 = vsel %vm3908, %v3901, %v3905
  %v3910 = vand.u32 2147483647, %v3357
  %vm3911 = vcmp.eq.f32.partialorder %v3910, 8.507059e+37
  %v3912 = vand.u32 %v3357, 2147483648
  %v3913 = vor.u32 1.1754944e-38, %v3912
  %v3914 = vsel %vm3911, %v3913, %v3909
  %v3915 = vmul.f32 1.0, %v3914
  %v3916 = vrcp.pop %v3358
  %v3917 = vmul.f32 %v3358, %v3916
  %v3918 = vsub.f32 1.0, %v3917
  %v3919 = vmul.f32 %v3916, %v3918
  %v3920 = vadd.f32 %v3916, %v3919
  %vm3921 = vweird.f32 %v3358
  %vm3922 = vweird.f32 %v3916
  %vm3923 = vmor %vm3921, %vm3922
  %v3924 = vsel %vm3923, %v3916, %v3920
  %v3925 = vand.u32 2147483647, %v3358
  %vm3926 = vcmp.eq.f32.partialorder %v3925, 8.507059e+37
  %v3927 = vand.u32 %v3358, 2147483648
  %v3928 = vor.u32 1.1754944e-38, %v3927
  %v3929 = vsel %vm3926, %v3928, %v3924
  %v3930 = vmul.f32 1.0, %v3929
  %v3931 = vrcp.pop %v3359
  %v3932 = vmul.f32 %v3359, %v3931
  %v3933 = vsub.f32 1.0, %v3932
  %v3934 = vmul.f32 %v3931, %v3933
  %v3935 = vadd.f32 %v3931, %v3934
  %vm3936 = vweird.f32 %v3359
  %vm3937 = vweird.f32 %v3931
  %vm3938 = vmor %vm3936, %vm3937
  %v3939 = vsel %vm3938, %v3931, %v3935
  %v3940 = vand.u32 2147483647, %v3359
  %vm3941 = vcmp.eq.f32.partialorder %v3940, 8.507059e+37
  %v3942 = vand.u32 %v3359, 2147483648
  %v3943 = vor.u32 1.1754944e-38, %v3942
  %v3944 = vsel %vm3941, %v3943, %v3939
  %v3945 = vmul.f32 1.0, %v3944
  %v3946 = vrcp.pop %v3360
  %v3947 = vmul.f32 %v3360, %v3946
  %v3948 = vsub.f32 1.0, %v3947
  %v3949 = vmul.f32 %v3946, %v3948
  %v3950 = vadd.f32 %v3946, %v3949
  %vm3951 = vweird.f32 %v3360
  %vm3952 = vweird.f32 %v3946
  %vm3953 = vmor %vm3951, %vm3952
  %v3954 = vsel %vm3953, %v3946, %v3950
  %v3955 = vand.u32 2147483647, %v3360
  %vm3956 = vcmp.eq.f32.partialorder %v3955, 8.507059e+37
  %v3957 = vand.u32 %v3360, 2147483648
  %v3958 = vor.u32 1.1754944e-38, %v3957
  %v3959 = vsel %vm3956, %v3958, %v3954
  %v3960 = vmul.f32 1.0, %v3959
  %v3961 = vmul.f32 %v3375, 1.0614054
  %v3962 = vmul.f32 %v3390, 1.0614054
  %v3963 = vmul.f32 %v3405, 1.0614054
  %v3964 = vmul.f32 %v3420, 1.0614054
  %v3965 = vmul.f32 %v3435, 1.0614054
  %v3966 = vmul.f32 %v3450, 1.0614054
  %v3967 = vmul.f32 %v3465, 1.0614054
  %v3968 = vmul.f32 %v3480, 1.0614054
  %v3969 = vmul.f32 %v3495, 1.0614054
  %v3970 = vmul.f32 %v3510, 1.0614054
  %v3971 = vmul.f32 %v3525, 1.0614054
  %v3972 = vmul.f32 %v3540, 1.0614054
  %v3973 = vmul.f32 %v3555, 1.0614054
  %v3974 = vmul.f32 %v3570, 1.0614054
  %v3975 = vmul.f32 %v3585, 1.0614054
  %v3976 = vmul.f32 %v3600, 1.0614054
  %v3977 = vmul.f32 %v3615, 1.0614054
  %v3978 = vmul.f32 %v3630, 1.0614054
  %v3979 = vmul.f32 %v3645, 1.0614054
  %v3980 = vmul.f32 %v3660, 1.0614054
  %v3981 = vmul.f32 %v3675, 1.0614054
  %v3982 = vmul.f32 %v3690, 1.0614054
  %v3983 = vmul.f32 %v3705, 1.0614054
  %v3984 = vmul.f32 %v3720, 1.0614054
  %v3985 = vmul.f32 %v3735, 1.0614054
  %v3986 = vmul.f32 %v3750, 1.0614054
  %v3987 = vmul.f32 %v3765, 1.0614054
  %v3988 = vmul.f32 %v3780, 1.0614054
  %v3989 = vmul.f32 %v3795, 1.0614054
  %v3990 = vmul.f32 %v3810, 1.0614054
  %v3991 = vmul.f32 %v3825, 1.0614054
  %v3992 = vmul.f32 %v3840, 1.0614054
  %v3993 = vmul.f32 %v3855, 1.0614054
  %v3994 = vmul.f32 %v3870, 1.0614054
  %v3995 = vmul.f32 %v3885, 1.0614054
  %v3996 = vmul.f32 %v3900, 1.0614054
  %v3997 = vmul.f32 %v3915, 1.0614054
  %v3998 = vmul.f32 %v3930, 1.0614054
  %v3999 = vmul.f32 %v3945, 1.0614054
  %v4000 = vmul.f32 %v3960, 1.0614054
  %v4001 = vadd.f32 %v3961, -1.4531521
  %v4002 = vadd.f32 %v3962, -1.4531521
  %v4003 = vadd.f32 %v3963, -1.4531521
  %v4004 = vadd.f32 %v3964, -1.4531521
  %v4005 = vadd.f32 %v3965, -1.4531521
  %v4006 = vadd.f32 %v3966, -1.4531521
  %v4007 = vadd.f32 %v3967, -1.4531521
  %v4008 = vadd.f32 %v3968, -1.4531521
  %v4009 = vadd.f32 %v3969, -1.4531521
  %v4010 = vadd.f32 %v3970, -1.4531521
  %v4011 = vadd.f32 %v3971, -1.4531521
  %v4012 = vadd.f32 %v3972, -1.4531521
  %v4013 = vadd.f32 %v3973, -1.4531521
  %v4014 = vadd.f32 %v3974, -1.4531521
  %v4015 = vadd.f32 %v3975, -1.4531521
  %v4016 = vadd.f32 %v3976, -1.4531521
  %v4017 = vadd.f32 %v3977, -1.4531521
  %v4018 = vadd.f32 %v3978, -1.4531521
  %v4019 = vadd.f32 %v3979, -1.4531521
  %v4020 = vadd.f32 %v3980, -1.4531521
  %v4021 = vadd.f32 %v3981, -1.4531521
  %v4022 = vadd.f32 %v3982, -1.4531521
  %v4023 = vadd.f32 %v3983, -1.4531521
  %v4024 = vadd.f32 %v3984, -1.4531521
  %v4025 = vadd.f32 %v3985, -1.4531521
  %v4026 = vadd.f32 %v3986, -1.4531521
  %v4027 = vadd.f32 %v3987, -1.4531521
  %v4028 = vadd.f32 %v3988, -1.4531521
  %v4029 = vadd.f32 %v3989, -1.4531521
  %v4030 = vadd.f32 %v3990, -1.4531521
  %v4031 = vadd.f32 %v3991, -1.4531521
  %v4032 = vadd.f32 %v3992, -1.4531521
  %v4033 = vadd.f32 %v3993, -1.4531521
  %v4034 = vadd.f32 %v3994, -1.4531521
  %v4035 = vadd.f32 %v3995, -1.4531521
  %v4036 = vadd.f32 %v3996, -1.4531521
  %v4037 = vadd.f32 %v3997, -1.4531521
  %v4038 = vadd.f32 %v3998, -1.4531521
  %v4039 = vadd.f32 %v3999, -1.4531521
  %v4040 = vadd.f32 %v4000, -1.4531521
  %v4041 = vmul.f32 %v4001, %v3375
  %v4042 = vmul.f32 %v4002, %v3390
  %v4043 = vmul.f32 %v4003, %v3405
  %v4044 = vmul.f32 %v4004, %v3420
  %v4045 = vmul.f32 %v4005, %v3435
  %v4046 = vmul.f32 %v4006, %v3450
  %v4047 = vmul.f32 %v4007, %v3465
  %v4048 = vmul.f32 %v4008, %v3480
  %v4049 = vmul.f32 %v4009, %v3495
  %v4050 = vmul.f32 %v4010, %v3510
  %v4051 = vmul.f32 %v4011, %v3525
  %v4052 = vmul.f32 %v4012, %v3540
  %v4053 = vmul.f32 %v4013, %v3555
  %v4054 = vmul.f32 %v4014, %v3570
  %v4055 = vmul.f32 %v4015, %v3585
  %v4056 = vmul.f32 %v4016, %v3600
  %v4057 = vmul.f32 %v4017, %v3615
  %v4058 = vmul.f32 %v4018, %v3630
  %v4059 = vmul.f32 %v4019, %v3645
  %v4060 = vmul.f32 %v4020, %v3660
  %v4061 = vmul.f32 %v4021, %v3675
  %v4062 = vmul.f32 %v4022, %v3690
  %v4063 = vmul.f32 %v4023, %v3705
  %v4064 = vmul.f32 %v4024, %v3720
  %v4065 = vmul.f32 %v4025, %v3735
  %v4066 = vmul.f32 %v4026, %v3750
  %v4067 = vmul.f32 %v4027, %v3765
  %v4068 = vmul.f32 %v4028, %v3780
  %v4069 = vmul.f32 %v4029, %v3795
  %v4070 = vmul.f32 %v4030, %v3810
  %v4071 = vmul.f32 %v4031, %v3825
  %v4072 = vmul.f32 %v4032, %v3840
  %v4073 = vmul.f32 %v4033, %v3855
  %v4074 = vmul.f32 %v4034, %v3870
  %v4075 = vmul.f32 %v4035, %v3885
  %v4076 = vmul.f32 %v4036, %v3900
  %v4077 = vmul.f32 %v4037, %v3915
  %v4078 = vmul.f32 %v4038, %v3930
  %v4079 = vmul.f32 %v4039, %v3945
  %v4080 = vmul.f32 %v4040, %v3960
  %v4081 = vadd.f32 %v4041, 1.4214138
  %v4082 = vadd.f32 %v4042, 1.4214138
  %v4083 = vadd.f32 %v4043, 1.4214138
  %v4084 = vadd.f32 %v4044, 1.4214138
  %v4085 = vadd.f32 %v4045, 1.4214138
  %v4086 = vadd.f32 %v4046, 1.4214138
  %v4087 = vadd.f32 %v4047, 1.4214138
  %v4088 = vadd.f32 %v4048, 1.4214138
  %v4089 = vadd.f32 %v4049, 1.4214138
  %v4090 = vadd.f32 %v4050, 1.4214138
  %v4091 = vadd.f32 %v4051, 1.4214138
  %v4092 = vadd.f32 %v4052, 1.4214138
  %v4093 = vadd.f32 %v4053, 1.4214138
  %v4094 = vadd.f32 %v4054, 1.4214138
  %v4095 = vadd.f32 %v4055, 1.4214138
  %v4096 = vadd.f32 %v4056, 1.4214138
  %v4097 = vadd.f32 %v4057, 1.4214138
  %v4098 = vadd.f32 %v4058, 1.4214138
  %v4099 = vadd.f32 %v4059, 1.4214138
  %v4100 = vadd.f32 %v4060, 1.4214138
  %v4101 = vadd.f32 %v4061, 1.4214138
  %v4102 = vadd.f32 %v4062, 1.4214138
  %v4103 = vadd.f32 %v4063, 1.4214138
  %v4104 = vadd.f32 %v4064, 1.4214138
  %v4105 = vadd.f32 %v4065, 1.4214138
  %v4106 = vadd.f32 %v4066, 1.4214138
  %v4107 = vadd.f32 %v4067, 1.4214138
  %v4108 = vadd.f32 %v4068, 1.4214138
  %v4109 = vadd.f32 %v4069, 1.4214138
  %v4110 = vadd.f32 %v4070, 1.4214138
  %v4111 = vadd.f32 %v4071, 1.4214138
  %v4112 = vadd.f32 %v4072, 1.4214138
  %v4113 = vadd.f32 %v4073, 1.4214138
  %v4114 = vadd.f32 %v4074, 1.4214138
  %v4115 = vadd.f32 %v4075, 1.4214138
  %v4116 = vadd.f32 %v4076, 1.4214138
  %v4117 = vadd.f32 %v4077, 1.4214138
  %v4118 = vadd.f32 %v4078, 1.4214138
  %v4119 = vadd.f32 %v4079, 1.4214138
  %v4120 = vadd.f32 %v4080, 1.4214138
  %v4121 = vmul.f32 %v4081, %v3375
  %v4122 = vmul.f32 %v4082, %v3390
  %v4123 = vmul.f32 %v4083, %v3405
  %v4124 = vmul.f32 %v4084, %v3420
  %v4125 = vmul.f32 %v4085, %v3435
  %v4126 = vmul.f32 %v4086, %v3450
  %v4127 = vmul.f32 %v4087, %v3465
  %v4128 = vmul.f32 %v4088, %v3480
  %v4129 = vmul.f32 %v4089, %v3495
  %v4130 = vmul.f32 %v4090, %v3510
  %v4131 = vmul.f32 %v4091, %v3525
  %v4132 = vmul.f32 %v4092, %v3540
  %v4133 = vmul.f32 %v4093, %v3555
  %v4134 = vmul.f32 %v4094, %v3570
  %v4135 = vmul.f32 %v4095, %v3585
  %v4136 = vmul.f32 %v4096, %v3600
  %v4137 = vmul.f32 %v4097, %v3615
  %v4138 = vmul.f32 %v4098, %v3630
  %v4139 = vmul.f32 %v4099, %v3645
  %v4140 = vmul.f32 %v4100, %v3660
  %v4141 = vmul.f32 %v4101, %v3675
  %v4142 = vmul.f32 %v4102, %v3690
  %v4143 = vmul.f32 %v4103, %v3705
  %v4144 = vmul.f32 %v4104, %v3720
  %v4145 = vmul.f32 %v4105, %v3735
  %v4146 = vmul.f32 %v4106, %v3750
  %v4147 = vmul.f32 %v4107, %v3765
  %v4148 = vmul.f32 %v4108, %v3780
  %v4149 = vmul.f32 %v4109, %v3795
  %v4150 = vmul.f32 %v4110, %v3810
  %v4151 = vmul.f32 %v4111, %v3825
  %v4152 = vmul.f32 %v4112, %v3840
  %v4153 = vmul.f32 %v4113, %v3855
  %v4154 = vmul.f32 %v4114, %v3870
  %v4155 = vmul.f32 %v4115, %v3885
  %v4156 = vmul.f32 %v4116, %v3900
  %v4157 = vmul.f32 %v4117, %v3915
  %v4158 = vmul.f32 %v4118, %v3930
  %v4159 = vmul.f32 %v4119, %v3945
  %v4160 = vmul.f32 %v4120, %v3960
  %v4161 = vadd.f32 %v4121, -0.28449672
  %v4162 = vadd.f32 %v4122, -0.28449672
  %v4163 = vadd.f32 %v4123, -0.28449672
  %v4164 = vadd.f32 %v4124, -0.28449672
  %v4165 = vadd.f32 %v4125, -0.28449672
  %v4166 = vadd.f32 %v4126, -0.28449672
  %v4167 = vadd.f32 %v4127, -0.28449672
  %v4168 = vadd.f32 %v4128, -0.28449672
  %v4169 = vadd.f32 %v4129, -0.28449672
  %v4170 = vadd.f32 %v4130, -0.28449672
  %v4171 = vadd.f32 %v4131, -0.28449672
  %v4172 = vadd.f32 %v4132, -0.28449672
  %v4173 = vadd.f32 %v4133, -0.28449672
  %v4174 = vadd.f32 %v4134, -0.28449672
  %v4175 = vadd.f32 %v4135, -0.28449672
  %v4176 = vadd.f32 %v4136, -0.28449672
  %v4177 = vadd.f32 %v4137, -0.28449672
  %v4178 = vadd.f32 %v4138, -0.28449672
  %v4179 = vadd.f32 %v4139, -0.28449672
  %v4180 = vadd.f32 %v4140, -0.28449672
  %v4181 = vadd.f32 %v4141, -0.28449672
  %v4182 = vadd.f32 %v4142, -0.28449672
  %v4183 = vadd.f32 %v4143, -0.28449672
  %v4184 = vadd.f32 %v4144, -0.28449672
  %v4185 = vadd.f32 %v4145, -0.28449672
  %v4186 = vadd.f32 %v4146, -0.28449672
  %v4187 = vadd.f32 %v4147, -0.28449672
  %v4188 = vadd.f32 %v4148, -0.28449672
  %v4189 = vadd.f32 %v4149, -0.28449672
  %v4190 = vadd.f32 %v4150, -0.28449672
  %v4191 = vadd.f32 %v4151, -0.28449672
  %v4192 = vadd.f32 %v4152, -0.28449672
  %v4193 = vadd.f32 %v4153, -0.28449672
  %v4194 = vadd.f32 %v4154, -0.28449672
  %v4195 = vadd.f32 %v4155, -0.28449672
  %v4196 = vadd.f32 %v4156, -0.28449672
  %v4197 = vadd.f32 %v4157, -0.28449672
  %v4198 = vadd.f32 %v4158, -0.28449672
  %v4199 = vadd.f32 %v4159, -0.28449672
  %v4200 = vadd.f32 %v4160, -0.28449672
  %v4201 = vmul.f32 %v4161, %v3375
  %v4202 = vmul.f32 %v4162, %v3390
  %v4203 = vmul.f32 %v4163, %v3405
  %v4204 = vmul.f32 %v4164, %v3420
  %v4205 = vmul.f32 %v4165, %v3435
  %v4206 = vmul.f32 %v4166, %v3450
  %v4207 = vmul.f32 %v4167, %v3465
  %v4208 = vmul.f32 %v4168, %v3480
  %v4209 = vmul.f32 %v4169, %v3495
  %v4210 = vmul.f32 %v4170, %v3510
  %v4211 = vmul.f32 %v4171, %v3525
  %v4212 = vmul.f32 %v4172, %v3540
  %v4213 = vmul.f32 %v4173, %v3555
  %v4214 = vmul.f32 %v4174, %v3570
  %v4215 = vmul.f32 %v4175, %v3585
  %v4216 = vmul.f32 %v4176, %v3600
  %v4217 = vmul.f32 %v4177, %v3615
  %v4218 = vmul.f32 %v4178, %v3630
  %v4219 = vmul.f32 %v4179, %v3645
  %v4220 = vmul.f32 %v4180, %v3660
  %v4221 = vmul.f32 %v4181, %v3675
  %v4222 = vmul.f32 %v4182, %v3690
  %v4223 = vmul.f32 %v4183, %v3705
  %v4224 = vmul.f32 %v4184, %v3720
  %v4225 = vmul.f32 %v4185, %v3735
  %v4226 = vmul.f32 %v4186, %v3750
  %v4227 = vmul.f32 %v4187, %v3765
  %v4228 = vmul.f32 %v4188, %v3780
  %v4229 = vmul.f32 %v4189, %v3795
  %v4230 = vmul.f32 %v4190, %v3810
  %v4231 = vmul.f32 %v4191, %v3825
  %v4232 = vmul.f32 %v4192, %v3840
  %v4233 = vmul.f32 %v4193, %v3855
  %v4234 = vmul.f32 %v4194, %v3870
  %v4235 = vmul.f32 %v4195, %v3885
  %v4236 = vmul.f32 %v4196, %v3900
  %v4237 = vmul.f32 %v4197, %v3915
  %v4238 = vmul.f32 %v4198, %v3930
  %v4239 = vmul.f32 %v4199, %v3945
  %v4240 = vmul.f32 %v4200, %v3960
  %v4241 = vadd.f32 %v4201, 0.2548296
  %v4242 = vadd.f32 %v4202, 0.2548296
  %v4243 = vadd.f32 %v4203, 0.2548296
  %v4244 = vadd.f32 %v4204, 0.2548296
  %v4245 = vadd.f32 %v4205, 0.2548296
  %v4246 = vadd.f32 %v4206, 0.2548296
  %v4247 = vadd.f32 %v4207, 0.2548296
  %v4248 = vadd.f32 %v4208, 0.2548296
  %v4249 = vadd.f32 %v4209, 0.2548296
  %v4250 = vadd.f32 %v4210, 0.2548296
  %v4251 = vadd.f32 %v4211, 0.2548296
  %v4252 = vadd.f32 %v4212, 0.2548296
  %v4253 = vadd.f32 %v4213, 0.2548296
  %v4254 = vadd.f32 %v4214, 0.2548296
  %v4255 = vadd.f32 %v4215, 0.2548296
  %v4256 = vadd.f32 %v4216, 0.2548296
  %v4257 = vadd.f32 %v4217, 0.2548296
  %v4258 = vadd.f32 %v4218, 0.2548296
  %v4259 = vadd.f32 %v4219, 0.2548296
  %v4260 = vadd.f32 %v4220, 0.2548296
  %v4261 = vadd.f32 %v4221, 0.2548296
  %v4262 = vadd.f32 %v4222, 0.2548296
  %v4263 = vadd.f32 %v4223, 0.2548296
  %v4264 = vadd.f32 %v4224, 0.2548296
  %v4265 = vadd.f32 %v4225, 0.2548296
  %v4266 = vadd.f32 %v4226, 0.2548296
  %v4267 = vadd.f32 %v4227, 0.2548296
  %v4268 = vadd.f32 %v4228, 0.2548296
  %v4269 = vadd.f32 %v4229, 0.2548296
  %v4270 = vadd.f32 %v4230, 0.2548296
  %v4271 = vadd.f32 %v4231, 0.2548296
  %v4272 = vadd.f32 %v4232, 0.2548296
  %v4273 = vadd.f32 %v4233, 0.2548296
  %v4274 = vadd.f32 %v4234, 0.2548296
  %v4275 = vadd.f32 %v4235, 0.2548296
  %v4276 = vadd.f32 %v4236, 0.2548296
  %v4277 = vadd.f32 %v4237, 0.2548296
  %v4278 = vadd.f32 %v4238, 0.2548296
  %v4279 = vadd.f32 %v4239, 0.2548296
  %v4280 = vadd.f32 %v4240, 0.2548296
  %v4281 = vmul.f32 %v4241, %v3375
  %v4282 = vmul.f32 %v4242, %v3390
  %v4283 = vmul.f32 %v4243, %v3405
  %v4284 = vmul.f32 %v4244, %v3420
  %v4285 = vmul.f32 %v4245, %v3435
  %v4286 = vmul.f32 %v4246, %v3450
  %v4287 = vmul.f32 %v4247, %v3465
  %v4288 = vmul.f32 %v4248, %v3480
  %v4289 = vmul.f32 %v4249, %v3495
  %v4290 = vmul.f32 %v4250, %v3510
  %v4291 = vmul.f32 %v4251, %v3525
  %v4292 = vmul.f32 %v4252, %v3540
  %v4293 = vmul.f32 %v4253, %v3555
  %v4294 = vmul.f32 %v4254, %v3570
  %v4295 = vmul.f32 %v4255, %v3585
  %v4296 = vmul.f32 %v4256, %v3600
  %v4297 = vmul.f32 %v4257, %v3615
  %v4298 = vmul.f32 %v4258, %v3630
  %v4299 = vmul.f32 %v4259, %v3645
  %v4300 = vmul.f32 %v4260, %v3660
  %v4301 = vmul.f32 %v4261, %v3675
  %v4302 = vmul.f32 %v4262, %v3690
  %v4303 = vmul.f32 %v4263, %v3705
  %v4304 = vmul.f32 %v4264, %v3720
  %v4305 = vmul.f32 %v4265, %v3735
  %v4306 = vmul.f32 %v4266, %v3750
  %v4307 = vmul.f32 %v4267, %v3765
  %v4308 = vmul.f32 %v4268, %v3780
  %v4309 = vmul.f32 %v4269, %v3795
  %v4310 = vmul.f32 %v4270, %v3810
  %v4311 = vmul.f32 %v4271, %v3825
  %v4312 = vmul.f32 %v4272, %v3840
  %v4313 = vmul.f32 %v4273, %v3855
  %v4314 = vmul.f32 %v4274, %v3870
  %v4315 = vmul.f32 %v4275, %v3885
  %v4316 = vmul.f32 %v4276, %v3900
  %v4317 = vmul.f32 %v4277, %v3915
  %v4318 = vmul.f32 %v4278, %v3930
  %v4319 = vmul.f32 %v4279, %v3945
  %v4320 = vmul.f32 %v4280, %v3960
  %v4321 = vsub.f32 0.0, %v3241
  %v4322 = vsub.f32 0.0, %v3242
  %v4323 = vsub.f32 0.0, %v3243
  %v4324 = vsub.f32 0.0, %v3244
  %v4325 = vsub.f32 0.0, %v3245
  %v4326 = vsub.f32 0.0, %v3246
  %v4327 = vsub.f32 0.0, %v3247
  %v4328 = vsub.f32 0.0, %v3248
  %v4329 = vsub.f32 0.0, %v3249
  %v4330 = vsub.f32 0.0, %v3250
  %v4331 = vsub.f32 0.0, %v3251
  %v4332 = vsub.f32 0.0, %v3252
  %v4333 = vsub.f32 0.0, %v3253
  %v4334 = vsub.f32 0.0, %v3254
  %v4335 = vsub.f32 0.0, %v3255
  %v4336 = vsub.f32 0.0, %v3256
  %v4337 = vsub.f32 0.0, %v3257
  %v4338 = vsub.f32 0.0, %v3258
  %v4339 = vsub.f32 0.0, %v3259
  %v4340 = vsub.f32 0.0, %v3260
  %v4341 = vsub.f32 0.0, %v3261
  %v4342 = vsub.f32 0.0, %v3262
  %v4343 = vsub.f32 0.0, %v3263
  %v4344 = vsub.f32 0.0, %v3264
  %v4345 = vsub.f32 0.0, %v3265
  %v4346 = vsub.f32 0.0, %v3266
  %v4347 = vsub.f32 0.0, %v3267
  %v4348 = vsub.f32 0.0, %v3268
  %v4349 = vsub.f32 0.0, %v3269
  %v4350 = vsub.f32 0.0, %v3270
  %v4351 = vsub.f32 0.0, %v3271
  %v4352 = vsub.f32 0.0, %v3272
  %v4353 = vsub.f32 0.0, %v3273
  %v4354 = vsub.f32 0.0, %v3274
  %v4355 = vsub.f32 0.0, %v3275
  %v4356 = vsub.f32 0.0, %v3276
  %v4357 = vsub.f32 0.0, %v3277
  %v4358 = vsub.f32 0.0, %v3278
  %v4359 = vsub.f32 0.0, %v3279
  %v4360 = vsub.f32 0.0, %v3280
  %v4361 = vmul.f32 %v4321, %v3241
  %v4362 = vmul.f32 %v4322, %v3242
  %v4363 = vmul.f32 %v4323, %v3243
  %v4364 = vmul.f32 %v4324, %v3244
  %v4365 = vmul.f32 %v4325, %v3245
  %v4366 = vmul.f32 %v4326, %v3246
  %v4367 = vmul.f32 %v4327, %v3247
  %v4368 = vmul.f32 %v4328, %v3248
  %v4369 = vmul.f32 %v4329, %v3249
  %v4370 = vmul.f32 %v4330, %v3250
  %v4371 = vmul.f32 %v4331, %v3251
  %v4372 = vmul.f32 %v4332, %v3252
  %v4373 = vmul.f32 %v4333, %v3253
  %v4374 = vmul.f32 %v4334, %v3254
  %v4375 = vmul.f32 %v4335, %v3255
  %v4376 = vmul.f32 %v4336, %v3256
  %v4377 = vmul.f32 %v4337, %v3257
  %v4378 = vmul.f32 %v4338, %v3258
  %v4379 = vmul.f32 %v4339, %v3259
  %v4380 = vmul.f32 %v4340, %v3260
  %v4381 = vmul.f32 %v4341, %v3261
  %v4382 = vmul.f32 %v4342, %v3262
  %v4383 = vmul.f32 %v4343, %v3263
  %v4384 = vmul.f32 %v4344, %v3264
  %v4385 = vmul.f32 %v4345, %v3265
  %v4386 = vmul.f32 %v4346, %v3266
  %v4387 = vmul.f32 %v4347, %v3267
  %v4388 = vmul.f32 %v4348, %v3268
  %v4389 = vmul.f32 %v4349, %v3269
  %v4390 = vmul.f32 %v4350, %v3270
  %v4391 = vmul.f32 %v4351, %v3271
  %v4392 = vmul.f32 %v4352, %v3272
  %v4393 = vmul.f32 %v4353, %v3273
  %v4394 = vmul.f32 %v4354, %v3274
  %v4395 = vmul.f32 %v4355, %v3275
  %v4396 = vmul.f32 %v4356, %v3276
  %v4397 = vmul.f32 %v4357, %v3277
  %v4398 = vmul.f32 %v4358, %v3278
  %v4399 = vmul.f32 %v4359, %v3279
  %v4400 = vmul.f32 %v4360, %v3280
  %v4401 = vmul.f32 %v4361, 1.442695
  %v4402 = vpow.pop %v4401
  %v4403 = vmul.f32 %v4362, 1.442695
  %v4404 = vpow.pop %v4403
  %v4405 = vmul.f32 %v4363, 1.442695
  %v4406 = vpow.pop %v4405
  %v4407 = vmul.f32 %v4364, 1.442695
  %v4408 = vpow.pop %v4407
  %v4409 = vmul.f32 %v4365, 1.442695
  %v4410 = vpow.pop %v4409
  %v4411 = vmul.f32 %v4366, 1.442695
  %v4412 = vpow.pop %v4411
  %v4413 = vmul.f32 %v4367, 1.442695
  %v4414 = vpow.pop %v4413
  %v4415 = vmul.f32 %v4368, 1.442695
  %v4416 = vpow.pop %v4415
  %v4417 = vmul.f32 %v4369, 1.442695
  %v4418 = vpow.pop %v4417
  %v4419 = vmul.f32 %v4370, 1.442695
  %v4420 = vpow.pop %v4419
  %v4421 = vmul.f32 %v4371, 1.442695
  %v4422 = vpow.pop %v4421
  %v4423 = vmul.f32 %v4372, 1.442695
  %v4424 = vpow.pop %v4423
  %v4425 = vmul.f32 %v4373, 1.442695
  %v4426 = vpow.pop %v4425
  %v4427 = vmul.f32 %v4374, 1.442695
  %v4428 = vpow.pop %v4427
  %v4429 = vmul.f32 %v4375, 1.442695
  %v4430 = vpow.pop %v4429
  %v4431 = vmul.f32 %v4376, 1.442695
  %v4432 = vpow.pop %v4431
  %v4433 = vmul.f32 %v4377, 1.442695
  %v4434 = vpow.pop %v4433
  %v4435 = vmul.f32 %v4378, 1.442695
  %v4436 = vpow.pop %v4435
  %v4437 = vmul.f32 %v4379, 1.442695
  %v4438 = vpow.pop %v4437
  %v4439 = vmul.f32 %v4380, 1.442695
  %v4440 = vpow.pop %v4439
  %v4441 = vmul.f32 %v4381, 1.442695
  %v4442 = vpow.pop %v4441
  %v4443 = vmul.f32 %v4382, 1.442695
  %v4444 = vpow.pop %v4443
  %v4445 = vmul.f32 %v4383, 1.442695
  %v4446 = vpow.pop %v4445
  %v4447 = vmul.f32 %v4384, 1.442695
  %v4448 = vpow.pop %v4447
  %v4449 = vmul.f32 %v4385, 1.442695
  %v4450 = vpow.pop %v4449
  %v4451 = vmul.f32 %v4386, 1.442695
  %v4452 = vpow.pop %v4451
  %v4453 = vmul.f32 %v4387, 1.442695
  %v4454 = vpow.pop %v4453
  %v4455 = vmul.f32 %v4388, 1.442695
  %v4456 = vpow.pop %v4455
  %v4457 = vmul.f32 %v4389, 1.442695
  %v4458 = vpow.pop %v4457
  %v4459 = vmul.f32 %v4390, 1.442695
  %v4460 = vpow.pop %v4459
  %v4461 = vmul.f32 %v4391, 1.442695
  %v4462 = vpow.pop %v4461
  %v4463 = vmul.f32 %v4392, 1.442695
  %v4464 = vpow.pop %v4463
  %v4465 = vmul.f32 %v4393, 1.442695
  %v4466 = vpow.pop %v4465
  %v4467 = vmul.f32 %v4394, 1.442695
  %v4468 = vpow.pop %v4467
  %v4469 = vmul.f32 %v4395, 1.442695
  %v4470 = vpow.pop %v4469
  %v4471 = vmul.f32 %v4396, 1.442695
  %v4472 = vpow.pop %v4471
  %v4473 = vmul.f32 %v4397, 1.442695
  %v4474 = vpow.pop %v4473
  %v4475 = vmul.f32 %v4398, 1.442695
  %v4476 = vpow.pop %v4475
  %v4477 = vmul.f32 %v4399, 1.442695
  %v4478 = vpow.pop %v4477
  %v4479 = vmul.f32 %v4400, 1.442695
  %v4480 = vpow.pop %v4479
  %v4481 = vmul.f32 %v4281, %v4402
  %v4482 = vmul.f32 %v4282, %v4404
  %v4483 = vmul.f32 %v4283, %v4406
  %v4484 = vmul.f32 %v4284, %v4408
  %v4485 = vmul.f32 %v4285, %v4410
  %v4486 = vmul.f32 %v4286, %v4412
  %v4487 = vmul.f32 %v4287, %v4414
  %v4488 = vmul.f32 %v4288, %v4416
  %v4489 = vmul.f32 %v4289, %v4418
  %v4490 = vmul.f32 %v4290, %v4420
  %v4491 = vmul.f32 %v4291, %v4422
  %v4492 = vmul.f32 %v4292, %v4424
  %v4493 = vmul.f32 %v4293, %v4426
  %v4494 = vmul.f32 %v4294, %v4428
  %v4495 = vmul.f32 %v4295, %v4430
  %v4496 = vmul.f32 %v4296, %v4432
  %v4497 = vmul.f32 %v4297, %v4434
  %v4498 = vmul.f32 %v4298, %v4436
  %v4499 = vmul.f32 %v4299, %v4438
  %v4500 = vmul.f32 %v4300, %v4440
  %v4501 = vmul.f32 %v4301, %v4442
  %v4502 = vmul.f32 %v4302, %v4444
  %v4503 = vmul.f32 %v4303, %v4446
  %v4504 = vmul.f32 %v4304, %v4448
  %v4505 = vmul.f32 %v4305, %v4450
  %v4506 = vmul.f32 %v4306, %v4452
  %v4507 = vmul.f32 %v4307, %v4454
  %v4508 = vmul.f32 %v4308, %v4456
  %v4509 = vmul.f32 %v4309, %v4458
  %v4510 = vmul.f32 %v4310, %v4460
  %v4511 = vmul.f32 %v4311, %v4462
  %v4512 = vmul.f32 %v4312, %v4464
  %v4513 = vmul.f32 %v4313, %v4466
  %v4514 = vmul.f32 %v4314, %v4468
  %v4515 = vmul.f32 %v4315, %v4470
  %v4516 = vmul.f32 %v4316, %v4472
  %v4517 = vmul.f32 %v4317, %v4474
  %v4518 = vmul.f32 %v4318, %v4476
  %v4519 = vmul.f32 %v4319, %v4478
  %v4520 = vmul.f32 %v4320, %v4480
  %v4521 = vsub.f32 1.0, %v4481
  %v4522 = vsub.f32 1.0, %v4482
  %v4523 = vsub.f32 1.0, %v4483
  %v4524 = vsub.f32 1.0, %v4484
  %v4525 = vsub.f32 1.0, %v4485
  %v4526 = vsub.f32 1.0, %v4486
  %v4527 = vsub.f32 1.0, %v4487
  %v4528 = vsub.f32 1.0, %v4488
  %v4529 = vsub.f32 1.0, %v4489
  %v4530 = vsub.f32 1.0, %v4490
  %v4531 = vsub.f32 1.0, %v4491
  %v4532 = vsub.f32 1.0, %v4492
  %v4533 = vsub.f32 1.0, %v4493
  %v4534 = vsub.f32 1.0, %v4494
  %v4535 = vsub.f32 1.0, %v4495
  %v4536 = vsub.f32 1.0, %v4496
  %v4537 = vsub.f32 1.0, %v4497
  %v4538 = vsub.f32 1.0, %v4498
  %v4539 = vsub.f32 1.0, %v4499
  %v4540 = vsub.f32 1.0, %v4500
  %v4541 = vsub.f32 1.0, %v4501
  %v4542 = vsub.f32 1.0, %v4502
  %v4543 = vsub.f32 1.0, %v4503
  %v4544 = vsub.f32 1.0, %v4504
  %v4545 = vsub.f32 1.0, %v4505
  %v4546 = vsub.f32 1.0, %v4506
  %v4547 = vsub.f32 1.0, %v4507
  %v4548 = vsub.f32 1.0, %v4508
  %v4549 = vsub.f32 1.0, %v4509
  %v4550 = vsub.f32 1.0, %v4510
  %v4551 = vsub.f32 1.0, %v4511
  %v4552 = vsub.f32 1.0, %v4512
  %v4553 = vsub.f32 1.0, %v4513
  %v4554 = vsub.f32 1.0, %v4514
  %v4555 = vsub.f32 1.0, %v4515
  %v4556 = vsub.f32 1.0, %v4516
  %v4557 = vsub.f32 1.0, %v4517
  %v4558 = vsub.f32 1.0, %v4518
  %v4559 = vsub.f32 1.0, %v4519
  %v4560 = vsub.f32 1.0, %v4520
  %vm4561 = vcmp.ge.f32.partialorder %v3201, 0.0
  %vm4562 = vcmp.ge.f32.partialorder %v3202, 0.0
  %vm4563 = vcmp.ge.f32.partialorder %v3203, 0.0
  %vm4564 = vcmp.ge.f32.partialorder %v3204, 0.0
  %vm4565 = vcmp.ge.f32.partialorder %v3205, 0.0
  %vm4566 = vcmp.ge.f32.partialorder %v3206, 0.0
  %vm4567 = vcmp.ge.f32.partialorder %v3207, 0.0
  %vm4568 = vcmp.ge.f32.partialorder %v3208, 0.0
  %vm4569 = vcmp.ge.f32.partialorder %v3209, 0.0
  %vm4570 = vcmp.ge.f32.partialorder %v3210, 0.0
  %vm4571 = vcmp.ge.f32.partialorder %v3211, 0.0
  %vm4572 = vcmp.ge.f32.partialorder %v3212, 0.0
  %vm4573 = vcmp.ge.f32.partialorder %v3213, 0.0
  %vm4574 = vcmp.ge.f32.partialorder %v3214, 0.0
  %vm4575 = vcmp.ge.f32.partialorder %v3215, 0.0
  %vm4576 = vcmp.ge.f32.partialorder %v3216, 0.0
  %vm4577 = vcmp.ge.f32.partialorder %v3217, 0.0
  %vm4578 = vcmp.ge.f32.partialorder %v3218, 0.0
  %vm4579 = vcmp.ge.f32.partialorder %v3219, 0.0
  %vm4580 = vcmp.ge.f32.partialorder %v3220, 0.0
  %vm4581 = vcmp.ge.f32.partialorder %v3221, 0.0
  %vm4582 = vcmp.ge.f32.partialorder %v3222, 0.0
  %vm4583 = vcmp.ge.f32.partialorder %v3223, 0.0
  %vm4584 = vcmp.ge.f32.partialorder %v3224, 0.0
  %vm4585 = vcmp.ge.f32.partialorder %v3225, 0.0
  %vm4586 = vcmp.ge.f32.partialorder %v3226, 0.0
  %vm4587 = vcmp.ge.f32.partialorder %v3227, 0.0
  %vm4588 = vcmp.ge.f32.partialorder %v3228, 0.0
  %vm4589 = vcmp.ge.f32.partialorder %v3229, 0.0
  %vm4590 = vcmp.ge.f32.partialorder %v3230, 0.0
  %vm4591 = vcmp.ge.f32.partialorder %v3231, 0.0
  %vm4592 = vcmp.ge.f32.partialorder %v3232, 0.0
  %vm4593 = vcmp.ge.f32.partialorder %v3233, 0.0
  %vm4594 = vcmp.ge.f32.partialorder %v3234, 0.0
  %vm4595 = vcmp.ge.f32.partialorder %v3235, 0.0
  %vm4596 = vcmp.ge.f32.partialorder %v3236, 0.0
  %vm4597 = vcmp.ge.f32.partialorder %v3237, 0.0
  %vm4598 = vcmp.ge.f32.partialorder %v3238, 0.0
  %vm4599 = vcmp.ge.f32.partialorder %v3239, 0.0
  %vm4600 = vcmp.ge.f32.partialorder %v3240, 0.0
  %v4601 = vsub.f32 0.0, %v4521
  %v4602 = vsub.f32 0.0, %v4522
  %v4603 = vsub.f32 0.0, %v4523
  %v4604 = vsub.f32 0.0, %v4524
  %v4605 = vsub.f32 0.0, %v4525
  %v4606 = vsub.f32 0.0, %v4526
  %v4607 = vsub.f32 0.0, %v4527
  %v4608 = vsub.f32 0.0, %v4528
  %v4609 = vsub.f32 0.0, %v4529
  %v4610 = vsub.f32 0.0, %v4530
  %v4611 = vsub.f32 0.0, %v4531
  %v4612 = vsub.f32 0.0, %v4532
  %v4613 = vsub.f32 0.0, %v4533
  %v4614 = vsub.f32 0.0, %v4534
  %v4615 = vsub.f32 0.0, %v4535
  %v4616 = vsub.f32 0.0, %v4536
  %v4617 = vsub.f32 0.0, %v4537
  %v4618 = vsub.f32 0.0, %v4538
  %v4619 = vsub.f32 0.0, %v4539
  %v4620 = vsub.f32 0.0, %v4540
  %v4621 = vsub.f32 0.0, %v4541
  %v4622 = vsub.f32 0.0, %v4542
  %v4623 = vsub.f32 0.0, %v4543
  %v4624 = vsub.f32 0.0, %v4544
  %v4625 = vsub.f32 0.0, %v4545
  %v4626 = vsub.f32 0.0, %v4546
  %v4627 = vsub.f32 0.0, %v4547
  %v4628 = vsub.f32 0.0, %v4548
  %v4629 = vsub.f32 0.0, %v4549
  %v4630 = vsub.f32 0.0, %v4550
  %v4631 = vsub.f32 0.0, %v4551
  %v4632 = vsub.f32 0.0, %v4552
  %v4633 = vsub.f32 0.0, %v4553
  %v4634 = vsub.f32 0.0, %v4554
  %v4635 = vsub.f32 0.0, %v4555
  %v4636 = vsub.f32 0.0, %v4556
  %v4637 = vsub.f32 0.0, %v4557
  %v4638 = vsub.f32 0.0, %v4558
  %v4639 = vsub.f32 0.0, %v4559
  %v4640 = vsub.f32 0.0, %v4560
  %v4641 = vsel %vm4561, %v4521, %v4601
  %v4642 = vsel %vm4562, %v4522, %v4602
  %v4643 = vsel %vm4563, %v4523, %v4603
  %v4644 = vsel %vm4564, %v4524, %v4604
  %v4645 = vsel %vm4565, %v4525, %v4605
  %v4646 = vsel %vm4566, %v4526, %v4606
  %v4647 = vsel %vm4567, %v4527, %v4607
  %v4648 = vsel %vm4568, %v4528, %v4608
  %v4649 = vsel %vm4569, %v4529, %v4609
  %v4650 = vsel %vm4570, %v4530, %v4610
  %v4651 = vsel %vm4571, %v4531, %v4611
  %v4652 = vsel %vm4572, %v4532, %v4612
  %v4653 = vsel %vm4573, %v4533, %v4613
  %v4654 = vsel %vm4574, %v4534, %v4614
  %v4655 = vsel %vm4575, %v4535, %v4615
  %v4656 = vsel %vm4576, %v4536, %v4616
  %v4657 = vsel %vm4577, %v4537, %v4617
  %v4658 = vsel %vm4578, %v4538, %v4618
  %v4659 = vsel %vm4579, %v4539, %v4619
  %v4660 = vsel %vm4580, %v4540, %v4620
  %v4661 = vsel %vm4581, %v4541, %v4621
  %v4662 = vsel %vm4582, %v4542, %v4622
  %v4663 = vsel %vm4583, %v4543, %v4623
  %v4664 = vsel %vm4584, %v4544, %v4624
  %v4665 = vsel %vm4585, %v4545, %v4625
  %v4666 = vsel %vm4586, %v4546, %v4626
  %v4667 = vsel %vm4587, %v4547, %v4627
  %v4668 = vsel %vm4588, %v4548, %v4628
  %v4669 = vsel %vm4589, %v4549, %v4629
  %v4670 = vsel %vm4590, %v4550, %v4630
  %v4671 = vsel %vm4591, %v4551, %v4631
  %v4672 = vsel %vm4592, %v4552, %v4632
  %v4673 = vsel %vm4593, %v4553, %v4633
  %v4674 = vsel %vm4594, %v4554, %v4634
  %v4675 = vsel %vm4595, %v4555, %v4635
  %v4676 = vsel %vm4596, %v4556, %v4636
  %v4677 = vsel %vm4597, %v4557, %v4637
  %v4678 = vsel %vm4598, %v4558, %v4638
  %v4679 = vsel %vm4599, %v4559, %v4639
  %v4680 = vsel %vm4600, %v4560, %v4640
  %v4681 = vadd.f32 %v4641, 1.0
  %v4682 = vadd.f32 %v4642, 1.0
  %v4683 = vadd.f32 %v4643, 1.0
  %v4684 = vadd.f32 %v4644, 1.0
  %v4685 = vadd.f32 %v4645, 1.0
  %v4686 = vadd.f32 %v4646, 1.0
  %v4687 = vadd.f32 %v4647, 1.0
  %v4688 = vadd.f32 %v4648, 1.0
  %v4689 = vadd.f32 %v4649, 1.0
  %v4690 = vadd.f32 %v4650, 1.0
  %v4691 = vadd.f32 %v4651, 1.0
  %v4692 = vadd.f32 %v4652, 1.0
  %v4693 = vadd.f32 %v4653, 1.0
  %v4694 = vadd.f32 %v4654, 1.0
  %v4695 = vadd.f32 %v4655, 1.0
  %v4696 = vadd.f32 %v4656, 1.0
  %v4697 = vadd.f32 %v4657, 1.0
  %v4698 = vadd.f32 %v4658, 1.0
  %v4699 = vadd.f32 %v4659, 1.0
  %v4700 = vadd.f32 %v4660, 1.0
  %v4701 = vadd.f32 %v4661, 1.0
  %v4702 = vadd.f32 %v4662, 1.0
  %v4703 = vadd.f32 %v4663, 1.0
  %v4704 = vadd.f32 %v4664, 1.0
  %v4705 = vadd.f32 %v4665, 1.0
  %v4706 = vadd.f32 %v4666, 1.0
  %v4707 = vadd.f32 %v4667, 1.0
  %v4708 = vadd.f32 %v4668, 1.0
  %v4709 = vadd.f32 %v4669, 1.0
  %v4710 = vadd.f32 %v4670, 1.0
  %v4711 = vadd.f32 %v4671, 1.0
  %v4712 = vadd.f32 %v4672, 1.0
  %v4713 = vadd.f32 %v4673, 1.0
  %v4714 = vadd.f32 %v4674, 1.0
  %v4715 = vadd.f32 %v4675, 1.0
  %v4716 = vadd.f32 %v4676, 1.0
  %v4717 = vadd.f32 %v4677, 1.0
  %v4718 = vadd.f32 %v4678, 1.0
  %v4719 = vadd.f32 %v4679, 1.0
  %v4720 = vadd.f32 %v4680, 1.0
  %v4721 = vmul.f32 %v3161, %v4681
  %v4722 = vmul.f32 %v3162, %v4682
  %v4723 = vmul.f32 %v3163, %v4683
  %v4724 = vmul.f32 %v3164, %v4684
  %v4725 = vmul.f32 %v3165, %v4685
  %v4726 = vmul.f32 %v3166, %v4686
  %v4727 = vmul.f32 %v3167, %v4687
  %v4728 = vmul.f32 %v3168, %v4688
  %v4729 = vmul.f32 %v3169, %v4689
  %v4730 = vmul.f32 %v3170, %v4690
  %v4731 = vmul.f32 %v3171, %v4691
  %v4732 = vmul.f32 %v3172, %v4692
  %v4733 = vmul.f32 %v3173, %v4693
  %v4734 = vmul.f32 %v3174, %v4694
  %v4735 = vmul.f32 %v3175, %v4695
  %v4736 = vmul.f32 %v3176, %v4696
  %v4737 = vmul.f32 %v3177, %v4697
  %v4738 = vmul.f32 %v3178, %v4698
  %v4739 = vmul.f32 %v3179, %v4699
  %v4740 = vmul.f32 %v3180, %v4700
  %v4741 = vmul.f32 %v3181, %v4701
  %v4742 = vmul.f32 %v3182, %v4702
  %v4743 = vmul.f32 %v3183, %v4703
  %v4744 = vmul.f32 %v3184, %v4704
  %v4745 = vmul.f32 %v3185, %v4705
  %v4746 = vmul.f32 %v3186, %v4706
  %v4747 = vmul.f32 %v3187, %v4707
  %v4748 = vmul.f32 %v3188, %v4708
  %v4749 = vmul.f32 %v3189, %v4709
  %v4750 = vmul.f32 %v3190, %v4710
  %v4751 = vmul.f32 %v3191, %v4711
  %v4752 = vmul.f32 %v3192, %v4712
  %v4753 = vmul.f32 %v3193, %v4713
  %v4754 = vmul.f32 %v3194, %v4714
  %v4755 = vmul.f32 %v3195, %v4715
  %v4756 = vmul.f32 %v3196, %v4716
  %v4757 = vmul.f32 %v3197, %v4717
  %v4758 = vmul.f32 %v3198, %v4718
  %v4759 = vmul.f32 %v3199, %v4719
  %v4760 = vmul.f32 %v3200, %v4720
  %v4761 = vpack.c.bf16 %v4729, %v4721
  %v4762 = vpack.c.bf16 %v4730, %v4722
  %v4763 = vpack.c.bf16 %v4731, %v4723
  %v4764 = vpack.c.bf16 %v4732, %v4724
  %v4765 = vpack.c.bf16 %v4733, %v4725
  %v4766 = vpack.c.bf16 %v4734, %v4726
  %v4767 = vpack.c.bf16 %v4735, %v4727
  %v4768 = vpack.c.bf16 %v4736, %v4728
  %v4769 = vpack.c.bf16 %v4745, %v4737
  %v4770 = vpack.c.bf16 %v4746, %v4738
  %v4771 = vpack.c.bf16 %v4747, %v4739
  %v4772 = vpack.c.bf16 %v4748, %v4740
  %v4773 = vpack.c.bf16 %v4749, %v4741
  %v4774 = vpack.c.bf16 %v4750, %v4742
  %v4775 = vpack.c.bf16 %v4751, %v4743
  %v4776 = vpack.c.bf16 %v4752, %v4744
  %v4777 = vpack.c.bf16 %v4753, %v4753
  %v4778 = vpack.c.bf16 %v4754, %v4754
  %v4779 = vpack.c.bf16 %v4755, %v4755
  %v4780 = vpack.c.bf16 %v4756, %v4756
  %v4781 = vpack.c.bf16 %v4757, %v4757
  %v4782 = vpack.c.bf16 %v4758, %v4758
  %v4783 = vpack.c.bf16 %v4759, %v4759
  %v4784 = vpack.c.bf16 %v4760, %v4760
  %v4785 = vld [vmem:[%s14] sm:$0xff]
  %v4786 = vld [vmem:[%s14 + $0x8] sm:$0xff]
  %v4787 = vld [vmem:[%s14 + $0x10] sm:$0xff]
  %v4788 = vld [vmem:[%s14 + $0x18] sm:$0xff]
  %v4789 = vld [vmem:[%s14 + $0x20] sm:$0xff]
  %v4790 = vld [vmem:[%s14 + $0x28] sm:$0xff]
  %v4791 = vld [vmem:[%s14 + $0x30] sm:$0xff]
  %v4792 = vld [vmem:[%s14 + $0x38] sm:$0xff]
  %v4793 = vld [vmem:[%s14 + $0x40] sm:$0xff]
  %v4794 = vld [vmem:[%s14 + $0x48] sm:$0xff]
  %v4795 = vld [vmem:[%s14 + $0x50] sm:$0xff]
  %v4796 = vld [vmem:[%s14 + $0x58] sm:$0xff]
  %v4797 = vld [vmem:[%s14 + $0x60] sm:$0xff]
  %v4798 = vld [vmem:[%s14 + $0x68] sm:$0xff]
  %v4799 = vld [vmem:[%s14 + $0x70] sm:$0xff]
  %v4800 = vld [vmem:[%s14 + $0x78] sm:$0xff]
  %v4801 = vld [vmem:[%s14 + $0x80] sm:$0xff]
  %v4802 = vld [vmem:[%s14 + $0x88] sm:$0xff]
  %v4803 = vld [vmem:[%s14 + $0x90] sm:$0xff]
  %v4804 = vld [vmem:[%s14 + $0x98] sm:$0xff]
  %v4805 = vld [vmem:[%s14 + $0xa0] sm:$0xff]
  %v4806 = vld [vmem:[%s14 + $0xa8] sm:$0xff]
  %v4807 = vld [vmem:[%s14 + $0xb0] sm:$0xff]
  %v4808 = vld [vmem:[%s14 + $0xb8] sm:$0xff]
  %v4809 = vld [vmem:[%s14 + $0xc0] sm:$0xff]
  %v4810 = vld [vmem:[%s14 + $0xc8] sm:$0xff]
  %v4811 = vld [vmem:[%s14 + $0xd0] sm:$0xff]
  %v4812 = vld [vmem:[%s14 + $0xd8] sm:$0xff]
  %v4813 = vld [vmem:[%s14 + $0xe0] sm:$0xff]
  %v4814 = vld [vmem:[%s14 + $0xe8] sm:$0xff]
  %v4815 = vld [vmem:[%s14 + $0xf0] sm:$0xff]
  %v4816 = vld [vmem:[%s14 + $0xf8] sm:$0xff]
  %v4817 = vld [vmem:[%s14 + $0x100] sm:$0xff]
  %v4818 = vld [vmem:[%s14 + $0x108] sm:$0xff]
  %v4819 = vld [vmem:[%s14 + $0x110] sm:$0xff]
  %v4820 = vld [vmem:[%s14 + $0x118] sm:$0xff]
  %v4821 = vld [vmem:[%s14 + $0x120] sm:$0xff]
  %v4822 = vld [vmem:[%s14 + $0x128] sm:$0xff]
  %v4823 = vld [vmem:[%s14 + $0x130] sm:$0xff]
  %v4824 = vld [vmem:[%s14 + $0x138] sm:$0xff]
  %v4825 = vld [vmem:[%s14 + $0x140] sm:$0xff]
  %v4826 = vld [vmem:[%s14 + $0x148] sm:$0xff]
  %v4827 = vld [vmem:[%s14 + $0x150] sm:$0xff]
  %v4828 = vld [vmem:[%s14 + $0x158] sm:$0xff]
  %v4829 = vld [vmem:[%s14 + $0x160] sm:$0xff]
  %v4830 = vld [vmem:[%s14 + $0x168] sm:$0xff]
  %v4831 = vld [vmem:[%s14 + $0x170] sm:$0xff]
  %v4832 = vld [vmem:[%s14 + $0x178] sm:$0xff]
  %v4833 = vld [vmem:[%s14 + $0x180] sm:$0xff]
  %v4834 = vld [vmem:[%s14 + $0x188] sm:$0xff]
  %v4835 = vld [vmem:[%s14 + $0x190] sm:$0xff]
  %v4836 = vld [vmem:[%s14 + $0x198] sm:$0xff]
  %v4837 = vld [vmem:[%s14 + $0x1a0] sm:$0xff]
  %v4838 = vld [vmem:[%s14 + $0x1a8] sm:$0xff]
  %v4839 = vld [vmem:[%s14 + $0x1b0] sm:$0xff]
  %v4840 = vld [vmem:[%s14 + $0x1b8] sm:$0xff]
  %v4841 = vld [vmem:[%s14 + $0x1c0] sm:$0xff]
  %v4842 = vld [vmem:[%s14 + $0x1c8] sm:$0xff]
  %v4843 = vld [vmem:[%s14 + $0x1d0] sm:$0xff]
  %v4844 = vld [vmem:[%s14 + $0x1d8] sm:$0xff]
  %v4845 = vld [vmem:[%s14 + $0x1e0] sm:$0xff]
  %v4846 = vld [vmem:[%s14 + $0x1e8] sm:$0xff]
  %v4847 = vld [vmem:[%s14 + $0x1f0] sm:$0xff]
  %v4848 = vld [vmem:[%s14 + $0x1f8] sm:$0xff]
  %v4849 = vld [vmem:[%s14 + $0x200] sm:$0xff]
  %v4850 = vld [vmem:[%s14 + $0x208] sm:$0xff]
  %v4851 = vld [vmem:[%s14 + $0x210] sm:$0xff]
  %v4852 = vld [vmem:[%s14 + $0x218] sm:$0xff]
  %v4853 = vld [vmem:[%s14 + $0x220] sm:$0xff]
  %v4854 = vld [vmem:[%s14 + $0x228] sm:$0xff]
  %v4855 = vld [vmem:[%s14 + $0x230] sm:$0xff]
  %v4856 = vld [vmem:[%s14 + $0x238] sm:$0xff]
  %v4857 = vld [vmem:[%s14 + $0x240] sm:$0xff]
  %v4858 = vld [vmem:[%s14 + $0x248] sm:$0xff]
  %v4859 = vld [vmem:[%s14 + $0x250] sm:$0xff]
  %v4860 = vld [vmem:[%s14 + $0x258] sm:$0xff]
  %v4861 = vld [vmem:[%s14 + $0x260] sm:$0xff]
  %v4862 = vld [vmem:[%s14 + $0x268] sm:$0xff]
  %v4863 = vld [vmem:[%s14 + $0x270] sm:$0xff]
  %v4864 = vld [vmem:[%s14 + $0x278] sm:$0xff]
  %v4865 = vld [vmem:[%s14 + $0x280] sm:$0xff]
  %v4866 = vld [vmem:[%s14 + $0x288] sm:$0xff]
  %v4867 = vld [vmem:[%s14 + $0x290] sm:$0xff]
  %v4868 = vld [vmem:[%s14 + $0x298] sm:$0xff]
  %v4869 = vld [vmem:[%s14 + $0x2a0] sm:$0xff]
  %v4870 = vld [vmem:[%s14 + $0x2a8] sm:$0xff]
  %v4871 = vld [vmem:[%s14 + $0x2b0] sm:$0xff]
  %v4872 = vld [vmem:[%s14 + $0x2b8] sm:$0xff]
  %v4873 = vld [vmem:[%s14 + $0x2c0] sm:$0xff]
  %v4874 = vld [vmem:[%s14 + $0x2c8] sm:$0xff]
  %v4875 = vld [vmem:[%s14 + $0x2d0] sm:$0xff]
  %v4876 = vld [vmem:[%s14 + $0x2d8] sm:$0xff]
  %v4877 = vld [vmem:[%s14 + $0x2e0] sm:$0xff]
  %v4878 = vld [vmem:[%s14 + $0x2e8] sm:$0xff]
  %v4879 = vld [vmem:[%s14 + $0x2f0] sm:$0xff]
  %v4880 = vld [vmem:[%s14 + $0x2f8] sm:$0xff]
  %v4881 = vld [vmem:[%s14 + $0x300] sm:$0xff]
  %v4882 = vld [vmem:[%s14 + $0x308] sm:$0xff]
  %v4883 = vld [vmem:[%s14 + $0x310] sm:$0xff]
  %v4884 = vld [vmem:[%s14 + $0x318] sm:$0xff]
  %v4885 = vld [vmem:[%s14 + $0x320] sm:$0xff]
  %v4886 = vld [vmem:[%s14 + $0x328] sm:$0xff]
  %v4887 = vld [vmem:[%s14 + $0x330] sm:$0xff]
  %v4888 = vld [vmem:[%s14 + $0x338] sm:$0xff]
  %v4889 = vld [vmem:[%s14 + $0x340] sm:$0xff]
  %v4890 = vld [vmem:[%s14 + $0x348] sm:$0xff]
  %v4891 = vld [vmem:[%s14 + $0x350] sm:$0xff]
  %v4892 = vld [vmem:[%s14 + $0x358] sm:$0xff]
  %v4893 = vld [vmem:[%s14 + $0x360] sm:$0xff]
  %v4894 = vld [vmem:[%s14 + $0x368] sm:$0xff]
  %v4895 = vld [vmem:[%s14 + $0x370] sm:$0xff]
  %v4896 = vld [vmem:[%s14 + $0x378] sm:$0xff]
  %v4897 = vld [vmem:[%s14 + $0x380] sm:$0xff]
  %v4898 = vld [vmem:[%s14 + $0x388] sm:$0xff]
  %v4899 = vld [vmem:[%s14 + $0x390] sm:$0xff]
  %v4900 = vld [vmem:[%s14 + $0x398] sm:$0xff]
  %v4901 = vld [vmem:[%s14 + $0x3a0] sm:$0xff]
  %v4902 = vld [vmem:[%s14 + $0x3a8] sm:$0xff]
  %v4903 = vld [vmem:[%s14 + $0x3b0] sm:$0xff]
  %v4904 = vld [vmem:[%s14 + $0x3b8] sm:$0xff]
  %v4905 = vld [vmem:[%s14 + $0x3c0] sm:$0xff]
  %v4906 = vld [vmem:[%s14 + $0x3c8] sm:$0xff]
  %v4907 = vld [vmem:[%s14 + $0x3d0] sm:$0xff]
  %v4908 = vld [vmem:[%s14 + $0x3d8] sm:$0xff]
  %v4909 = vld [vmem:[%s14 + $0x3e0] sm:$0xff]
  %v4910 = vld [vmem:[%s14 + $0x3e8] sm:$0xff]
  %v4911 = vld [vmem:[%s14 + $0x3f0] sm:$0xff]
  %v4912 = vld [vmem:[%s14 + $0x3f8] sm:$0xff]
  %v4913 = vld [vmem:[%s15] sm:$0x3]
  %v4915 = vperm.slane %v4913, 0
  %v4916 = vperm.slane %v4913, 1
  %v5047 = vunpack.c.l.b16 %v4785
  %v5048 = vunpack.c.h.b16 %v4785
  %v5049 = vunpack.c.l.b16 %v4786
  %v5050 = vunpack.c.h.b16 %v4786
  %v5051 = vunpack.c.l.b16 %v4787
  %v5052 = vunpack.c.h.b16 %v4787
  %v5053 = vunpack.c.l.b16 %v4788
  %v5054 = vunpack.c.h.b16 %v4788
  %v5055 = vunpack.c.l.b16 %v4789
  %v5056 = vunpack.c.h.b16 %v4789
  %v5057 = vunpack.c.l.b16 %v4790
  %v5058 = vunpack.c.h.b16 %v4790
  %v5059 = vunpack.c.l.b16 %v4791
  %v5060 = vunpack.c.h.b16 %v4791
  %v5061 = vunpack.c.l.b16 %v4792
  %v5062 = vunpack.c.h.b16 %v4792
  %v5063 = vunpack.c.l.b16 %v4793
  %v5064 = vunpack.c.h.b16 %v4793
  %v5065 = vunpack.c.l.b16 %v4794
  %v5066 = vunpack.c.h.b16 %v4794
  %v5067 = vunpack.c.l.b16 %v4795
  %v5068 = vunpack.c.h.b16 %v4795
  %v5069 = vunpack.c.l.b16 %v4796
  %v5070 = vunpack.c.h.b16 %v4796
  %v5071 = vunpack.c.l.b16 %v4797
  %v5072 = vunpack.c.h.b16 %v4797
  %v5073 = vunpack.c.l.b16 %v4798
  %v5074 = vunpack.c.h.b16 %v4798
  %v5075 = vunpack.c.l.b16 %v4799
  %v5076 = vunpack.c.h.b16 %v4799
  %v5077 = vunpack.c.l.b16 %v4800
  %v5078 = vunpack.c.h.b16 %v4800
  %v5079 = vunpack.c.l.b16 %v4801
  %v5080 = vunpack.c.h.b16 %v4801
  %v5081 = vunpack.c.l.b16 %v4802
  %v5082 = vunpack.c.h.b16 %v4802
  %v5083 = vunpack.c.l.b16 %v4803
  %v5084 = vunpack.c.h.b16 %v4803
  %v5085 = vunpack.c.l.b16 %v4804
  %v5086 = vunpack.c.h.b16 %v4804
  %v5087 = vunpack.c.l.b16 %v4805
  %v5088 = vunpack.c.h.b16 %v4805
  %v5089 = vunpack.c.l.b16 %v4806
  %v5090 = vunpack.c.h.b16 %v4806
  %v5091 = vunpack.c.l.b16 %v4807
  %v5092 = vunpack.c.h.b16 %v4807
  %v5093 = vunpack.c.l.b16 %v4808
  %v5094 = vunpack.c.h.b16 %v4808
  %v5095 = vunpack.c.l.b16 %v4809
  %v5096 = vunpack.c.h.b16 %v4809
  %v5097 = vunpack.c.l.b16 %v4810
  %v5098 = vunpack.c.h.b16 %v4810
  %v5099 = vunpack.c.l.b16 %v4811
  %v5100 = vunpack.c.h.b16 %v4811
  %v5101 = vunpack.c.l.b16 %v4812
  %v5102 = vunpack.c.h.b16 %v4812
  %v5103 = vunpack.c.l.b16 %v4813
  %v5104 = vunpack.c.h.b16 %v4813
  %v5105 = vunpack.c.l.b16 %v4814
  %v5106 = vunpack.c.h.b16 %v4814
  %v5107 = vunpack.c.l.b16 %v4815
  %v5108 = vunpack.c.h.b16 %v4815
  %v5109 = vunpack.c.l.b16 %v4816
  %v5110 = vunpack.c.h.b16 %v4816
  %v5111 = vunpack.c.l.b16 %v4817
  %v5112 = vunpack.c.h.b16 %v4817
  %v5113 = vunpack.c.l.b16 %v4818
  %v5114 = vunpack.c.h.b16 %v4818
  %v5115 = vunpack.c.l.b16 %v4819
  %v5116 = vunpack.c.h.b16 %v4819
  %v5117 = vunpack.c.l.b16 %v4820
  %v5118 = vunpack.c.h.b16 %v4820
  %v5119 = vunpack.c.l.b16 %v4821
  %v5120 = vunpack.c.h.b16 %v4821
  %v5121 = vunpack.c.l.b16 %v4822
  %v5122 = vunpack.c.h.b16 %v4822
  %v5123 = vunpack.c.l.b16 %v4823
  %v5124 = vunpack.c.h.b16 %v4823
  %v5125 = vunpack.c.l.b16 %v4824
  %v5126 = vunpack.c.h.b16 %v4824
  %v5127 = vunpack.c.l.b16 %v4825
  %v5128 = vunpack.c.h.b16 %v4825
  %v5129 = vunpack.c.l.b16 %v4826
  %v5130 = vunpack.c.h.b16 %v4826
  %v5131 = vunpack.c.l.b16 %v4827
  %v5132 = vunpack.c.h.b16 %v4827
  %v5133 = vunpack.c.l.b16 %v4828
  %v5134 = vunpack.c.h.b16 %v4828
  %v5135 = vunpack.c.l.b16 %v4829
  %v5136 = vunpack.c.h.b16 %v4829
  %v5137 = vunpack.c.l.b16 %v4830
  %v5138 = vunpack.c.h.b16 %v4830
  %v5139 = vunpack.c.l.b16 %v4831
  %v5140 = vunpack.c.h.b16 %v4831
  %v5141 = vunpack.c.l.b16 %v4832
  %v5142 = vunpack.c.h.b16 %v4832
  %v5143 = vunpack.c.l.b16 %v4833
  %v5144 = vunpack.c.h.b16 %v4833
  %v5145 = vunpack.c.l.b16 %v4834
  %v5146 = vunpack.c.h.b16 %v4834
  %v5147 = vunpack.c.l.b16 %v4835
  %v5148 = vunpack.c.h.b16 %v4835
  %v5149 = vunpack.c.l.b16 %v4836
  %v5150 = vunpack.c.h.b16 %v4836
  %v5151 = vunpack.c.l.b16 %v4837
  %v5152 = vunpack.c.h.b16 %v4837
  %v5153 = vunpack.c.l.b16 %v4838
  %v5154 = vunpack.c.h.b16 %v4838
  %v5155 = vunpack.c.l.b16 %v4839
  %v5156 = vunpack.c.h.b16 %v4839
  %v5157 = vunpack.c.l.b16 %v4840
  %v5158 = vunpack.c.h.b16 %v4840
  %v5159 = vunpack.c.l.b16 %v4841
  %v5160 = vunpack.c.h.b16 %v4841
  %v5161 = vunpack.c.l.b16 %v4842
  %v5162 = vunpack.c.h.b16 %v4842
  %v5163 = vunpack.c.l.b16 %v4843
  %v5164 = vunpack.c.h.b16 %v4843
  %v5165 = vunpack.c.l.b16 %v4844
  %v5166 = vunpack.c.h.b16 %v4844
  %v5167 = vunpack.c.l.b16 %v4845
  %v5168 = vunpack.c.h.b16 %v4845
  %v5169 = vunpack.c.l.b16 %v4846
  %v5170 = vunpack.c.h.b16 %v4846
  %v5171 = vunpack.c.l.b16 %v4847
  %v5172 = vunpack.c.h.b16 %v4847
  %v5173 = vunpack.c.l.b16 %v4848
  %v5174 = vunpack.c.h.b16 %v4848
  %v5175 = vunpack.c.l.b16 %v4849
  %v5176 = vunpack.c.h.b16 %v4849
  %v5177 = vunpack.c.l.b16 %v4850
  %v5178 = vunpack.c.h.b16 %v4850
  %v5179 = vunpack.c.l.b16 %v4851
  %v5180 = vunpack.c.h.b16 %v4851
  %v5181 = vunpack.c.l.b16 %v4852
  %v5182 = vunpack.c.h.b16 %v4852
  %v5183 = vunpack.c.l.b16 %v4853
  %v5184 = vunpack.c.h.b16 %v4853
  %v5185 = vunpack.c.l.b16 %v4854
  %v5186 = vunpack.c.h.b16 %v4854
  %v5187 = vunpack.c.l.b16 %v4855
  %v5188 = vunpack.c.h.b16 %v4855
  %v5189 = vunpack.c.l.b16 %v4856
  %v5190 = vunpack.c.h.b16 %v4856
  %v5191 = vunpack.c.l.b16 %v4857
  %v5192 = vunpack.c.h.b16 %v4857
  %v5193 = vunpack.c.l.b16 %v4858
  %v5194 = vunpack.c.h.b16 %v4858
  %v5195 = vunpack.c.l.b16 %v4859
  %v5196 = vunpack.c.h.b16 %v4859
  %v5197 = vunpack.c.l.b16 %v4860
  %v5198 = vunpack.c.h.b16 %v4860
  %v5199 = vunpack.c.l.b16 %v4861
  %v5200 = vunpack.c.h.b16 %v4861
  %v5201 = vunpack.c.l.b16 %v4862
  %v5202 = vunpack.c.h.b16 %v4862
  %v5203 = vunpack.c.l.b16 %v4863
  %v5204 = vunpack.c.h.b16 %v4863
  %v5205 = vunpack.c.l.b16 %v4864
  %v5206 = vunpack.c.h.b16 %v4864
  %v5207 = vunpack.c.l.b16 %v4865
  %v5208 = vunpack.c.h.b16 %v4865
  %v5209 = vunpack.c.l.b16 %v4866
  %v5210 = vunpack.c.h.b16 %v4866
  %v5211 = vunpack.c.l.b16 %v4867
  %v5212 = vunpack.c.h.b16 %v4867
  %v5213 = vunpack.c.l.b16 %v4868
  %v5214 = vunpack.c.h.b16 %v4868
  %v5215 = vunpack.c.l.b16 %v4869
  %v5216 = vunpack.c.h.b16 %v4869
  %v5217 = vunpack.c.l.b16 %v4870
  %v5218 = vunpack.c.h.b16 %v4870
  %v5219 = vunpack.c.l.b16 %v4871
  %v5220 = vunpack.c.h.b16 %v4871
  %v5221 = vunpack.c.l.b16 %v4872
  %v5222 = vunpack.c.h.b16 %v4872
  %v5223 = vunpack.c.l.b16 %v4873
  %v5224 = vunpack.c.h.b16 %v4873
  %v5225 = vunpack.c.l.b16 %v4874
  %v5226 = vunpack.c.h.b16 %v4874
  %v5227 = vunpack.c.l.b16 %v4875
  %v5228 = vunpack.c.h.b16 %v4875
  %v5229 = vunpack.c.l.b16 %v4876
  %v5230 = vunpack.c.h.b16 %v4876
  %v5231 = vunpack.c.l.b16 %v4877
  %v5232 = vunpack.c.h.b16 %v4877
  %v5233 = vunpack.c.l.b16 %v4878
  %v5234 = vunpack.c.h.b16 %v4878
  %v5235 = vunpack.c.l.b16 %v4879
  %v5236 = vunpack.c.h.b16 %v4879
  %v5237 = vunpack.c.l.b16 %v4880
  %v5238 = vunpack.c.h.b16 %v4880
  %v5239 = vunpack.c.l.b16 %v4881
  %v5240 = vunpack.c.h.b16 %v4881
  %v5241 = vunpack.c.l.b16 %v4882
  %v5242 = vunpack.c.h.b16 %v4882
  %v5243 = vunpack.c.l.b16 %v4883
  %v5244 = vunpack.c.h.b16 %v4883
  %v5245 = vunpack.c.l.b16 %v4884
  %v5246 = vunpack.c.h.b16 %v4884
  %v5247 = vunpack.c.l.b16 %v4885
  %v5248 = vunpack.c.h.b16 %v4885
  %v5249 = vunpack.c.l.b16 %v4886
  %v5250 = vunpack.c.h.b16 %v4886
  %v5251 = vunpack.c.l.b16 %v4887
  %v5252 = vunpack.c.h.b16 %v4887
  %v5253 = vunpack.c.l.b16 %v4888
  %v5254 = vunpack.c.h.b16 %v4888
  %v5255 = vunpack.c.l.b16 %v4889
  %v5256 = vunpack.c.h.b16 %v4889
  %v5257 = vunpack.c.l.b16 %v4890
  %v5258 = vunpack.c.h.b16 %v4890
  %v5259 = vunpack.c.l.b16 %v4891
  %v5260 = vunpack.c.h.b16 %v4891
  %v5261 = vunpack.c.l.b16 %v4892
  %v5262 = vunpack.c.h.b16 %v4892
  %v5263 = vunpack.c.l.b16 %v4893
  %v5264 = vunpack.c.h.b16 %v4893
  %v5265 = vunpack.c.l.b16 %v4894
  %v5266 = vunpack.c.h.b16 %v4894
  %v5267 = vunpack.c.l.b16 %v4895
  %v5268 = vunpack.c.h.b16 %v4895
  %v5269 = vunpack.c.l.b16 %v4896
  %v5270 = vunpack.c.h.b16 %v4896
  %v5271 = vunpack.c.l.b16 %v4897
  %v5272 = vunpack.c.h.b16 %v4897
  %v5273 = vunpack.c.l.b16 %v4898
  %v5274 = vunpack.c.h.b16 %v4898
  %v5275 = vunpack.c.l.b16 %v4899
  %v5276 = vunpack.c.h.b16 %v4899
  %v5277 = vunpack.c.l.b16 %v4900
  %v5278 = vunpack.c.h.b16 %v4900
  %v5279 = vunpack.c.l.b16 %v4901
  %v5280 = vunpack.c.h.b16 %v4901
  %v5281 = vunpack.c.l.b16 %v4902
  %v5282 = vunpack.c.h.b16 %v4902
  %v5283 = vunpack.c.l.b16 %v4903
  %v5284 = vunpack.c.h.b16 %v4903
  %v5285 = vunpack.c.l.b16 %v4904
  %v5286 = vunpack.c.h.b16 %v4904
  %v5287 = vunpack.c.l.b16 %v4905
  %v5288 = vunpack.c.h.b16 %v4905
  %v5289 = vunpack.c.l.b16 %v4906
  %v5290 = vunpack.c.h.b16 %v4906
  %v5291 = vunpack.c.l.b16 %v4907
  %v5292 = vunpack.c.h.b16 %v4907
  %v5293 = vunpack.c.l.b16 %v4908
  %v5294 = vunpack.c.h.b16 %v4908
  %v5295 = vunpack.c.l.b16 %v4909
  %v5296 = vunpack.c.h.b16 %v4909
  %v5297 = vunpack.c.l.b16 %v4910
  %v5298 = vunpack.c.h.b16 %v4910
  %v5299 = vunpack.c.l.b16 %v4911
  %v5300 = vunpack.c.h.b16 %v4911
  %v5301 = vunpack.c.l.b16 %v4912
  %v5302 = vunpack.c.h.b16 %v4912
  %v5303 = vpack.c.b16 %v5049, %v5047
  %v5304 = vpack.c.b16 %v5050, %v5048
  %v5305 = vpack.c.b16 %v5053, %v5051
  %v5306 = vpack.c.b16 %v5054, %v5052
  %v5307 = vpack.c.b16 %v5057, %v5055
  %v5308 = vpack.c.b16 %v5058, %v5056
  %v5309 = vpack.c.b16 %v5061, %v5059
  %v5310 = vpack.c.b16 %v5062, %v5060
  %v5311 = vpack.c.b16 %v5065, %v5063
  %v5312 = vpack.c.b16 %v5066, %v5064
  %v5313 = vpack.c.b16 %v5069, %v5067
  %v5314 = vpack.c.b16 %v5070, %v5068
  %v5315 = vpack.c.b16 %v5073, %v5071
  %v5316 = vpack.c.b16 %v5074, %v5072
  %v5317 = vpack.c.b16 %v5077, %v5075
  %v5318 = vpack.c.b16 %v5078, %v5076
  %v5319 = vpack.c.b16 %v5081, %v5079
  %v5320 = vpack.c.b16 %v5082, %v5080
  %v5321 = vpack.c.b16 %v5085, %v5083
  %v5322 = vpack.c.b16 %v5086, %v5084
  %v5323 = vpack.c.b16 %v5089, %v5087
  %v5324 = vpack.c.b16 %v5090, %v5088
  %v5325 = vpack.c.b16 %v5093, %v5091
  %v5326 = vpack.c.b16 %v5094, %v5092
  %v5327 = vpack.c.b16 %v5097, %v5095
  %v5328 = vpack.c.b16 %v5098, %v5096
  %v5329 = vpack.c.b16 %v5101, %v5099
  %v5330 = vpack.c.b16 %v5102, %v5100
  %v5331 = vpack.c.b16 %v5105, %v5103
  %v5332 = vpack.c.b16 %v5106, %v5104
  %v5333 = vpack.c.b16 %v5109, %v5107
  %v5334 = vpack.c.b16 %v5110, %v5108
  %v5335 = vpack.c.b16 %v5113, %v5111
  %v5336 = vpack.c.b16 %v5114, %v5112
  %v5337 = vpack.c.b16 %v5117, %v5115
  %v5338 = vpack.c.b16 %v5118, %v5116
  %v5339 = vpack.c.b16 %v5121, %v5119
  %v5340 = vpack.c.b16 %v5122, %v5120
  %v5341 = vpack.c.b16 %v5125, %v5123
  %v5342 = vpack.c.b16 %v5126, %v5124
  %v5343 = vpack.c.b16 %v5129, %v5127
  %v5344 = vpack.c.b16 %v5130, %v5128
  %v5345 = vpack.c.b16 %v5133, %v5131
  %v5346 = vpack.c.b16 %v5134, %v5132
  %v5347 = vpack.c.b16 %v5137, %v5135
  %v5348 = vpack.c.b16 %v5138, %v5136
  %v5349 = vpack.c.b16 %v5141, %v5139
  %v5350 = vpack.c.b16 %v5142, %v5140
  %v5351 = vpack.c.b16 %v5145, %v5143
  %v5352 = vpack.c.b16 %v5146, %v5144
  %v5353 = vpack.c.b16 %v5149, %v5147
  %v5354 = vpack.c.b16 %v5150, %v5148
  %v5355 = vpack.c.b16 %v5153, %v5151
  %v5356 = vpack.c.b16 %v5154, %v5152
  %v5357 = vpack.c.b16 %v5157, %v5155
  %v5358 = vpack.c.b16 %v5158, %v5156
  %v5359 = vpack.c.b16 %v5161, %v5159
  %v5360 = vpack.c.b16 %v5162, %v5160
  %v5361 = vpack.c.b16 %v5165, %v5163
  %v5362 = vpack.c.b16 %v5166, %v5164
  %v5363 = vpack.c.b16 %v5169, %v5167
  %v5364 = vpack.c.b16 %v5170, %v5168
  %v5365 = vpack.c.b16 %v5173, %v5171
  %v5366 = vpack.c.b16 %v5174, %v5172
  %v5367 = vpack.c.b16 %v5177, %v5175
  %v5368 = vpack.c.b16 %v5178, %v5176
  %v5369 = vpack.c.b16 %v5181, %v5179
  %v5370 = vpack.c.b16 %v5182, %v5180
  %v5371 = vpack.c.b16 %v5185, %v5183
  %v5372 = vpack.c.b16 %v5186, %v5184
  %v5373 = vpack.c.b16 %v5189, %v5187
  %v5374 = vpack.c.b16 %v5190, %v5188
  %v5375 = vpack.c.b16 %v5193, %v5191
  %v5376 = vpack.c.b16 %v5194, %v5192
  %v5377 = vpack.c.b16 %v5197, %v5195
  %v5378 = vpack.c.b16 %v5198, %v5196
  %v5379 = vpack.c.b16 %v5201, %v5199
  %v5380 = vpack.c.b16 %v5202, %v5200
  %v5381 = vpack.c.b16 %v5205, %v5203
  %v5382 = vpack.c.b16 %v5206, %v5204
  %v5383 = vpack.c.b16 %v5209, %v5207
  %v5384 = vpack.c.b16 %v5210, %v5208
  %v5385 = vpack.c.b16 %v5213, %v5211
  %v5386 = vpack.c.b16 %v5214, %v5212
  %v5387 = vpack.c.b16 %v5217, %v5215
  %v5388 = vpack.c.b16 %v5218, %v5216
  %v5389 = vpack.c.b16 %v5221, %v5219
  %v5390 = vpack.c.b16 %v5222, %v5220
  %v5391 = vpack.c.b16 %v5225, %v5223
  %v5392 = vpack.c.b16 %v5226, %v5224
  %v5393 = vpack.c.b16 %v5229, %v5227
  %v5394 = vpack.c.b16 %v5230, %v5228
  %v5395 = vpack.c.b16 %v5233, %v5231
  %v5396 = vpack.c.b16 %v5234, %v5232
  %v5397 = vpack.c.b16 %v5237, %v5235
  %v5398 = vpack.c.b16 %v5238, %v5236
  %v5399 = vpack.c.b16 %v5241, %v5239
  %v5400 = vpack.c.b16 %v5242, %v5240
  %v5401 = vpack.c.b16 %v5245, %v5243
  %v5402 = vpack.c.b16 %v5246, %v5244
  %v5403 = vpack.c.b16 %v5249, %v5247
  %v5404 = vpack.c.b16 %v5250, %v5248
  %v5405 = vpack.c.b16 %v5253, %v5251
  %v5406 = vpack.c.b16 %v5254, %v5252
  %v5407 = vpack.c.b16 %v5257, %v5255
  %v5408 = vpack.c.b16 %v5258, %v5256
  %v5409 = vpack.c.b16 %v5261, %v5259
  %v5410 = vpack.c.b16 %v5262, %v5260
  %v5411 = vpack.c.b16 %v5265, %v5263
  %v5412 = vpack.c.b16 %v5266, %v5264
  %v5413 = vpack.c.b16 %v5269, %v5267
  %v5414 = vpack.c.b16 %v5270, %v5268
  %v5415 = vpack.c.b16 %v5273, %v5271
  %v5416 = vpack.c.b16 %v5274, %v5272
  %v5417 = vpack.c.b16 %v5277, %v5275
  %v5418 = vpack.c.b16 %v5278, %v5276
  %v5419 = vpack.c.b16 %v5281, %v5279
  %v5420 = vpack.c.b16 %v5282, %v5280
  %v5421 = vpack.c.b16 %v5285, %v5283
  %v5422 = vpack.c.b16 %v5286, %v5284
  %v5423 = vpack.c.b16 %v5289, %v5287
  %v5424 = vpack.c.b16 %v5290, %v5288
  %v5425 = vpack.c.b16 %v5293, %v5291
  %v5426 = vpack.c.b16 %v5294, %v5292
  %v5427 = vpack.c.b16 %v5297, %v5295
  %v5428 = vpack.c.b16 %v5298, %v5296
  %v5429 = vpack.c.b16 %v5301, %v5299
  %v5430 = vpack.c.b16 %v5302, %v5300
  %5559 = vmatpush.bf16.msra.mxu0 %v5317
  %5560 = vmatpush.bf16.msra.mxu0 %v5315
  %5561 = vmatpush.bf16.msra.mxu0 %v5313
  %5562 = vmatpush.bf16.msra.mxu0 %v5311
  %5563 = vmatpush.bf16.msra.mxu0 %v5309
  %5564 = vmatpush.bf16.msra.mxu0 %v5307
  %5565 = vmatpush.bf16.msra.mxu0 %v5305
  %5566 = vmatpush.bf16.msra.mxu0 %v5303
  %5567 = vmatmul.bf16.gmra.mxu0 %v4761
  %v5568 = vpop.f32.mrf.mxu0
  %v5569 = vadd.f32 %v4915, %v5568
  %v5570 = vpop.f32.mrf.mxu0
  %v5571 = vadd.f32 %v4915, %v5570
  %5572 = vmatmul.bf16.gmra.mxu0 %v4769
  %v5573 = vpop.f32.mrf.mxu0
  %v5574 = vadd.f32 %v4915, %v5573
  %v5575 = vpop.f32.mrf.mxu0
  %v5576 = vadd.f32 %v4915, %v5575
  %5577 = vmatmul.bf16.gmra.mxu0 %v4777
  %v5578 = vpop.f32.mrf.mxu0
  %v5579 = vadd.f32 %v4915, %v5578
  %v5580 = vpop.f32.mrf.mxu0
  %5581 = vdwg.mxu0
  %5582 = vmatpush.bf16.msra.mxu0 %v5333
  %5583 = vmatpush.bf16.msra.mxu0 %v5331
  %5584 = vmatpush.bf16.msra.mxu0 %v5329
  %5585 = vmatpush.bf16.msra.mxu0 %v5327
  %5586 = vmatpush.bf16.msra.mxu0 %v5325
  %5587 = vmatpush.bf16.msra.mxu0 %v5323
  %5588 = vmatpush.bf16.msra.mxu0 %v5321
  %5589 = vmatpush.bf16.msra.mxu0 %v5319
  %5590 = vmatmul.bf16.gmra.mxu0 %v4762
  %v5591 = vpop.f32.mrf.mxu0
  %v5592 = vadd.f32 %v5569, %v5591
  %v5593 = vpop.f32.mrf.mxu0
  %v5594 = vadd.f32 %v5571, %v5593
  %5595 = vmatmul.bf16.gmra.mxu0 %v4770
  %v5596 = vpop.f32.mrf.mxu0
  %v5597 = vadd.f32 %v5574, %v5596
  %v5598 = vpop.f32.mrf.mxu0
  %v5599 = vadd.f32 %v5576, %v5598
  %5600 = vmatmul.bf16.gmra.mxu0 %v4778
  %v5601 = vpop.f32.mrf.mxu0
  %v5602 = vadd.f32 %v5579, %v5601
  %v5603 = vpop.f32.mrf.mxu0
  %5604 = vdwg.mxu0
  %5605 = vmatpush.bf16.msra.mxu0 %v5349
  %5606 = vmatpush.bf16.msra.mxu0 %v5347
  %5607 = vmatpush.bf16.msra.mxu0 %v5345
  %5608 = vmatpush.bf16.msra.mxu0 %v5343
  %5609 = vmatpush.bf16.msra.mxu0 %v5341
  %5610 = vmatpush.bf16.msra.mxu0 %v5339
  %5611 = vmatpush.bf16.msra.mxu0 %v5337
  %5612 = vmatpush.bf16.msra.mxu0 %v5335
  %5613 = vmatmul.bf16.gmra.mxu0 %v4763
  %v5614 = vpop.f32.mrf.mxu0
  %v5615 = vadd.f32 %v5592, %v5614
  %v5616 = vpop.f32.mrf.mxu0
  %v5617 = vadd.f32 %v5594, %v5616
  %5618 = vmatmul.bf16.gmra.mxu0 %v4771
  %v5619 = vpop.f32.mrf.mxu0
  %v5620 = vadd.f32 %v5597, %v5619
  %v5621 = vpop.f32.mrf.mxu0
  %v5622 = vadd.f32 %v5599, %v5621
  %5623 = vmatmul.bf16.gmra.mxu0 %v4779
  %v5624 = vpop.f32.mrf.mxu0
  %v5625 = vadd.f32 %v5602, %v5624
  %v5626 = vpop.f32.mrf.mxu0
  %5627 = vdwg.mxu0
  %5628 = vmatpush.bf16.msra.mxu0 %v5365
  %5629 = vmatpush.bf16.msra.mxu0 %v5363
  %5630 = vmatpush.bf16.msra.mxu0 %v5361
  %5631 = vmatpush.bf16.msra.mxu0 %v5359
  %5632 = vmatpush.bf16.msra.mxu0 %v5357
  %5633 = vmatpush.bf16.msra.mxu0 %v5355
  %5634 = vmatpush.bf16.msra.mxu0 %v5353
  %5635 = vmatpush.bf16.msra.mxu0 %v5351
  %5636 = vmatmul.bf16.gmra.mxu0 %v4764
  %v5637 = vpop.f32.mrf.mxu0
  %v5638 = vadd.f32 %v5615, %v5637
  %v5639 = vpop.f32.mrf.mxu0
  %v5640 = vadd.f32 %v5617, %v5639
  %5641 = vmatmul.bf16.gmra.mxu0 %v4772
  %v5642 = vpop.f32.mrf.mxu0
  %v5643 = vadd.f32 %v5620, %v5642
  %v5644 = vpop.f32.mrf.mxu0
  %v5645 = vadd.f32 %v5622, %v5644
  %5646 = vmatmul.bf16.gmra.mxu0 %v4780
  %v5647 = vpop.f32.mrf.mxu0
  %v5648 = vadd.f32 %v5625, %v5647
  %v5649 = vpop.f32.mrf.mxu0
  %5650 = vdwg.mxu0
  %5651 = vmatpush.bf16.msra.mxu0 %v5381
  %5652 = vmatpush.bf16.msra.mxu0 %v5379
  %5653 = vmatpush.bf16.msra.mxu0 %v5377
  %5654 = vmatpush.bf16.msra.mxu0 %v5375
  %5655 = vmatpush.bf16.msra.mxu0 %v5373
  %5656 = vmatpush.bf16.msra.mxu0 %v5371
  %5657 = vmatpush.bf16.msra.mxu0 %v5369
  %5658 = vmatpush.bf16.msra.mxu0 %v5367
  %5659 = vmatmul.bf16.gmra.mxu0 %v4765
  %v5660 = vpop.f32.mrf.mxu0
  %v5661 = vadd.f32 %v5638, %v5660
  %v5662 = vpop.f32.mrf.mxu0
  %v5663 = vadd.f32 %v5640, %v5662
  %5664 = vmatmul.bf16.gmra.mxu0 %v4773
  %v5665 = vpop.f32.mrf.mxu0
  %v5666 = vadd.f32 %v5643, %v5665
  %v5667 = vpop.f32.mrf.mxu0
  %v5668 = vadd.f32 %v5645, %v5667
  %5669 = vmatmul.bf16.gmra.mxu0 %v4781
  %v5670 = vpop.f32.mrf.mxu0
  %v5671 = vadd.f32 %v5648, %v5670
  %v5672 = vpop.f32.mrf.mxu0
  %5673 = vdwg.mxu0
  %5674 = vmatpush.bf16.msra.mxu0 %v5397
  %5675 = vmatpush.bf16.msra.mxu0 %v5395
  %5676 = vmatpush.bf16.msra.mxu0 %v5393
  %5677 = vmatpush.bf16.msra.mxu0 %v5391
  %5678 = vmatpush.bf16.msra.mxu0 %v5389
  %5679 = vmatpush.bf16.msra.mxu0 %v5387
  %5680 = vmatpush.bf16.msra.mxu0 %v5385
  %5681 = vmatpush.bf16.msra.mxu0 %v5383
  %5682 = vmatmul.bf16.gmra.mxu0 %v4766
  %v5683 = vpop.f32.mrf.mxu0
  %v5684 = vadd.f32 %v5661, %v5683
  %v5685 = vpop.f32.mrf.mxu0
  %v5686 = vadd.f32 %v5663, %v5685
  %5687 = vmatmul.bf16.gmra.mxu0 %v4774
  %v5688 = vpop.f32.mrf.mxu0
  %v5689 = vadd.f32 %v5666, %v5688
  %v5690 = vpop.f32.mrf.mxu0
  %v5691 = vadd.f32 %v5668, %v5690
  %5692 = vmatmul.bf16.gmra.mxu0 %v4782
  %v5693 = vpop.f32.mrf.mxu0
  %v5694 = vadd.f32 %v5671, %v5693
  %v5695 = vpop.f32.mrf.mxu0
  %5696 = vdwg.mxu0
  %5697 = vmatpush.bf16.msra.mxu0 %v5413
  %5698 = vmatpush.bf16.msra.mxu0 %v5411
  %5699 = vmatpush.bf16.msra.mxu0 %v5409
  %5700 = vmatpush.bf16.msra.mxu0 %v5407
  %5701 = vmatpush.bf16.msra.mxu0 %v5405
  %5702 = vmatpush.bf16.msra.mxu0 %v5403
  %5703 = vmatpush.bf16.msra.mxu0 %v5401
  %5704 = vmatpush.bf16.msra.mxu0 %v5399
  %5705 = vmatmul.bf16.gmra.mxu0 %v4767
  %v5706 = vpop.f32.mrf.mxu0
  %v5707 = vadd.f32 %v5684, %v5706
  %v5708 = vpop.f32.mrf.mxu0
  %v5709 = vadd.f32 %v5686, %v5708
  %5710 = vmatmul.bf16.gmra.mxu0 %v4775
  %v5711 = vpop.f32.mrf.mxu0
  %v5712 = vadd.f32 %v5689, %v5711
  %v5713 = vpop.f32.mrf.mxu0
  %v5714 = vadd.f32 %v5691, %v5713
  %5715 = vmatmul.bf16.gmra.mxu0 %v4783
  %v5716 = vpop.f32.mrf.mxu0
  %v5717 = vadd.f32 %v5694, %v5716
  %v5718 = vpop.f32.mrf.mxu0
  %5719 = vdwg.mxu0
  %5720 = vmatpush.bf16.msra.mxu0 %v5429
  %5721 = vmatpush.bf16.msra.mxu0 %v5427
  %5722 = vmatpush.bf16.msra.mxu0 %v5425
  %5723 = vmatpush.bf16.msra.mxu0 %v5423
  %5724 = vmatpush.bf16.msra.mxu0 %v5421
  %5725 = vmatpush.bf16.msra.mxu0 %v5419
  %5726 = vmatpush.bf16.msra.mxu0 %v5417
  %5727 = vmatpush.bf16.msra.mxu0 %v5415
  %5728 = vmatmul.bf16.gmra.mxu0 %v4768
  %v5729 = vpop.f32.mrf.mxu0
  %v5730 = vadd.f32 %v5707, %v5729
  %v5731 = vpop.f32.mrf.mxu0
  %v5732 = vadd.f32 %v5709, %v5731
  %5733 = vmatmul.bf16.gmra.mxu0 %v4776
  %v5734 = vpop.f32.mrf.mxu0
  %v5735 = vadd.f32 %v5712, %v5734
  %v5736 = vpop.f32.mrf.mxu0
  %v5737 = vadd.f32 %v5714, %v5736
  %5738 = vmatmul.bf16.gmra.mxu0 %v4784
  %v5739 = vpop.f32.mrf.mxu0
  %v5740 = vadd.f32 %v5717, %v5739
  %v5741 = vpop.f32.mrf.mxu0
  %5742 = vdwg.mxu0
  %5743 = vmatpush.bf16.msra.mxu0 %v5318
  %5744 = vmatpush.bf16.msra.mxu0 %v5316
  %5745 = vmatpush.bf16.msra.mxu0 %v5314
  %5746 = vmatpush.bf16.msra.mxu0 %v5312
  %5747 = vmatpush.bf16.msra.mxu0 %v5310
  %5748 = vmatpush.bf16.msra.mxu0 %v5308
  %5749 = vmatpush.bf16.msra.mxu0 %v5306
  %5750 = vmatpush.bf16.msra.mxu0 %v5304
  %5751 = vmatmul.bf16.gmra.mxu0 %v4761
  %v5752 = vpop.f32.mrf.mxu0
  %v5753 = vadd.f32 %v4916, %v5752
  %v5754 = vpop.f32.mrf.mxu0
  %v5755 = vadd.f32 %v4916, %v5754
  %5756 = vmatmul.bf16.gmra.mxu0 %v4769
  %v5757 = vpop.f32.mrf.mxu0
  %v5758 = vadd.f32 %v4916, %v5757
  %v5759 = vpop.f32.mrf.mxu0
  %v5760 = vadd.f32 %v4916, %v5759
  %5761 = vmatmul.bf16.gmra.mxu0 %v4777
  %v5762 = vpop.f32.mrf.mxu0
  %v5763 = vadd.f32 %v4916, %v5762
  %v5764 = vpop.f32.mrf.mxu0
  %5765 = vdwg.mxu0
  %5766 = vmatpush.bf16.msra.mxu0 %v5334
  %5767 = vmatpush.bf16.msra.mxu0 %v5332
  %5768 = vmatpush.bf16.msra.mxu0 %v5330
  %5769 = vmatpush.bf16.msra.mxu0 %v5328
  %5770 = vmatpush.bf16.msra.mxu0 %v5326
  %5771 = vmatpush.bf16.msra.mxu0 %v5324
  %5772 = vmatpush.bf16.msra.mxu0 %v5322
  %5773 = vmatpush.bf16.msra.mxu0 %v5320
  %5774 = vmatmul.bf16.gmra.mxu0 %v4762
  %v5775 = vpop.f32.mrf.mxu0
  %v5776 = vadd.f32 %v5753, %v5775
  %v5777 = vpop.f32.mrf.mxu0
  %v5778 = vadd.f32 %v5755, %v5777
  %5779 = vmatmul.bf16.gmra.mxu0 %v4770
  %v5780 = vpop.f32.mrf.mxu0
  %v5781 = vadd.f32 %v5758, %v5780
  %v5782 = vpop.f32.mrf.mxu0
  %v5783 = vadd.f32 %v5760, %v5782
  %5784 = vmatmul.bf16.gmra.mxu0 %v4778
  %v5785 = vpop.f32.mrf.mxu0
  %v5786 = vadd.f32 %v5763, %v5785
  %v5787 = vpop.f32.mrf.mxu0
  %5788 = vdwg.mxu0
  %5789 = vmatpush.bf16.msra.mxu0 %v5350
  %5790 = vmatpush.bf16.msra.mxu0 %v5348
  %5791 = vmatpush.bf16.msra.mxu0 %v5346
  %5792 = vmatpush.bf16.msra.mxu0 %v5344
  %5793 = vmatpush.bf16.msra.mxu0 %v5342
  %5794 = vmatpush.bf16.msra.mxu0 %v5340
  %5795 = vmatpush.bf16.msra.mxu0 %v5338
  %5796 = vmatpush.bf16.msra.mxu0 %v5336
  %5797 = vmatmul.bf16.gmra.mxu0 %v4763
  %v5798 = vpop.f32.mrf.mxu0
  %v5799 = vadd.f32 %v5776, %v5798
  %v5800 = vpop.f32.mrf.mxu0
  %v5801 = vadd.f32 %v5778, %v5800
  %5802 = vmatmul.bf16.gmra.mxu0 %v4771
  %v5803 = vpop.f32.mrf.mxu0
  %v5804 = vadd.f32 %v5781, %v5803
  %v5805 = vpop.f32.mrf.mxu0
  %v5806 = vadd.f32 %v5783, %v5805
  %5807 = vmatmul.bf16.gmra.mxu0 %v4779
  %v5808 = vpop.f32.mrf.mxu0
  %v5809 = vadd.f32 %v5786, %v5808
  %v5810 = vpop.f32.mrf.mxu0
  %5811 = vdwg.mxu0
  %5812 = vmatpush.bf16.msra.mxu0 %v5366
  %5813 = vmatpush.bf16.msra.mxu0 %v5364
  %5814 = vmatpush.bf16.msra.mxu0 %v5362
  %5815 = vmatpush.bf16.msra.mxu0 %v5360
  %5816 = vmatpush.bf16.msra.mxu0 %v5358
  %5817 = vmatpush.bf16.msra.mxu0 %v5356
  %5818 = vmatpush.bf16.msra.mxu0 %v5354
  %5819 = vmatpush.bf16.msra.mxu0 %v5352
  %5820 = vmatmul.bf16.gmra.mxu0 %v4764
  %v5821 = vpop.f32.mrf.mxu0
  %v5822 = vadd.f32 %v5799, %v5821
  %v5823 = vpop.f32.mrf.mxu0
  %v5824 = vadd.f32 %v5801, %v5823
  %5825 = vmatmul.bf16.gmra.mxu0 %v4772
  %v5826 = vpop.f32.mrf.mxu0
  %v5827 = vadd.f32 %v5804, %v5826
  %v5828 = vpop.f32.mrf.mxu0
  %v5829 = vadd.f32 %v5806, %v5828
  %5830 = vmatmul.bf16.gmra.mxu0 %v4780
  %v5831 = vpop.f32.mrf.mxu0
  %v5832 = vadd.f32 %v5809, %v5831
  %v5833 = vpop.f32.mrf.mxu0
  %5834 = vdwg.mxu0
  %5835 = vmatpush.bf16.msra.mxu0 %v5382
  %5836 = vmatpush.bf16.msra.mxu0 %v5380
  %5837 = vmatpush.bf16.msra.mxu0 %v5378
  %5838 = vmatpush.bf16.msra.mxu0 %v5376
  %5839 = vmatpush.bf16.msra.mxu0 %v5374
  %5840 = vmatpush.bf16.msra.mxu0 %v5372
  %5841 = vmatpush.bf16.msra.mxu0 %v5370
  %5842 = vmatpush.bf16.msra.mxu0 %v5368
  %5843 = vmatmul.bf16.gmra.mxu0 %v4765
  %v5844 = vpop.f32.mrf.mxu0
  %v5845 = vadd.f32 %v5822, %v5844
  %v5846 = vpop.f32.mrf.mxu0
  %v5847 = vadd.f32 %v5824, %v5846
  %5848 = vmatmul.bf16.gmra.mxu0 %v4773
  %v5849 = vpop.f32.mrf.mxu0
  %v5850 = vadd.f32 %v5827, %v5849
  %v5851 = vpop.f32.mrf.mxu0
  %v5852 = vadd.f32 %v5829, %v5851
  %5853 = vmatmul.bf16.gmra.mxu0 %v4781
  %v5854 = vpop.f32.mrf.mxu0
  %v5855 = vadd.f32 %v5832, %v5854
  %v5856 = vpop.f32.mrf.mxu0
  %5857 = vdwg.mxu0
  %5858 = vmatpush.bf16.msra.mxu0 %v5398
  %5859 = vmatpush.bf16.msra.mxu0 %v5396
  %5860 = vmatpush.bf16.msra.mxu0 %v5394
  %5861 = vmatpush.bf16.msra.mxu0 %v5392
  %5862 = vmatpush.bf16.msra.mxu0 %v5390
  %5863 = vmatpush.bf16.msra.mxu0 %v5388
  %5864 = vmatpush.bf16.msra.mxu0 %v5386
  %5865 = vmatpush.bf16.msra.mxu0 %v5384
  %5866 = vmatmul.bf16.gmra.mxu0 %v4766
  %v5867 = vpop.f32.mrf.mxu0
  %v5868 = vadd.f32 %v5845, %v5867
  %v5869 = vpop.f32.mrf.mxu0
  %v5870 = vadd.f32 %v5847, %v5869
  %5871 = vmatmul.bf16.gmra.mxu0 %v4774
  %v5872 = vpop.f32.mrf.mxu0
  %v5873 = vadd.f32 %v5850, %v5872
  %v5874 = vpop.f32.mrf.mxu0
  %v5875 = vadd.f32 %v5852, %v5874
  %5876 = vmatmul.bf16.gmra.mxu0 %v4782
  %v5877 = vpop.f32.mrf.mxu0
  %v5878 = vadd.f32 %v5855, %v5877
  %v5879 = vpop.f32.mrf.mxu0
  %5880 = vdwg.mxu0
  %5881 = vmatpush.bf16.msra.mxu0 %v5414
  %5882 = vmatpush.bf16.msra.mxu0 %v5412
  %5883 = vmatpush.bf16.msra.mxu0 %v5410
  %5884 = vmatpush.bf16.msra.mxu0 %v5408
  %5885 = vmatpush.bf16.msra.mxu0 %v5406
  %5886 = vmatpush.bf16.msra.mxu0 %v5404
  %5887 = vmatpush.bf16.msra.mxu0 %v5402
  %5888 = vmatpush.bf16.msra.mxu0 %v5400
  %5889 = vmatmul.bf16.gmra.mxu0 %v4767
  %v5890 = vpop.f32.mrf.mxu0
  %v5891 = vadd.f32 %v5868, %v5890
  %v5892 = vpop.f32.mrf.mxu0
  %v5893 = vadd.f32 %v5870, %v5892
  %5894 = vmatmul.bf16.gmra.mxu0 %v4775
  %v5895 = vpop.f32.mrf.mxu0
  %v5896 = vadd.f32 %v5873, %v5895
  %v5897 = vpop.f32.mrf.mxu0
  %v5898 = vadd.f32 %v5875, %v5897
  %5899 = vmatmul.bf16.gmra.mxu0 %v4783
  %v5900 = vpop.f32.mrf.mxu0
  %v5901 = vadd.f32 %v5878, %v5900
  %v5902 = vpop.f32.mrf.mxu0
  %5903 = vdwg.mxu0
  %5904 = vmatpush.bf16.msra.mxu0 %v5430
  %5905 = vmatpush.bf16.msra.mxu0 %v5428
  %5906 = vmatpush.bf16.msra.mxu0 %v5426
  %5907 = vmatpush.bf16.msra.mxu0 %v5424
  %5908 = vmatpush.bf16.msra.mxu0 %v5422
  %5909 = vmatpush.bf16.msra.mxu0 %v5420
  %5910 = vmatpush.bf16.msra.mxu0 %v5418
  %5911 = vmatpush.bf16.msra.mxu0 %v5416
  %5912 = vmatmul.bf16.gmra.mxu0 %v4768
  %v5913 = vpop.f32.mrf.mxu0
  %v5914 = vadd.f32 %v5891, %v5913
  %v5915 = vpop.f32.mrf.mxu0
  %v5916 = vadd.f32 %v5893, %v5915
  %5917 = vmatmul.bf16.gmra.mxu0 %v4776
  %v5918 = vpop.f32.mrf.mxu0
  %v5919 = vadd.f32 %v5896, %v5918
  %v5920 = vpop.f32.mrf.mxu0
  %v5921 = vadd.f32 %v5898, %v5920
  %5922 = vmatmul.bf16.gmra.mxu0 %v4784
  %v5923 = vpop.f32.mrf.mxu0
  %v5924 = vadd.f32 %v5901, %v5923
  %v5925 = vpop.f32.mrf.mxu0
  %5926 = vdwg.mxu0
  %v5927 = vadd.f32 %v1830, %v5730
  %v5928 = vadd.f32 %v1831, %v5914
  %v5929 = vadd.f32 %v1832, %v5732
  %v5930 = vadd.f32 %v1833, %v5916
  %v5931 = vadd.f32 %v1834, %v5735
  %v5932 = vadd.f32 %v1835, %v5919
  %v5933 = vadd.f32 %v1836, %v5737
  %v5934 = vadd.f32 %v1837, %v5921
  %v5935 = vadd.f32 %v1838, %v5740
  %v5936 = vadd.f32 %v1839, %v5924
  %v5937 = vld [vmem:[%s16] sm:$0x3]
  %v5938 = vld [vmem:[%s17] sm:$0x3]
  %v5939 = vadd.f32 %v5927, %v5928
  %5940 = vadd.xlane.f32.xlu0 %v5939
  %v5941 = vpop.xlane.xlu0 %5940
  %v5942 = vadd.f32 %v5929, %v5930
  %5943 = vadd.xlane.f32.xlu0 %v5942
  %v5944 = vpop.xlane.xlu0 %5943
  %v5945 = vadd.f32 %v5931, %v5932
  %5946 = vadd.xlane.f32.xlu0 %v5945
  %v5947 = vpop.xlane.xlu0 %5946
  %v5948 = vadd.f32 %v5933, %v5934
  %5949 = vadd.xlane.f32.xlu0 %v5948
  %v5950 = vpop.xlane.xlu0 %5949
  %v5951 = vsel %vm186, %v5935, 0.0
  %v5952 = vsel %vm186, %v5936, 0.0
  %v5953 = vadd.f32 %v5951, %v5952
  %5954 = vadd.xlane.f32.xlu0 %v5953
  %v5955 = vpop.xlane.xlu0 %5954
  %v5956 = vmul.f32 %v5941, %v198
  %v5957 = vmul.f32 %v5944, %v198
  %v5958 = vmul.f32 %v5947, %v198
  %v5959 = vmul.f32 %v5950, %v198
  %v5960 = vmul.f32 %v5955, %v198
  %v5961 = vsub.f32 %v5927, %v5956
  %v5962 = vsub.f32 %v5928, %v5956
  %v5963 = vsub.f32 %v5929, %v5957
  %v5964 = vsub.f32 %v5930, %v5957
  %v5965 = vsub.f32 %v5931, %v5958
  %v5966 = vsub.f32 %v5932, %v5958
  %v5967 = vsub.f32 %v5933, %v5959
  %v5968 = vsub.f32 %v5934, %v5959
  %v5969 = vsub.f32 %v5935, %v5960
  %v5970 = vsub.f32 %v5936, %v5960
  %v5971 = vmul.f32 %v5961, %v5961
  %v5972 = vmul.f32 %v5962, %v5962
  %v5973 = vmul.f32 %v5963, %v5963
  %v5974 = vmul.f32 %v5964, %v5964
  %v5975 = vmul.f32 %v5965, %v5965
  %v5976 = vmul.f32 %v5966, %v5966
  %v5977 = vmul.f32 %v5967, %v5967
  %v5978 = vmul.f32 %v5968, %v5968
  %v5979 = vmul.f32 %v5969, %v5969
  %v5980 = vmul.f32 %v5970, %v5970
  %v5981 = vadd.f32 %v5971, %v5972
  %5982 = vadd.xlane.f32.xlu0 %v5981
  %v5983 = vpop.xlane.xlu0 %5982
  %v5984 = vadd.f32 %v5973, %v5974
  %5985 = vadd.xlane.f32.xlu0 %v5984
  %v5986 = vpop.xlane.xlu0 %5985
  %v5987 = vadd.f32 %v5975, %v5976
  %5988 = vadd.xlane.f32.xlu0 %v5987
  %v5989 = vpop.xlane.xlu0 %5988
  %v5990 = vadd.f32 %v5977, %v5978
  %5991 = vadd.xlane.f32.xlu0 %v5990
  %v5992 = vpop.xlane.xlu0 %5991
  %v5993 = vsel %vm186, %v5979, 0.0
  %v5994 = vsel %vm186, %v5980, 0.0
  %v5995 = vadd.f32 %v5993, %v5994
  %5996 = vadd.xlane.f32.xlu0 %v5995
  %v5997 = vpop.xlane.xlu0 %5996
  %v5998 = vmul.f32 %v5983, %v198
  %v5999 = vmul.f32 %v5986, %v198
  %v6000 = vmul.f32 %v5989, %v198
  %v6001 = vmul.f32 %v5992, %v198
  %v6002 = vmul.f32 %v5997, %v198
  %v6003 = vadd.f32 %v5998, 1e-06
  %v6004 = vadd.f32 %v5999, 1e-06
  %v6005 = vadd.f32 %v6000, 1e-06
  %v6006 = vadd.f32 %v6001, 1e-06
  %v6007 = vadd.f32 %v6002, 1e-06
  %v6008 = vrsqrt.pop %v6003
  %v6009 = vmul.f32 %v6008, %v6003
  %v6010 = vmul.f32 %v6009, %v6008
  %v6011 = vmul.f32 0.5, %v6010
  %v6012 = vsub.f32 1.5, %v6011
  %v6013 = vmul.f32 %v6008, %v6012
  %vm6014 = vweird.f32 %v6003
  %vm6015 = vweird.f32 %v6008
  %vm6016 = vmor %vm6014, %vm6015
  %v6017 = vsel %vm6016, %v6008, %v6013
  %v6018 = vrsqrt.pop %v6004
  %v6019 = vmul.f32 %v6018, %v6004
  %v6020 = vmul.f32 %v6019, %v6018
  %v6021 = vmul.f32 0.5, %v6020
  %v6022 = vsub.f32 1.5, %v6021
  %v6023 = vmul.f32 %v6018, %v6022
  %vm6024 = vweird.f32 %v6004
  %vm6025 = vweird.f32 %v6018
  %vm6026 = vmor %vm6024, %vm6025
  %v6027 = vsel %vm6026, %v6018, %v6023
  %v6028 = vrsqrt.pop %v6005
  %v6029 = vmul.f32 %v6028, %v6005
  %v6030 = vmul.f32 %v6029, %v6028
  %v6031 = vmul.f32 0.5, %v6030
  %v6032 = vsub.f32 1.5, %v6031
  %v6033 = vmul.f32 %v6028, %v6032
  %vm6034 = vweird.f32 %v6005
  %vm6035 = vweird.f32 %v6028
  %vm6036 = vmor %vm6034, %vm6035
  %v6037 = vsel %vm6036, %v6028, %v6033
  %v6038 = vrsqrt.pop %v6006
  %v6039 = vmul.f32 %v6038, %v6006
  %v6040 = vmul.f32 %v6039, %v6038
  %v6041 = vmul.f32 0.5, %v6040
  %v6042 = vsub.f32 1.5, %v6041
  %v6043 = vmul.f32 %v6038, %v6042
  %vm6044 = vweird.f32 %v6006
  %vm6045 = vweird.f32 %v6038
  %vm6046 = vmor %vm6044, %vm6045
  %v6047 = vsel %vm6046, %v6038, %v6043
  %v6048 = vrsqrt.pop %v6007
  %v6049 = vmul.f32 %v6048, %v6007
  %v6050 = vmul.f32 %v6049, %v6048
  %v6051 = vmul.f32 0.5, %v6050
  %v6052 = vsub.f32 1.5, %v6051
  %v6053 = vmul.f32 %v6048, %v6052
  %vm6054 = vweird.f32 %v6007
  %vm6055 = vweird.f32 %v6048
  %vm6056 = vmor %vm6054, %vm6055
  %v6057 = vsel %vm6056, %v6048, %v6053
  %v6058 = vmul.f32 %v5961, %v6017
  %v6059 = vmul.f32 %v5962, %v6017
  %v6060 = vmul.f32 %v5963, %v6027
  %v6061 = vmul.f32 %v5964, %v6027
  %v6062 = vmul.f32 %v5965, %v6037
  %v6063 = vmul.f32 %v5966, %v6037
  %v6064 = vmul.f32 %v5967, %v6047
  %v6065 = vmul.f32 %v5968, %v6047
  %v6066 = vmul.f32 %v5969, %v6057
  %v6067 = vmul.f32 %v5970, %v6057
  %v6069 = vperm.slane %v5937, 0
  %v6070 = vperm.slane %v5937, 1
  %v6073 = vmul.f32 %v6058, %v6069
  %v6074 = vmul.f32 %v6059, %v6070
  %v6075 = vmul.f32 %v6060, %v6069
  %v6076 = vmul.f32 %v6061, %v6070
  %v6077 = vmul.f32 %v6062, %v6069
  %v6078 = vmul.f32 %v6063, %v6070
  %v6079 = vmul.f32 %v6064, %v6069
  %v6080 = vmul.f32 %v6065, %v6070
  %v6081 = vmul.f32 %v6066, %v6069
  %v6082 = vmul.f32 %v6067, %v6070
  %v6084 = vperm.slane %v5938, 0
  %v6085 = vperm.slane %v5938, 1
  %v6088 = vadd.f32 %v6073, %v6084
  %v6089 = vadd.f32 %v6074, %v6085
  %v6090 = vadd.f32 %v6075, %v6084
  %v6091 = vadd.f32 %v6076, %v6085
  %v6092 = vadd.f32 %v6077, %v6084
  %v6093 = vadd.f32 %v6078, %v6085
  %v6094 = vadd.f32 %v6079, %v6084
  %v6095 = vadd.f32 %v6080, %v6085
  %v6096 = vadd.f32 %v6081, %v6084
  %v6097 = vadd.f32 %v6082, %v6085
  %v6098 = vpack.c.bf16 %v6090, %v6088
  %v6099 = vpack.c.bf16 %v6091, %v6089
  %v6100 = vpack.c.bf16 %v6094, %v6092
  %v6101 = vpack.c.bf16 %v6095, %v6093
  %v6102 = vpack.c.bf16 %v6096, %v6096
  %v6103 = vpack.c.bf16 %v6097, %v6097
  %v6104 = vld [vmem:[%s18] sm:$0xff]
  %v6105 = vld [vmem:[%s18 + $0x8] sm:$0xff]
  %v6106 = vld [vmem:[%s18 + $0x10] sm:$0xff]
  %v6107 = vld [vmem:[%s18 + $0x18] sm:$0xff]
  %v6108 = vld [vmem:[%s18 + $0x20] sm:$0xff]
  %v6109 = vld [vmem:[%s18 + $0x28] sm:$0xff]
  %v6110 = vld [vmem:[%s18 + $0x30] sm:$0xff]
  %v6111 = vld [vmem:[%s18 + $0x38] sm:$0xff]
  %v6112 = vld [vmem:[%s18 + $0x40] sm:$0xff]
  %v6113 = vld [vmem:[%s18 + $0x48] sm:$0xff]
  %v6114 = vld [vmem:[%s18 + $0x50] sm:$0xff]
  %v6115 = vld [vmem:[%s18 + $0x58] sm:$0xff]
  %v6116 = vld [vmem:[%s18 + $0x60] sm:$0xff]
  %v6117 = vld [vmem:[%s18 + $0x68] sm:$0xff]
  %v6118 = vld [vmem:[%s18 + $0x70] sm:$0xff]
  %v6119 = vld [vmem:[%s18 + $0x78] sm:$0xff]
  %v6120 = vld [vmem:[%s18 + $0x80] sm:$0xff]
  %v6121 = vld [vmem:[%s18 + $0x88] sm:$0xff]
  %v6122 = vld [vmem:[%s18 + $0x90] sm:$0xff]
  %v6123 = vld [vmem:[%s18 + $0x98] sm:$0xff]
  %v6124 = vld [vmem:[%s18 + $0xa0] sm:$0xff]
  %v6125 = vld [vmem:[%s18 + $0xa8] sm:$0xff]
  %v6126 = vld [vmem:[%s18 + $0xb0] sm:$0xff]
  %v6127 = vld [vmem:[%s18 + $0xb8] sm:$0xff]
  %v6128 = vld [vmem:[%s18 + $0xc0] sm:$0xff]
  %v6129 = vld [vmem:[%s18 + $0xc8] sm:$0xff]
  %v6130 = vld [vmem:[%s18 + $0xd0] sm:$0xff]
  %v6131 = vld [vmem:[%s18 + $0xd8] sm:$0xff]
  %v6132 = vld [vmem:[%s18 + $0xe0] sm:$0xff]
  %v6133 = vld [vmem:[%s18 + $0xe8] sm:$0xff]
  %v6134 = vld [vmem:[%s18 + $0xf0] sm:$0xff]
  %v6135 = vld [vmem:[%s18 + $0xf8] sm:$0xff]
  %v6136 = vld [vmem:[%s19] sm:$0x3]
  %v6138 = vperm.slane %v6136, 0
  %v6139 = vperm.slane %v6136, 1
  %v6174 = vunpack.c.l.b16 %v6104
  %v6175 = vunpack.c.h.b16 %v6104
  %v6176 = vunpack.c.l.b16 %v6105
  %v6177 = vunpack.c.h.b16 %v6105
  %v6178 = vunpack.c.l.b16 %v6106
  %v6179 = vunpack.c.h.b16 %v6106
  %v6180 = vunpack.c.l.b16 %v6107
  %v6181 = vunpack.c.h.b16 %v6107
  %v6182 = vunpack.c.l.b16 %v6108
  %v6183 = vunpack.c.h.b16 %v6108
  %v6184 = vunpack.c.l.b16 %v6109
  %v6185 = vunpack.c.h.b16 %v6109
  %v6186 = vunpack.c.l.b16 %v6110
  %v6187 = vunpack.c.h.b16 %v6110
  %v6188 = vunpack.c.l.b16 %v6111
  %v6189 = vunpack.c.h.b16 %v6111
  %v6190 = vunpack.c.l.b16 %v6112
  %v6191 = vunpack.c.h.b16 %v6112
  %v6192 = vunpack.c.l.b16 %v6113
  %v6193 = vunpack.c.h.b16 %v6113
  %v6194 = vunpack.c.l.b16 %v6114
  %v6195 = vunpack.c.h.b16 %v6114
  %v6196 = vunpack.c.l.b16 %v6115
  %v6197 = vunpack.c.h.b16 %v6115
  %v6198 = vunpack.c.l.b16 %v6116
  %v6199 = vunpack.c.h.b16 %v6116
  %v6200 = vunpack.c.l.b16 %v6117
  %v6201 = vunpack.c.h.b16 %v6117
  %v6202 = vunpack.c.l.b16 %v6118
  %v6203 = vunpack.c.h.b16 %v6118
  %v6204 = vunpack.c.l.b16 %v6119
  %v6205 = vunpack.c.h.b16 %v6119
  %v6206 = vunpack.c.l.b16 %v6120
  %v6207 = vunpack.c.h.b16 %v6120
  %v6208 = vunpack.c.l.b16 %v6121
  %v6209 = vunpack.c.h.b16 %v6121
  %v6210 = vunpack.c.l.b16 %v6122
  %v6211 = vunpack.c.h.b16 %v6122
  %v6212 = vunpack.c.l.b16 %v6123
  %v6213 = vunpack.c.h.b16 %v6123
  %v6214 = vunpack.c.l.b16 %v6124
  %v6215 = vunpack.c.h.b16 %v6124
  %v6216 = vunpack.c.l.b16 %v6125
  %v6217 = vunpack.c.h.b16 %v6125
  %v6218 = vunpack.c.l.b16 %v6126
  %v6219 = vunpack.c.h.b16 %v6126
  %v6220 = vunpack.c.l.b16 %v6127
  %v6221 = vunpack.c.h.b16 %v6127
  %v6222 = vunpack.c.l.b16 %v6128
  %v6223 = vunpack.c.h.b16 %v6128
  %v6224 = vunpack.c.l.b16 %v6129
  %v6225 = vunpack.c.h.b16 %v6129
  %v6226 = vunpack.c.l.b16 %v6130
  %v6227 = vunpack.c.h.b16 %v6130
  %v6228 = vunpack.c.l.b16 %v6131
  %v6229 = vunpack.c.h.b16 %v6131
  %v6230 = vunpack.c.l.b16 %v6132
  %v6231 = vunpack.c.h.b16 %v6132
  %v6232 = vunpack.c.l.b16 %v6133
  %v6233 = vunpack.c.h.b16 %v6133
  %v6234 = vunpack.c.l.b16 %v6134
  %v6235 = vunpack.c.h.b16 %v6134
  %v6236 = vunpack.c.l.b16 %v6135
  %v6237 = vunpack.c.h.b16 %v6135
  %v6238 = vpack.c.b16 %v6176, %v6174
  %v6239 = vpack.c.b16 %v6177, %v6175
  %v6240 = vpack.c.b16 %v6180, %v6178
  %v6241 = vpack.c.b16 %v6181, %v6179
  %v6242 = vpack.c.b16 %v6184, %v6182
  %v6243 = vpack.c.b16 %v6185, %v6183
  %v6244 = vpack.c.b16 %v6188, %v6186
  %v6245 = vpack.c.b16 %v6189, %v6187
  %v6246 = vpack.c.b16 %v6192, %v6190
  %v6247 = vpack.c.b16 %v6193, %v6191
  %v6248 = vpack.c.b16 %v6196, %v6194
  %v6249 = vpack.c.b16 %v6197, %v6195
  %v6250 = vpack.c.b16 %v6200, %v6198
  %v6251 = vpack.c.b16 %v6201, %v6199
  %v6252 = vpack.c.b16 %v6204, %v6202
  %v6253 = vpack.c.b16 %v6205, %v6203
  %v6254 = vpack.c.b16 %v6208, %v6206
  %v6255 = vpack.c.b16 %v6209, %v6207
  %v6256 = vpack.c.b16 %v6212, %v6210
  %v6257 = vpack.c.b16 %v6213, %v6211
  %v6258 = vpack.c.b16 %v6216, %v6214
  %v6259 = vpack.c.b16 %v6217, %v6215
  %v6260 = vpack.c.b16 %v6220, %v6218
  %v6261 = vpack.c.b16 %v6221, %v6219
  %v6262 = vpack.c.b16 %v6224, %v6222
  %v6263 = vpack.c.b16 %v6225, %v6223
  %v6264 = vpack.c.b16 %v6228, %v6226
  %v6265 = vpack.c.b16 %v6229, %v6227
  %v6266 = vpack.c.b16 %v6232, %v6230
  %v6267 = vpack.c.b16 %v6233, %v6231
  %v6268 = vpack.c.b16 %v6236, %v6234
  %v6269 = vpack.c.b16 %v6237, %v6235
  %6302 = vmatpush.bf16.msra.mxu0 %v6252
  %6303 = vmatpush.bf16.msra.mxu0 %v6250
  %6304 = vmatpush.bf16.msra.mxu0 %v6248
  %6305 = vmatpush.bf16.msra.mxu0 %v6246
  %6306 = vmatpush.bf16.msra.mxu0 %v6244
  %6307 = vmatpush.bf16.msra.mxu0 %v6242
  %6308 = vmatpush.bf16.msra.mxu0 %v6240
  %6309 = vmatpush.bf16.msra.mxu0 %v6238
  %6310 = vmatmul.bf16.gmra.mxu0 %v6098
  %v6311 = vpop.f32.mrf.mxu0
  %v6312 = vadd.f32 %v6138, %v6311
  %v6313 = vpop.f32.mrf.mxu0
  %v6314 = vadd.f32 %v6138, %v6313
  %6315 = vmatmul.bf16.gmra.mxu0 %v6100
  %v6316 = vpop.f32.mrf.mxu0
  %v6317 = vadd.f32 %v6138, %v6316
  %v6318 = vpop.f32.mrf.mxu0
  %v6319 = vadd.f32 %v6138, %v6318
  %6320 = vmatmul.bf16.gmra.mxu0 %v6102
  %v6321 = vpop.f32.mrf.mxu0
  %v6322 = vadd.f32 %v6138, %v6321
  %v6323 = vpop.f32.mrf.mxu0
  %6324 = vdwg.mxu0
  %6325 = vmatpush.bf16.msra.mxu0 %v6268
  %6326 = vmatpush.bf16.msra.mxu0 %v6266
  %6327 = vmatpush.bf16.msra.mxu0 %v6264
  %6328 = vmatpush.bf16.msra.mxu0 %v6262
  %6329 = vmatpush.bf16.msra.mxu0 %v6260
  %6330 = vmatpush.bf16.msra.mxu0 %v6258
  %6331 = vmatpush.bf16.msra.mxu0 %v6256
  %6332 = vmatpush.bf16.msra.mxu0 %v6254
  %6333 = vmatmul.bf16.gmra.mxu0 %v6099
  %v6334 = vpop.f32.mrf.mxu0
  %v6335 = vadd.f32 %v6312, %v6334
  %v6336 = vpop.f32.mrf.mxu0
  %v6337 = vadd.f32 %v6314, %v6336
  %6338 = vmatmul.bf16.gmra.mxu0 %v6101
  %v6339 = vpop.f32.mrf.mxu0
  %v6340 = vadd.f32 %v6317, %v6339
  %v6341 = vpop.f32.mrf.mxu0
  %v6342 = vadd.f32 %v6319, %v6341
  %6343 = vmatmul.bf16.gmra.mxu0 %v6103
  %v6344 = vpop.f32.mrf.mxu0
  %v6345 = vadd.f32 %v6322, %v6344
  %v6346 = vpop.f32.mrf.mxu0
  %6347 = vdwg.mxu0
  %6348 = vmatpush.bf16.msra.mxu0 %v6253
  %6349 = vmatpush.bf16.msra.mxu0 %v6251
  %6350 = vmatpush.bf16.msra.mxu0 %v6249
  %6351 = vmatpush.bf16.msra.mxu0 %v6247
  %6352 = vmatpush.bf16.msra.mxu0 %v6245
  %6353 = vmatpush.bf16.msra.mxu0 %v6243
  %6354 = vmatpush.bf16.msra.mxu0 %v6241
  %6355 = vmatpush.bf16.msra.mxu0 %v6239
  %6356 = vmatmul.bf16.gmra.mxu0 %v6098
  %v6357 = vpop.f32.mrf.mxu0
  %v6358 = vadd.f32 %v6139, %v6357
  %v6359 = vpop.f32.mrf.mxu0
  %v6360 = vadd.f32 %v6139, %v6359
  %6361 = vmatmul.bf16.gmra.mxu0 %v6100
  %v6362 = vpop.f32.mrf.mxu0
  %v6363 = vadd.f32 %v6139, %v6362
  %v6364 = vpop.f32.mrf.mxu0
  %v6365 = vadd.f32 %v6139, %v6364
  %6366 = vmatmul.bf16.gmra.mxu0 %v6102
  %v6367 = vpop.f32.mrf.mxu0
  %v6368 = vadd.f32 %v6139, %v6367
  %v6369 = vpop.f32.mrf.mxu0
  %6370 = vdwg.mxu0
  %6371 = vmatpush.bf16.msra.mxu0 %v6269
  %6372 = vmatpush.bf16.msra.mxu0 %v6267
  %6373 = vmatpush.bf16.msra.mxu0 %v6265
  %6374 = vmatpush.bf16.msra.mxu0 %v6263
  %6375 = vmatpush.bf16.msra.mxu0 %v6261
  %6376 = vmatpush.bf16.msra.mxu0 %v6259
  %6377 = vmatpush.bf16.msra.mxu0 %v6257
  %6378 = vmatpush.bf16.msra.mxu0 %v6255
  %6379 = vmatmul.bf16.gmra.mxu0 %v6099
  %v6380 = vpop.f32.mrf.mxu0
  %v6381 = vadd.f32 %v6358, %v6380
  %v6382 = vpop.f32.mrf.mxu0
  %v6383 = vadd.f32 %v6360, %v6382
  %6384 = vmatmul.bf16.gmra.mxu0 %v6101
  %v6385 = vpop.f32.mrf.mxu0
  %v6386 = vadd.f32 %v6363, %v6385
  %v6387 = vpop.f32.mrf.mxu0
  %v6388 = vadd.f32 %v6365, %v6387
  %6389 = vmatmul.bf16.gmra.mxu0 %v6103
  %v6390 = vpop.f32.mrf.mxu0
  %v6391 = vadd.f32 %v6368, %v6390
  %v6392 = vpop.f32.mrf.mxu0
  %6393 = vdwg.mxu0
  %vm6400 = vcmask 1046528
  %v6401 = vrot.slane %v6335, 1
  %v6402 = vrot.slane %v6337, 1
  %v6403 = vsel %vm6400, %v6401, %v6402
  %v6404 = vrot.slane %v6381, 1
  %v6405 = vrot.slane %v6383, 1
  %v6406 = vsel %vm6400, %v6404, %v6405
  %v6407 = vrot.slane %v6340, 1
  %v6408 = vsel %vm6400, %v6402, %v6407
  %v6409 = vrot.slane %v6386, 1
  %v6410 = vsel %vm6400, %v6405, %v6409
  %6415 = vst [vmem:[%s20] sm:$0xff] %v6403
  %6416 = vst [vmem:[%s20 + $0x8] sm:$0xff] %v6406
  %6417 = vst [vmem:[%s20 + $0x10] sm:$0xff] %v6408
  %6418 = vst [vmem:[%s20 + $0x18] sm:$0xff] %v6410
  %vm6423 = vcmask 1045504
  %v6424 = vrot.slane %v6340, 2
  %v6425 = vrot.slane %v6342, 2
  %v6426 = vsel %vm6423, %v6424, %v6425
  %v6427 = vrot.slane %v6386, 2
  %v6428 = vrot.slane %v6388, 2
  %v6429 = vsel %vm6423, %v6427, %v6428
  %v6430 = vrot.slane %v6345, 2
  %v6431 = vsel %vm6423, %v6425, %v6430
  %v6432 = vrot.slane %v6391, 2
  %v6433 = vsel %vm6423, %v6428, %v6432
  %s6438 = scalar_lea.vmem %s20, 32
  %6439 = vst [vmem:[%s6438] sm:$0xff] %v6426
  %6440 = vst [vmem:[%s6438 + $0x8] sm:$0xff] %v6429
  %6441 = vst [vmem:[%s6438 + $0x10] sm:$0xff] %v6431
  %6442 = vst [vmem:[%s6438 + $0x18] sm:$0xff] %v6433
  // Predicated region
  $region82: #{vit_extractor_forward.1} parent=0 // pred_check
    _
  $region83: #{vit_extractor_forward.1} parent=0 // pred_check_branch
    %6444 = sbr.rel (0) target = $region85
  $region84: #{vit_extractor_forward.1} parent=0 // pred_region
    _
  $region85: #{vit_extractor_forward.1} parent=0 // pred_fallthru
    _
  // Predicated region
  $region86: #{vit_extractor_forward.1} parent=0 // pred_check
    _
  $region87: #{vit_extractor_forward.1} parent=0 // pred_check_branch
    %6446 = sbr.rel (0) target = $region89
  $region88: #{vit_extractor_forward.1} parent=0 // pred_region
    _
  $region89: #{vit_extractor_forward.1} parent=0 // pred_fallthru
    _

</llo_original>
